<compile_context>
chip_gen: v7x
topology: tpu7x:2x2x1
jax: 0.10.0
libtpu: 0.0.40
codegen_flags: <defaults>
</compile_context>

<pallas_src>
import jax
import jax.numpy as jnp
from jax.experimental import pallas as pl
from jax.experimental.pallas import tpu as pltpu

# ---- problem sizes (small, consistent with the module) ----
B, N, D = 2, 8, 32
NUM_HEADS = 4
HEAD_DIM = D // NUM_HEADS
MLP_HIDDEN = 4 * D
EPS = 1e-5
M = B * N                      # tokens with batch folded into rows
G = NUM_HEADS * B              # (head, batch) groups for the scores matmuls


def _layernorm(x, w, b):
    mu = jnp.mean(x, axis=-1, keepdims=True)
    var = jnp.mean((x - mu) ** 2, axis=-1, keepdims=True)
    return (x - mu) * jax.lax.rsqrt(var + EPS) * w + b


def block_kernel(x_ref, t_ref,
                 ada_w_ref, ada_b_ref,
                 n1_w_ref, n1_b_ref,
                 wqk_ref, wvp_ref, proj_b_ref,
                 n2_w_ref, n2_b_ref,
                 fc1_w_ref, fc1_b_ref,
                 fc2_w_ref, fc2_b_ref,
                 o_ref):
    x = x_ref[...]                       # (B, N, D)
    t = t_ref[...]                       # (B, D)

    # ---- adaLN_modulation: one fused lane-dense matmul (B,32)@(32,192) ----
    # Single MXU push; the six 32-lane chunk extracts use the XLU slot.
    silu_t = t * jax.nn.sigmoid(t)
    mod = (jnp.dot(silu_t, ada_w_ref[...], preferred_element_type=jnp.float32)
           + ada_b_ref[...])             # (B, 6D)
    shift_msa = mod[:, 0 * D:1 * D]
    scale_msa = mod[:, 1 * D:2 * D]
    gate_msa = mod[:, 2 * D:3 * D]
    shift_mlp = mod[:, 3 * D:4 * D]
    scale_mlp = mod[:, 4 * D:5 * D]
    gate_mlp = mod[:, 5 * D:6 * D]

    # ---------------- attention branch ----------------
    xn = _layernorm(x, n1_w_ref[...], n1_b_ref[...])
    xm = xn * (1.0 + scale_msa[:, None, :]) + shift_msa[:, None, :]    # (B,N,D)
    xm2d = xm.reshape(M, D)                                            # last dim unchanged

    # Q and K in ONE stacked batched contraction over (2H) head slabs.
    # Attention scale is already folded into the Q slabs at trace time.
    xm_qk = jnp.broadcast_to(xm2d, (2 * NUM_HEADS, M, D))              # hoisted once
    qk = jnp.einsum('hmd,hde->hme', xm_qk, wqk_ref[...],
                    preferred_element_type=jnp.float32)                # (2H, M, E)
    q = qk[:NUM_HEADS].reshape(G, N, HEAD_DIM)                         # leading split
    k = qk[NUM_HEADS:].reshape(G, N, HEAD_DIM)

    # V with the output projection folded in at trace time (w_vproj = wv @ wproj):
    # each head's context matmul below directly produces a 32-lane-wide output,
    # and the head merge is a free leading-axis sum (no concat, no proj einsum).
    vproj = jnp.einsum('hmd,hde->hme', xm_qk[:NUM_HEADS], wvp_ref[...],
                       preferred_element_type=jnp.float32)             # (H, M, D)
    vproj = vproj.reshape(G, N, D)

    s = jnp.einsum('gqe,gke->gqk', q, k, preferred_element_type=jnp.float32)
    s = s - jnp.max(s, axis=-1, keepdims=True)
    p = jnp.exp(s)
    # normalization via approx reciprocal -> EUP slot instead of VPU divide
    p = p * pl.reciprocal(jnp.sum(p, axis=-1, keepdims=True), approx=True)
    oh = jnp.einsum('gqk,gkd->gqd', p, vproj,
                    preferred_element_type=jnp.float32)                # (G, N, D)
    attn = jnp.sum(oh.reshape(NUM_HEADS, B, N, D), axis=0) + proj_b_ref[...]

    x = x + gate_msa[:, None, :] * attn       # LayerScale / DropPath are Identity

    # ---------------- MLP branch ----------------
    xn2 = _layernorm(x, n2_w_ref[...], n2_b_ref[...])
    xm2 = xn2 * (1.0 + scale_mlp[:, None, :]) + shift_mlp[:, None, :]
    h1 = jnp.dot(xm2.reshape(M, D), fc1_w_ref[...],
                 preferred_element_type=jnp.float32) + fc1_b_ref[...]  # (M, 128) lane-dense
    h1 = jax.nn.gelu(h1, approximate=True)    # tanh GELU -> EUP slot (VALU freed)
    h2 = jnp.dot(h1, fc2_w_ref[...],
                 preferred_element_type=jnp.float32) + fc2_b_ref[...]  # (M, D)

    o_ref[...] = x + gate_mlp[:, None, :] * h2.reshape(B, N, D)


def block_forward(x, t, params):
    (ada_w, ada_b, n1_w, n1_b, qkv_w, proj_w, proj_b,
     n2_w, n2_b, fc1_w, fc1_b, fc2_w, fc2_b) = params

    # --- trace-time parameter re-layout (layout plumbing, outside the kernel) ---
    def head_major(w2d):                                      # (D, D) -> (H, D, HEAD_DIM)
        return w2d.reshape(D, NUM_HEADS, HEAD_DIM).transpose(1, 0, 2)

    wq = head_major(qkv_w[:, 0 * D:1 * D]) * (HEAD_DIM ** -0.5)   # fold attention scale
    wk = head_major(qkv_w[:, 1 * D:2 * D])
    wv = head_major(qkv_w[:, 2 * D:3 * D])
    wqk = jnp.concatenate([wq, wk], axis=0)                   # (2H, D, HEAD_DIM)
    wproj_h = proj_w.reshape(NUM_HEADS, HEAD_DIM, D)          # (H, HEAD_DIM, D)
    # Fold output projection into V: (H, D, HEAD_DIM) @ (H, HEAD_DIM, D) -> (H, D, D)
    w_vproj = jnp.einsum('hde,hef->hdf', wv, wproj_h)

    kernel_params = (ada_w, ada_b, n1_w, n1_b, wqk, w_vproj, proj_b,
                     n2_w, n2_b, fc1_w, fc1_b, fc2_w, fc2_b)

    # Advisory cost model so XLA schedules the surrounding graph sensibly.
    flops = (2 * B * D * 6 * D                        # adaLN
             + 2 * (2 * NUM_HEADS) * M * D * HEAD_DIM # q, k
             + 2 * NUM_HEADS * M * D * D              # v (proj folded)
             + 2 * G * N * N * HEAD_DIM               # scores
             + 2 * G * N * N * D                      # p @ v'
             + 2 * 2 * M * D * MLP_HIDDEN)            # fc1 + fc2
    bytes_accessed = 4 * (x.size + t.size + sum(p.size for p in kernel_params)
                          + B * N * D)
    transcendentals = (B * D                          # sigmoid
                       + G * N * N + G * N            # exp + reciprocal
                       + 2 * M + M * MLP_HIDDEN)      # rsqrt + tanh(gelu)

    # Single invocation, no grid: whole problem + weights (~90 KB) fit easily in
    # VMEM, avoiding per-grid-step pipeline overhead and double-buffered weight
    # staging. Inputs/outputs are full-array VMEM refs.
    return pl.pallas_call(
        block_kernel,
        out_shape=jax.ShapeDtypeStruct((B, N, D), jnp.float32),
        cost_estimate=pl.CostEstimate(flops=flops,
                                      transcendentals=transcendentals,
                                      bytes_accessed=bytes_accessed),
        compiler_params=pltpu.CompilerParams(vmem_limit_bytes=32 * 1024 * 1024),
    )(x, t, *kernel_params)


def reference(x, t, p):
    """Pure-JAX reference of the PyTorch forward (exact erf GELU / exact softmax)."""
    def ln(z, w, b):
        mu = z.mean(-1, keepdims=True)
        var = ((z - mu) ** 2).mean(-1, keepdims=True)
        return (z - mu) / jnp.sqrt(var + EPS) * w + b

    (ada_w, ada_b, n1_w, n1_b, qkv_w, proj_w, proj_b,
     n2_w, n2_b, fc1_w, fc1_b, fc2_w, fc2_b) = p

    silu = t * jax.nn.sigmoid(t)
    mod = silu @ ada_w + ada_b[0]
    sm, scm, gm, sp, scp, gp = jnp.split(mod, 6, axis=1)

    xn = ln(x, n1_w[0], n1_b[0])
    xm = xn * (1.0 + scm[:, None, :]) + sm[:, None, :]
    qkv = xm @ qkv_w
    q, k, v = jnp.split(qkv, 3, axis=-1)
    q = q.reshape(B, N, NUM_HEADS, HEAD_DIM).transpose(0, 2, 1, 3)
    k = k.reshape(B, N, NUM_HEADS, HEAD_DIM).transpose(0, 2, 1, 3)
    v = v.reshape(B, N, NUM_HEADS, HEAD_DIM).transpose(0, 2, 1, 3)
    s = jnp.einsum('bhqd,bhkd->bhqk', q, k) * (HEAD_DIM ** -0.5)
    a = jax.nn.softmax(s, axis=-1)
    o = jnp.einsum('bhqk,bhkd->bhqd', a, v).transpose(0, 2, 1, 3).reshape(B, N, D)
    o = o @ proj_w + proj_b[0]
    x = x + gm[:, None, :] * o

    xn2 = ln(x, n2_w[0], n2_b[0])
    xm2 = xn2 * (1.0 + scp[:, None, :]) + sp[:, None, :]
    h = jax.nn.gelu(xm2 @ fc1_w + fc1_b[0], approximate=False)
    h = h @ fc2_w + fc2_b[0]
    return x + gp[:, None, :] * h


def init_params(key):
    ks = jax.random.split(key, 8)
    w = lambda k, shp: (0.02 * jax.random.normal(k, shp)).astype(jnp.float32)
    ada_w = w(ks[0], (D, 6 * D))
    ada_b = w(ks[1], (1, 6 * D))
    n1_w = jnp.ones((1, D), jnp.float32)
    n1_b = jnp.zeros((1, D), jnp.float32)
    qkv_w = w(ks[2], (D, 3 * D))                 # qkv_bias=False
    proj_w = w(ks[3], (D, D))
    proj_b = w(ks[4], (1, D))
    n2_w = jnp.ones((1, D), jnp.float32)
    n2_b = jnp.zeros((1, D), jnp.float32)
    fc1_w = w(ks[5], (D, MLP_HIDDEN))
    fc1_b = w(ks[6], (1, MLP_HIDDEN))
    fc2_w = w(ks[7], (MLP_HIDDEN, D))
    fc2_b = jnp.zeros((1, D), jnp.float32)
    return (ada_w, ada_b, n1_w, n1_b, qkv_w, proj_w, proj_b,
            n2_w, n2_b, fc1_w, fc1_b, fc2_w, fc2_b)


if __name__ == "__main__":
    key = jax.random.PRNGKey(0)
    kx, kt, kp = jax.random.split(key, 3)
    x = jax.random.normal(kx, (B, N, D), dtype=jnp.float32)
    t = jax.random.normal(kt, (B, D), dtype=jnp.float32)
    params = init_params(kp)

    out = jax.block_until_ready(block_forward(x, t, params))
    ref = jax.block_until_ready(reference(x, t, params))

    assert out.shape == (B, N, D)
    err = float(jnp.max(jnp.abs(out - ref)))
    # Tolerance budget: EUP approx-reciprocal softmax, tanh GELU, and the
    # trace-time wv@wproj / scale-into-wq foldings each contribute <<1e-4 at
    # these magnitudes; 5e-4 keeps the check meaningful but non-flaky.
    assert jnp.allclose(out, ref, atol=5e-4, rtol=5e-4), err
    print("KERNEL_OK")
</pallas_src>

<mosaic_0001>
module attributes {stable_mosaic.version = 11 : i64} {
  func.func @block_kernel(%arg0: memref<2x8x32xf32, #tpu.memory_space<vmem>>, %arg1: memref<2x32xf32, #tpu.memory_space<vmem>>, %arg2: memref<32x192xf32, #tpu.memory_space<vmem>>, %arg3: memref<1x192xf32, #tpu.memory_space<vmem>>, %arg4: memref<1x32xf32, #tpu.memory_space<vmem>>, %arg5: memref<1x32xf32, #tpu.memory_space<vmem>>, %arg6: memref<8x32x8xf32, #tpu.memory_space<vmem>>, %arg7: memref<4x32x32xf32, #tpu.memory_space<vmem>>, %arg8: memref<1x32xf32, #tpu.memory_space<vmem>>, %arg9: memref<1x32xf32, #tpu.memory_space<vmem>>, %arg10: memref<1x32xf32, #tpu.memory_space<vmem>>, %arg11: memref<32x128xf32, #tpu.memory_space<vmem>>, %arg12: memref<1x128xf32, #tpu.memory_space<vmem>>, %arg13: memref<128x32xf32, #tpu.memory_space<vmem>>, %arg14: memref<1x32xf32, #tpu.memory_space<vmem>>, %arg15: memref<2x8x32xf32, #tpu.memory_space<vmem>>) attributes {dimension_semantics = [], scalar_prefetch = 0 : i64, scratch_operands = 0 : i64, tpu.core_type = #tpu.core_type<tc>} {
    %c0 = arith.constant 0 : index
    %c0_0 = arith.constant 0 : index
    %c0_1 = arith.constant 0 : index
    %0 = vector.load %arg0[%c0, %c0_0, %c0_1] : memref<2x8x32xf32, #tpu.memory_space<vmem>>, vector<2x8x32xf32>
    %c0_2 = arith.constant 0 : index
    %c0_3 = arith.constant 0 : index
    %1 = vector.load %arg1[%c0_2, %c0_3] : memref<2x32xf32, #tpu.memory_space<vmem>>, vector<2x32xf32>
    %2 = arith.negf %1 : vector<2x32xf32>
    %3 = math.exp %2 : vector<2x32xf32>
    %cst = arith.constant 1.000000e+00 : f32
    %4 = vector.broadcast %cst : f32 to vector<2x32xf32>
    %5 = arith.addf %4, %3 : vector<2x32xf32>
    %6 = arith.divf %4, %5 : vector<2x32xf32>
    %7 = arith.mulf %1, %6 : vector<2x32xf32>
    %c0_4 = arith.constant 0 : index
    %c0_5 = arith.constant 0 : index
    %8 = vector.load %arg2[%c0_4, %c0_5] : memref<32x192xf32, #tpu.memory_space<vmem>>, vector<32x192xf32>
    %cst_6 = arith.constant dense<0.000000e+00> : vector<2x192xf32>
    %9 = tpu.matmul %7, %8, %cst_6 {dimension_numbers = #tpu.dot_dimension_numbers<[1], [0], [0], [1], [0, 0, 1, 1], [], []>} : vector<2x32xf32>, vector<32x192xf32>, vector<2x192xf32> -> vector<2x192xf32>
    %c0_7 = arith.constant 0 : index
    %c0_8 = arith.constant 0 : index
    %10 = vector.load %arg3[%c0_7, %c0_8] : memref<1x192xf32, #tpu.memory_space<vmem>>, vector<1x192xf32>
    %11 = vector.broadcast %10 : vector<1x192xf32> to vector<2x192xf32>
    %12 = arith.addf %9, %11 : vector<2x192xf32>
    %13 = vector.extract_strided_slice %12 {offsets = [0, 0], sizes = [2, 32], strides = [1, 1]} : vector<2x192xf32> to vector<2x32xf32>
    %14 = vector.extract_strided_slice %12 {offsets = [0, 32], sizes = [2, 32], strides = [1, 1]} : vector<2x192xf32> to vector<2x32xf32>
    %15 = vector.extract_strided_slice %12 {offsets = [0, 64], sizes = [2, 32], strides = [1, 1]} : vector<2x192xf32> to vector<2x32xf32>
    %16 = vector.extract_strided_slice %12 {offsets = [0, 96], sizes = [2, 32], strides = [1, 1]} : vector<2x192xf32> to vector<2x32xf32>
    %17 = vector.extract_strided_slice %12 {offsets = [0, 128], sizes = [2, 32], strides = [1, 1]} : vector<2x192xf32> to vector<2x32xf32>
    %18 = vector.extract_strided_slice %12 {offsets = [0, 160], sizes = [2, 32], strides = [1, 1]} : vector<2x192xf32> to vector<2x32xf32>
    %c0_9 = arith.constant 0 : index
    %c0_10 = arith.constant 0 : index
    %19 = vector.load %arg4[%c0_9, %c0_10] : memref<1x32xf32, #tpu.memory_space<vmem>>, vector<1x32xf32>
    %c0_11 = arith.constant 0 : index
    %c0_12 = arith.constant 0 : index
    %20 = vector.load %arg5[%c0_11, %c0_12] : memref<1x32xf32, #tpu.memory_space<vmem>>, vector<1x32xf32>
    %cst_13 = arith.constant dense<0.000000e+00> : vector<2x8xf32>
    %21 = vector.multi_reduction <add>, %0, %cst_13 [2] : vector<2x8x32xf32> to vector<2x8xf32>
    %22 = vector.shape_cast %21 : vector<2x8xf32> to vector<2x8x1xf32>
    %cst_14 = arith.constant 3.200000e+01 : f32
    %23 = vector.broadcast %cst_14 : f32 to vector<2x8x1xf32>
    %24 = arith.divf %22, %23 : vector<2x8x1xf32>
    %25 = vector.broadcast %24 : vector<2x8x1xf32> to vector<2x8x32xf32>
    %26 = arith.subf %0, %25 : vector<2x8x32xf32>
    %27 = arith.mulf %26, %26 : vector<2x8x32xf32>
    %cst_15 = arith.constant dense<0.000000e+00> : vector<2x8xf32>
    %28 = vector.multi_reduction <add>, %27, %cst_15 [2] : vector<2x8x32xf32> to vector<2x8xf32>
    %29 = vector.shape_cast %28 : vector<2x8xf32> to vector<2x8x1xf32>
    %cst_16 = arith.constant 3.200000e+01 : f32
    %30 = vector.broadcast %cst_16 : f32 to vector<2x8x1xf32>
    %31 = arith.divf %29, %30 : vector<2x8x1xf32>
    %32 = vector.broadcast %24 : vector<2x8x1xf32> to vector<2x8x32xf32>
    %33 = arith.subf %0, %32 : vector<2x8x32xf32>
    %cst_17 = arith.constant 9.99999974E-6 : f32
    %34 = vector.broadcast %cst_17 : f32 to vector<2x8x1xf32>
    %35 = arith.addf %31, %34 : vector<2x8x1xf32>
    %36 = math.rsqrt %35 : vector<2x8x1xf32>
    %37 = vector.broadcast %36 : vector<2x8x1xf32> to vector<2x8x32xf32>
    %38 = arith.mulf %33, %37 : vector<2x8x32xf32>
    %39 = vector.shape_cast %19 : vector<1x32xf32> to vector<1x1x32xf32>
    %40 = vector.broadcast %39 : vector<1x1x32xf32> to vector<2x8x32xf32>
    %41 = arith.mulf %38, %40 : vector<2x8x32xf32>
    %42 = vector.shape_cast %20 : vector<1x32xf32> to vector<1x1x32xf32>
    %43 = vector.broadcast %42 : vector<1x1x32xf32> to vector<2x8x32xf32>
    %44 = arith.addf %41, %43 : vector<2x8x32xf32>
    %45 = vector.shape_cast %14 : vector<2x32xf32> to vector<2x1x32xf32>
    %cst_18 = arith.constant 1.000000e+00 : f32
    %46 = vector.broadcast %cst_18 : f32 to vector<2x1x32xf32>
    %47 = arith.addf %46, %45 : vector<2x1x32xf32>
    %48 = vector.broadcast %47 : vector<2x1x32xf32> to vector<2x8x32xf32>
    %49 = arith.mulf %44, %48 : vector<2x8x32xf32>
    %50 = vector.shape_cast %13 : vector<2x32xf32> to vector<2x1x32xf32>
    %51 = vector.broadcast %50 : vector<2x1x32xf32> to vector<2x8x32xf32>
    %52 = arith.addf %49, %51 : vector<2x8x32xf32>
    %53 = vector.shape_cast %52 : vector<2x8x32xf32> to vector<16x32xf32>
    %54 = vector.shape_cast %53 : vector<16x32xf32> to vector<1x16x32xf32>
    %55 = vector.broadcast %54 : vector<1x16x32xf32> to vector<8x16x32xf32>
    %c0_19 = arith.constant 0 : index
    %c0_20 = arith.constant 0 : index
    %c0_21 = arith.constant 0 : index
    %56 = vector.load %arg6[%c0_19, %c0_20, %c0_21] : memref<8x32x8xf32, #tpu.memory_space<vmem>>, vector<8x32x8xf32>
    "tpu.trace_start"() <{level = 10 : i32, message = "hmd,hde->hme"}> : () -> ()
    %cst_22 = arith.constant dense<0.000000e+00> : vector<8x16x8xf32>
    %57 = tpu.matmul %55, %56, %cst_22 {dimension_numbers = #tpu.dot_dimension_numbers<[2], [1], [1], [2], [0, 0, 0, 1, 1, 2], [0], [0]>} : vector<8x16x32xf32>, vector<8x32x8xf32>, vector<8x16x8xf32> -> vector<8x16x8xf32>
    "tpu.trace_stop"() : () -> ()
    %58 = vector.extract_strided_slice %57 {offsets = [0, 0, 0], sizes = [4, 16, 8], strides = [1, 1, 1]} : vector<8x16x8xf32> to vector<4x16x8xf32>
    %59 = vector.shape_cast %58 : vector<4x16x8xf32> to vector<8x8x8xf32>
    %60 = vector.extract_strided_slice %57 {offsets = [4, 0, 0], sizes = [4, 16, 8], strides = [1, 1, 1]} : vector<8x16x8xf32> to vector<4x16x8xf32>
    %61 = vector.shape_cast %60 : vector<4x16x8xf32> to vector<8x8x8xf32>
    %62 = vector.extract_strided_slice %55 {offsets = [0, 0, 0], sizes = [4, 16, 32], strides = [1, 1, 1]} : vector<8x16x32xf32> to vector<4x16x32xf32>
    %c0_23 = arith.constant 0 : index
    %c0_24 = arith.constant 0 : index
    %c0_25 = arith.constant 0 : index
    %63 = vector.load %arg7[%c0_23, %c0_24, %c0_25] : memref<4x32x32xf32, #tpu.memory_space<vmem>>, vector<4x32x32xf32>
    "tpu.trace_start"() <{level = 10 : i32, message = "hmd,hde->hme"}> : () -> ()
    %cst_26 = arith.constant dense<0.000000e+00> : vector<4x16x32xf32>
    %64 = tpu.matmul %62, %63, %cst_26 {dimension_numbers = #tpu.dot_dimension_numbers<[2], [1], [1], [2], [0, 0, 0, 1, 1, 2], [0], [0]>} : vector<4x16x32xf32>, vector<4x32x32xf32>, vector<4x16x32xf32> -> vector<4x16x32xf32>
    "tpu.trace_stop"() : () -> ()
    %65 = vector.shape_cast %64 : vector<4x16x32xf32> to vector<8x8x32xf32>
    "tpu.trace_start"() <{level = 10 : i32, message = "gqe,gke->gqk"}> : () -> ()
    %cst_27 = arith.constant dense<0.000000e+00> : vector<8x8x8xf32>
    %66 = tpu.matmul %59, %61, %cst_27 {dimension_numbers = #tpu.dot_dimension_numbers<[2], [2], [1], [1], [0, 0, 0, 1, 1, 1], [0], [0]>} : vector<8x8x8xf32>, vector<8x8x8xf32>, vector<8x8x8xf32> -> vector<8x8x8xf32>
    "tpu.trace_stop"() : () -> ()
    %cst_28 = arith.constant dense<0xFF800000> : vector<8x8xf32>
    %67 = vector.multi_reduction <maximumf>, %66, %cst_28 [2] : vector<8x8x8xf32> to vector<8x8xf32>
    %68 = vector.shape_cast %67 : vector<8x8xf32> to vector<8x8x1xf32>
    %69 = vector.broadcast %68 : vector<8x8x1xf32> to vector<8x8x8xf32>
    %70 = arith.subf %66, %69 : vector<8x8x8xf32>
    %71 = math.exp %70 : vector<8x8x8xf32>
    %cst_29 = arith.constant dense<0.000000e+00> : vector<8x8xf32>
    %72 = vector.multi_reduction <add>, %71, %cst_29 [2] : vector<8x8x8xf32> to vector<8x8xf32>
    %73 = vector.shape_cast %72 : vector<8x8xf32> to vector<8x8x1xf32>
    %74 = tpu.reciprocal %73 {approx = true} : vector<8x8x1xf32> -> vector<8x8x1xf32>
    %75 = vector.broadcast %74 : vector<8x8x1xf32> to vector<8x8x8xf32>
    %76 = arith.mulf %71, %75 : vector<8x8x8xf32>
    "tpu.trace_start"() <{level = 10 : i32, message = "gqk,gkd->gqd"}> : () -> ()
    %cst_30 = arith.constant dense<0.000000e+00> : vector<8x8x32xf32>
    %77 = tpu.matmul %76, %65, %cst_30 {dimension_numbers = #tpu.dot_dimension_numbers<[2], [1], [1], [2], [0, 0, 0, 1, 1, 2], [0], [0]>} : vector<8x8x8xf32>, vector<8x8x32xf32>, vector<8x8x32xf32> -> vector<8x8x32xf32>
    "tpu.trace_stop"() : () -> ()
    %78 = vector.shape_cast %77 : vector<8x8x32xf32> to vector<4x2x8x32xf32>
    %cst_31 = arith.constant dense<0.000000e+00> : vector<2x8x32xf32>
    %79 = vector.multi_reduction <add>, %78, %cst_31 [0] : vector<4x2x8x32xf32> to vector<2x8x32xf32>
    %c0_32 = arith.constant 0 : index
    %c0_33 = arith.constant 0 : index
    %80 = vector.load %arg8[%c0_32, %c0_33] : memref<1x32xf32, #tpu.memory_space<vmem>>, vector<1x32xf32>
    %81 = vector.shape_cast %80 : vector<1x32xf32> to vector<1x1x32xf32>
    %82 = vector.broadcast %81 : vector<1x1x32xf32> to vector<2x8x32xf32>
    %83 = arith.addf %79, %82 : vector<2x8x32xf32>
    %84 = vector.shape_cast %15 : vector<2x32xf32> to vector<2x1x32xf32>
    %85 = vector.broadcast %84 : vector<2x1x32xf32> to vector<2x8x32xf32>
    %86 = arith.mulf %85, %83 : vector<2x8x32xf32>
    %87 = arith.addf %0, %86 : vector<2x8x32xf32>
    %c0_34 = arith.constant 0 : index
    %c0_35 = arith.constant 0 : index
    %88 = vector.load %arg9[%c0_34, %c0_35] : memref<1x32xf32, #tpu.memory_space<vmem>>, vector<1x32xf32>
    %c0_36 = arith.constant 0 : index
    %c0_37 = arith.constant 0 : index
    %89 = vector.load %arg10[%c0_36, %c0_37] : memref<1x32xf32, #tpu.memory_space<vmem>>, vector<1x32xf32>
    %cst_38 = arith.constant dense<0.000000e+00> : vector<2x8xf32>
    %90 = vector.multi_reduction <add>, %87, %cst_38 [2] : vector<2x8x32xf32> to vector<2x8xf32>
    %91 = vector.shape_cast %90 : vector<2x8xf32> to vector<2x8x1xf32>
    %cst_39 = arith.constant 3.200000e+01 : f32
    %92 = vector.broadcast %cst_39 : f32 to vector<2x8x1xf32>
    %93 = arith.divf %91, %92 : vector<2x8x1xf32>
    %94 = vector.broadcast %93 : vector<2x8x1xf32> to vector<2x8x32xf32>
    %95 = arith.subf %87, %94 : vector<2x8x32xf32>
    %96 = arith.mulf %95, %95 : vector<2x8x32xf32>
    %cst_40 = arith.constant dense<0.000000e+00> : vector<2x8xf32>
    %97 = vector.multi_reduction <add>, %96, %cst_40 [2] : vector<2x8x32xf32> to vector<2x8xf32>
    %98 = vector.shape_cast %97 : vector<2x8xf32> to vector<2x8x1xf32>
    %cst_41 = arith.constant 3.200000e+01 : f32
    %99 = vector.broadcast %cst_41 : f32 to vector<2x8x1xf32>
    %100 = arith.divf %98, %99 : vector<2x8x1xf32>
    %101 = vector.broadcast %93 : vector<2x8x1xf32> to vector<2x8x32xf32>
    %102 = arith.subf %87, %101 : vector<2x8x32xf32>
    %cst_42 = arith.constant 9.99999974E-6 : f32
    %103 = vector.broadcast %cst_42 : f32 to vector<2x8x1xf32>
    %104 = arith.addf %100, %103 : vector<2x8x1xf32>
    %105 = math.rsqrt %104 : vector<2x8x1xf32>
    %106 = vector.broadcast %105 : vector<2x8x1xf32> to vector<2x8x32xf32>
    %107 = arith.mulf %102, %106 : vector<2x8x32xf32>
    %108 = vector.shape_cast %88 : vector<1x32xf32> to vector<1x1x32xf32>
    %109 = vector.broadcast %108 : vector<1x1x32xf32> to vector<2x8x32xf32>
    %110 = arith.mulf %107, %109 : vector<2x8x32xf32>
    %111 = vector.shape_cast %89 : vector<1x32xf32> to vector<1x1x32xf32>
    %112 = vector.broadcast %111 : vector<1x1x32xf32> to vector<2x8x32xf32>
    %113 = arith.addf %110, %112 : vector<2x8x32xf32>
    %114 = vector.shape_cast %17 : vector<2x32xf32> to vector<2x1x32xf32>
    %cst_43 = arith.constant 1.000000e+00 : f32
    %115 = vector.broadcast %cst_43 : f32 to vector<2x1x32xf32>
    %116 = arith.addf %115, %114 : vector<2x1x32xf32>
    %117 = vector.broadcast %116 : vector<2x1x32xf32> to vector<2x8x32xf32>
    %118 = arith.mulf %113, %117 : vector<2x8x32xf32>
    %119 = vector.shape_cast %16 : vector<2x32xf32> to vector<2x1x32xf32>
    %120 = vector.broadcast %119 : vector<2x1x32xf32> to vector<2x8x32xf32>
    %121 = arith.addf %118, %120 : vector<2x8x32xf32>
    %122 = vector.shape_cast %121 : vector<2x8x32xf32> to vector<16x32xf32>
    %c0_44 = arith.constant 0 : index
    %c0_45 = arith.constant 0 : index
    %123 = vector.load %arg11[%c0_44, %c0_45] : memref<32x128xf32, #tpu.memory_space<vmem>>, vector<32x128xf32>
    %cst_46 = arith.constant dense<0.000000e+00> : vector<16x128xf32>
    %124 = tpu.matmul %122, %123, %cst_46 {dimension_numbers = #tpu.dot_dimension_numbers<[1], [0], [0], [1], [0, 0, 1, 1], [], []>} : vector<16x32xf32>, vector<32x128xf32>, vector<16x128xf32> -> vector<16x128xf32>
    %c0_47 = arith.constant 0 : index
    %c0_48 = arith.constant 0 : index
    %125 = vector.load %arg12[%c0_47, %c0_48] : memref<1x128xf32, #tpu.memory_space<vmem>>, vector<1x128xf32>
    %126 = vector.broadcast %125 : vector<1x128xf32> to vector<16x128xf32>
    %127 = arith.addf %124, %126 : vector<16x128xf32>
    %128 = arith.mulf %127, %127 : vector<16x128xf32>
    %129 = arith.mulf %127, %128 : vector<16x128xf32>
    %cst_49 = arith.constant 4.471500e-02 : f32
    %130 = vector.broadcast %cst_49 : f32 to vector<16x128xf32>
    %131 = arith.mulf %130, %129 : vector<16x128xf32>
    %132 = arith.addf %127, %131 : vector<16x128xf32>
    %cst_50 = arith.constant 0.797884583 : f32
    %133 = vector.broadcast %cst_50 : f32 to vector<16x128xf32>
    %134 = arith.mulf %133, %132 : vector<16x128xf32>
    %135 = math.tanh %134 : vector<16x128xf32>
    %cst_51 = arith.constant 1.000000e+00 : f32
    %136 = vector.broadcast %cst_51 : f32 to vector<16x128xf32>
    %137 = arith.addf %136, %135 : vector<16x128xf32>
    %cst_52 = arith.constant 5.000000e-01 : f32
    %138 = vector.broadcast %cst_52 : f32 to vector<16x128xf32>
    %139 = arith.mulf %138, %137 : vector<16x128xf32>
    %140 = arith.mulf %127, %139 : vector<16x128xf32>
    %c0_53 = arith.constant 0 : index
    %c0_54 = arith.constant 0 : index
    %141 = vector.load %arg13[%c0_53, %c0_54] : memref<128x32xf32, #tpu.memory_space<vmem>>, vector<128x32xf32>
    %cst_55 = arith.constant dense<0.000000e+00> : vector<16x32xf32>
    %142 = tpu.matmul %140, %141, %cst_55 {dimension_numbers = #tpu.dot_dimension_numbers<[1], [0], [0], [1], [0, 0, 1, 1], [], []>} : vector<16x128xf32>, vector<128x32xf32>, vector<16x32xf32> -> vector<16x32xf32>
    %c0_56 = arith.constant 0 : index
    %c0_57 = arith.constant 0 : index
    %143 = vector.load %arg14[%c0_56, %c0_57] : memref<1x32xf32, #tpu.memory_space<vmem>>, vector<1x32xf32>
    %144 = vector.broadcast %143 : vector<1x32xf32> to vector<16x32xf32>
    %145 = arith.addf %142, %144 : vector<16x32xf32>
    %146 = vector.shape_cast %18 : vector<2x32xf32> to vector<2x1x32xf32>
    %147 = vector.shape_cast %145 : vector<16x32xf32> to vector<2x8x32xf32>
    %148 = vector.broadcast %146 : vector<2x1x32xf32> to vector<2x8x32xf32>
    %149 = arith.mulf %148, %147 : vector<2x8x32xf32>
    %150 = arith.addf %87, %149 : vector<2x8x32xf32>
    %c0_58 = arith.constant 0 : index
    %c0_59 = arith.constant 0 : index
    %c0_60 = arith.constant 0 : index
    %151 = vector.load %arg15[%c0_58, %c0_59, %c0_60] : memref<2x8x32xf32, #tpu.memory_space<vmem>>, vector<2x8x32xf32>
    tpu.vector_store %arg15[%c0_58, %c0_59, %c0_60], %150 {strides = array<i32>} : memref<2x8x32xf32, #tpu.memory_space<vmem>>, vector<2x8x32xf32>,
    return
  }
}

</mosaic_0001>

<llo_original>
// kernel: tpu_custom_call.1
$region0: #{tpu_custom_call.1}
  #allocation0 [shape = 'u32[]', space=smem, size = 0x4, offset = 0x4, fixed_abs, tag = 'smem constant byte address 0x4 - core index']
  #allocation1 [shape = 'u32[144,128]{1,0:T(1,128)}', space=vmem, size = 0x12000, scoped, tag = 'internal scratch']
  %s0 = inlined_call_operand.vmem [shape: f32[2,8,32], index: 0, kind: input, shape index: {}]
  %s1 = inlined_call_operand.vmem [shape: f32[2,32], index: 1, kind: input, shape index: {}]
  %s2 = inlined_call_operand.vmem [shape: f32[32,192], index: 2, kind: input, shape index: {}]
  %s3 = inlined_call_operand.vmem [shape: f32[1,192], index: 3, kind: input, shape index: {}]
  %s4 = inlined_call_operand.vmem [shape: f32[1,32], index: 4, kind: input, shape index: {}]
  %s5 = inlined_call_operand.vmem [shape: f32[1,32], index: 5, kind: input, shape index: {}]
  %s6 = inlined_call_operand.vmem [shape: f32[8,32,8], index: 6, kind: input, shape index: {}]
  %s7 = inlined_call_operand.vmem [shape: f32[4,32,32], index: 7, kind: input, shape index: {}]
  %s8 = inlined_call_operand.vmem [shape: f32[1,32], index: 8, kind: input, shape index: {}]
  %s9 = inlined_call_operand.vmem [shape: f32[1,32], index: 9, kind: input, shape index: {}]
  %s10 = inlined_call_operand.vmem [shape: f32[1,32], index: 10, kind: input, shape index: {}]
  %s11 = inlined_call_operand.vmem [shape: f32[32,128], index: 11, kind: input, shape index: {}]
  %s12 = inlined_call_operand.vmem [shape: f32[1,128], index: 12, kind: input, shape index: {}]
  %s13 = inlined_call_operand.vmem [shape: f32[128,32], index: 13, kind: input, shape index: {}]
  %s14 = inlined_call_operand.vmem [shape: f32[1,32], index: 14, kind: input, shape index: {}]
  %s15 = inlined_call_operand.hbm [shape: f32[2,8,32], index: 15, kind: output, shape index: {}]
  %s16 = sld [smem:[#allocation0]]
  $region70: #{tpu_custom_call.1} parent=0
    _
  %s18 = ssub.s32 1, %s16
  %s19 = scalar_select 0, %s18, %s16
  $region1: #{tpu_custom_call.1} parent=0
    #allocation2 [shape = 'u8[8192]{0}', space=vmem, size = 0x2000, scoped, tag = 'output window, operand 0, single buffered']
    #allocation3 [shape = 's32[1]{0}', space=sflag, size = 0x4, scoped, tag = 'scoped memory for tpu_custom_call.1']
    %20 = vsyncpa [#allocation3], 0
    // Predicated region
    $region2: #{tpu_custom_call.1} parent=1 // pred_check
      _
    $region3: #{tpu_custom_call.1} parent=1 // pred_check_branch
      %22 = sbr.rel (0) target = $region5
    $region4: #{tpu_custom_call.1} parent=1 // pred_region
      _
    $region5: #{tpu_custom_call.1} parent=1 // pred_fallthru
      _
    // Predicated region
    $region6: #{tpu_custom_call.1} parent=1 // pred_check
      _
    $region7: #{tpu_custom_call.1} parent=1 // pred_check_branch
      %24 = sbr.rel (0) target = $region9
    $region8: #{tpu_custom_call.1} parent=1 // pred_region
      _
    $region9: #{tpu_custom_call.1} parent=1 // pred_fallthru
      _
    // Predicated region
    $region10: #{tpu_custom_call.1} parent=1 // pred_check
      _
    $region11: #{tpu_custom_call.1} parent=1 // pred_check_branch
      %26 = sbr.rel (0) target = $region13
    $region12: #{tpu_custom_call.1} parent=1 // pred_region
      _
    $region13: #{tpu_custom_call.1} parent=1 // pred_fallthru
      _
    // Predicated region
    $region14: #{tpu_custom_call.1} parent=1 // pred_check
      _
    $region15: #{tpu_custom_call.1} parent=1 // pred_check_branch
      %28 = sbr.rel (0) target = $region17
    $region16: #{tpu_custom_call.1} parent=1 // pred_region
      _
    $region17: #{tpu_custom_call.1} parent=1 // pred_fallthru
      _
    // Predicated region
    $region18: #{tpu_custom_call.1} parent=1 // pred_check
      _
    $region19: #{tpu_custom_call.1} parent=1 // pred_check_branch
      %30 = sbr.rel (0) target = $region21
    $region20: #{tpu_custom_call.1} parent=1 // pred_region
      _
    $region21: #{tpu_custom_call.1} parent=1 // pred_fallthru
      _
    // Predicated region
    $region22: #{tpu_custom_call.1} parent=1 // pred_check
      _
    $region23: #{tpu_custom_call.1} parent=1 // pred_check_branch
      %32 = sbr.rel (0) target = $region25
    $region24: #{tpu_custom_call.1} parent=1 // pred_region
      _
    $region25: #{tpu_custom_call.1} parent=1 // pred_fallthru
      _
    // Predicated region
    $region26: #{tpu_custom_call.1} parent=1 // pred_check
      _
    $region27: #{tpu_custom_call.1} parent=1 // pred_check_branch
      %34 = sbr.rel (0) target = $region29
    $region28: #{tpu_custom_call.1} parent=1 // pred_region
      _
    $region29: #{tpu_custom_call.1} parent=1 // pred_fallthru
      _
    // Predicated region
    $region30: #{tpu_custom_call.1} parent=1 // pred_check
      _
    $region31: #{tpu_custom_call.1} parent=1 // pred_check_branch
      %36 = sbr.rel (0) target = $region33
    $region32: #{tpu_custom_call.1} parent=1 // pred_region
      _
    $region33: #{tpu_custom_call.1} parent=1 // pred_fallthru
      _
    // Predicated region
    $region34: #{tpu_custom_call.1} parent=1 // pred_check
      _
    $region35: #{tpu_custom_call.1} parent=1 // pred_check_branch
      %38 = sbr.rel (0) target = $region37
    $region36: #{tpu_custom_call.1} parent=1 // pred_region
      _
    $region37: #{tpu_custom_call.1} parent=1 // pred_fallthru
      _
    // Predicated region
    $region38: #{tpu_custom_call.1} parent=1 // pred_check
      _
    $region39: #{tpu_custom_call.1} parent=1 // pred_check_branch
      %40 = sbr.rel (0) target = $region41
    $region40: #{tpu_custom_call.1} parent=1 // pred_region
      _
    $region41: #{tpu_custom_call.1} parent=1 // pred_fallthru
      _
    // Predicated region
    $region42: #{tpu_custom_call.1} parent=1 // pred_check
      _
    $region43: #{tpu_custom_call.1} parent=1 // pred_check_branch
      %42 = sbr.rel (0) target = $region45
    $region44: #{tpu_custom_call.1} parent=1 // pred_region
      _
    $region45: #{tpu_custom_call.1} parent=1 // pred_fallthru
      _
    // Predicated region
    $region46: #{tpu_custom_call.1} parent=1 // pred_check
      _
    $region47: #{tpu_custom_call.1} parent=1 // pred_check_branch
      %44 = sbr.rel (0) target = $region49
    $region48: #{tpu_custom_call.1} parent=1 // pred_region
      _
    $region49: #{tpu_custom_call.1} parent=1 // pred_fallthru
      _
    // Predicated region
    $region50: #{tpu_custom_call.1} parent=1 // pred_check
      _
    $region51: #{tpu_custom_call.1} parent=1 // pred_check_branch
      %46 = sbr.rel (0) target = $region53
    $region52: #{tpu_custom_call.1} parent=1 // pred_region
      _
    $region53: #{tpu_custom_call.1} parent=1 // pred_fallthru
      _
    // Predicated region
    $region54: #{tpu_custom_call.1} parent=1 // pred_check
      _
    $region55: #{tpu_custom_call.1} parent=1 // pred_check_branch
      %48 = sbr.rel (0) target = $region57
    $region56: #{tpu_custom_call.1} parent=1 // pred_region
      _
    $region57: #{tpu_custom_call.1} parent=1 // pred_fallthru
      _
    // Predicated region
    $region58: #{tpu_custom_call.1} parent=1 // pred_check
      _
    $region59: #{tpu_custom_call.1} parent=1 // pred_check_branch
      %50 = sbr.rel (0) target = $region61
    $region60: #{tpu_custom_call.1} parent=1 // pred_region
      _
    $region61: #{tpu_custom_call.1} parent=1 // pred_fallthru
      _
    %v51 = vld [vmem:[%s0] sm:$0xff]
    %v52 = vld [vmem:[%s0 + $0x8] sm:$0xff]
    %v53 = vld [vmem:[%s1] sm:$0x3]
    %v54 = vxor.u32 %v53, 2147483648
    %v55 = vmul.f32 %v54, 1.442695
    %v56 = vpow.pop %v55
    %v57 = vadd.f32 %v56, 1.0
    %v58 = vrcp.pop %v57
    %v59 = vmul.f32 1.0, %v58
    %v60 = vmul.f32 %v53, %v59
    %v61 = vld [vmem:[%s2] sm:$0xff]
    %v62 = vld [vmem:[%s2 + $0x8] sm:$0xff]
    %v63 = vld [vmem:[%s2 + $0x10] sm:$0xff]
    %v64 = vld [vmem:[%s2 + $0x18] sm:$0xff]
    %v65 = vld [vmem:[%s2 + $0x20] sm:$0xff]
    %v66 = vld [vmem:[%s2 + $0x28] sm:$0xff]
    %v67 = vld [vmem:[%s2 + $0x30] sm:$0xff]
    %v68 = vld [vmem:[%s2 + $0x38] sm:$0xff]
    %v69 = vld [vmem:[%s3] sm:$0x3]
    %v71 = vlaneseq
    %v72 = vshrl.u32 %v71, 7
    %v73 = vsub.s32 0, %v72
    %v74 = vrot.slane %v69, %v73
    %v75 = vlaneseq
    %v76 = vshrl.u32 %v75, 7
    %v77 = vsub.s32 1, %v76
    %v78 = vrot.slane %v69, %v77
    %vm81 = vcmask 261120
    %v83 = vsel %vm81, %v60, 0
    %85 = vmatprep.subr.mxu0 %v62
    %86 = vmatpush1.msra.mxu0 %v61
    %87 = vmatprep.subr.mxu0 %v64
    %88 = vmatpush1.msra.mxu0 %v63
    %89 = vmatprep.subr.mxu0 %v66
    %90 = vmatpush1.msra.mxu0 %v65
    %91 = vmatprep.subr.mxu0 %v68
    %92 = vmatpush1.msra.mxu0 %v67
    %93 = vmatprep.subr.mxu0 0.0
    %94 = vmatpush1.msra.mxu0 0.0
    %95 = vmatprep.subr.mxu0 0.0
    %96 = vmatpush1.msra.mxu0 0.0
    %97 = vmatprep.subr.mxu0 0.0
    %98 = vmatpush1.msra.mxu0 0.0
    %99 = vmatprep.subr.mxu0 0.0
    %100 = vmatpush1.msra.mxu0 0.0
    %101 = vmatprep.subr.mxu0 0.0
    %102 = vmatpush1.msra.mxu0 0.0
    %103 = vmatprep.subr.mxu0 0.0
    %104 = vmatpush1.msra.mxu0 0.0
    %105 = vmatprep.subr.mxu0 0.0
    %106 = vmatpush1.msra.mxu0 0.0
    %107 = vmatprep.subr.mxu0 0.0
    %108 = vmatpush1.msra.mxu0 0.0
    %109 = vmatprep.subr.mxu0 0.0
    %110 = vmatpush1.msra.mxu0 0.0
    %111 = vmatprep.subr.mxu0 0.0
    %112 = vmatpush1.msra.mxu0 0.0
    %113 = vmatprep.subr.mxu0 0.0
    %114 = vmatpush1.msra.mxu0 0.0
    %115 = vmatprep.subr.mxu0 0.0
    %116 = vmatpush1.msra.mxu0 0.0
    %117 = vmatprep.subr.mxu0 0.0
    %118 = vmatpush1.msra.mxu0 0.0
    %119 = vmatprep.subr.mxu0 0.0
    %120 = vmatpush1.msra.mxu0 0.0
    %121 = vmatprep.subr.mxu0 0.0
    %122 = vmatpush1.msra.mxu0 0.0
    %123 = vmatprep.subr.mxu0 0.0
    %124 = vmatpush1.msra.mxu0 0.0
    %125 = vmatprep.subr.mxu0 0.0
    %126 = vmatpush1.msra.mxu0 0.0
    %127 = vmatprep.subr.mxu0 0.0
    %128 = vmatpush1.msra.mxu0 0.0
    %129 = vmatprep.subr.mxu0 0.0
    %130 = vmatpush1.msra.mxu0 0.0
    %131 = vmatprep.subr.mxu0 0.0
    %132 = vmatpush1.msra.mxu0 0.0
    %133 = vmatprep.subr.mxu0 0.0
    %134 = vmatpush1.msra.mxu0 0.0
    %135 = vmatprep.subr.mxu0 0.0
    %136 = vmatpush1.msra.mxu0 0.0
    %137 = vmatprep.subr.mxu0 0.0
    %138 = vmatpush1.msra.mxu0 0.0
    %139 = vmatprep.subr.mxu0 0.0
    %140 = vmatpush1.msra.mxu0 0.0
    %141 = vmatprep.subr.mxu0 0.0
    %142 = vmatpush1.msra.mxu0 0.0
    %143 = vmatprep.subr.mxu0 0.0
    %144 = vmatpush1.msra.mxu0 0.0
    %145 = vmatprep.subr.mxu0 0.0
    %146 = vmatpush1.msra.mxu0 0.0
    %147 = vmatprep.subr.mxu0 0.0
    %148 = vmatpush1.msra.mxu0 0.0
    %149 = vmatprep.mubr.f32.mxu0 0.0
    %150 = vmatmul.mubr.f32.gmra.mrb[0].mxu0 %v83
    %v151 = vpop.f32.mrb[0].mxu0
    %v152 = vadd.f32 %v74, %v151
    %v153 = vpop.f32.mrb[0].mxu0
    %v154 = vadd.f32 %v78, %v153
    %155 = vdwg.mxu0
    %v156 = vld [vmem:[%s4] sm:$0x1]
    %v157 = vld [vmem:[%s5] sm:$0x1]
    %v158 = vsel %vm81, %v51, 0.0
    %159 = vadd.xlane.f32.xlu0 %v158
    %v160 = vpop.xlane.xlu0 %159
    %v161 = vsel %vm81, %v52, 0.0
    %162 = vadd.xlane.f32.xlu0 %v161
    %v163 = vpop.xlane.xlu0 %162
    %v164 = vrcp.pop 32.0
    %v165 = vmul.f32 %v160, %v164
    %v166 = vmul.f32 %v163, %v164
    %v167 = vsub.f32 %v51, %v165
    %v168 = vsub.f32 %v52, %v166
    %v169 = vmul.f32 %v167, %v167
    %v170 = vmul.f32 %v168, %v168
    %v171 = vsel %vm81, %v169, 0.0
    %172 = vadd.xlane.f32.xlu0 %v171
    %v173 = vpop.xlane.xlu0 %172
    %v174 = vsel %vm81, %v170, 0.0
    %175 = vadd.xlane.f32.xlu0 %v174
    %v176 = vpop.xlane.xlu0 %175
    %v177 = vmul.f32 %v173, %v164
    %v178 = vmul.f32 %v176, %v164
    %v179 = vadd.f32 %v177, 1e-05
    %v180 = vadd.f32 %v178, 1e-05
    %v181 = vrsqrt.pop %v179
    %v182 = vrsqrt.pop %v180
    %v183 = vmul.f32 %v167, %v181
    %v184 = vmul.f32 %v168, %v182
    %v186 = vlaneseq
    %v187 = vshrl.u32 %v186, 7
    %v188 = vsub.s32 0, %v187
    %v189 = vrot.slane %v156, %v188
    %v191 = vmul.f32 %v183, %v189
    %v192 = vmul.f32 %v184, %v189
    %v194 = vlaneseq
    %v195 = vshrl.u32 %v194, 7
    %v196 = vsub.s32 0, %v195
    %v197 = vrot.slane %v157, %v196
    %v199 = vadd.f32 %v191, %v197
    %v200 = vadd.f32 %v192, %v197
    %v203 = vunpack.c.l.s4 1966171168
    %v204 = vunpack.c.0.s8 %v203
    %v205 = vlaneseq
    %v206 = vshrl.u32 %v205, 7
    %v207 = vsub.s32 %v204, %v206
    %v208 = vrot.slane %v152, %v207
    %v209 = vcombine.high %v208, %v208
    %v211 = vunpack.c.l.s4 1966171168
    %v212 = vunpack.c.0.s8 %v211
    %v213 = vlaneseq
    %v214 = vshrl.u32 %v213, 7
    %v215 = vsub.s32 %v212, %v214
    %v216 = vrot.slane %v208, %v215
    %v218 = vunpack.c.l.s4 1966171168
    %v219 = vunpack.c.0.s8 %v218
    %v220 = vlaneseq
    %v221 = vshrl.u32 %v220, 7
    %v222 = vsub.s32 %v219, %v221
    %v223 = vrot.slane %v209, %v222
    %v226 = vadd.f32 %v216, 1.0
    %v227 = vadd.f32 %v223, 1.0
    %v230 = vlaneseq
    %v231 = vshrl.u32 %v230, 7
    %v232 = vsub.s32 0, %v231
    %v233 = vrot.slane %v226, %v232
    %v234 = vlaneseq
    %v235 = vshrl.u32 %v234, 7
    %v236 = vsub.s32 0, %v235
    %v237 = vrot.slane %v227, %v236
    %238 = vrot.lane.b32.xlu0 %v233, 96
    %v239 = vpop.permute.xlu0 %238
    %240 = vrot.lane.b32.xlu0 %v237, 96
    %v241 = vpop.permute.xlu0 %240
    %v244 = vmul.f32 %v199, %v239
    %v245 = vmul.f32 %v200, %v241
    %v246 = vlaneseq
    %v247 = vshrl.u32 %v246, 7
    %v248 = vsub.s32 0, %v247
    %v249 = vrot.slane %v216, %v248
    %v250 = vlaneseq
    %v251 = vshrl.u32 %v250, 7
    %v252 = vsub.s32 0, %v251
    %v253 = vrot.slane %v223, %v252
    %v256 = vadd.f32 %v244, %v249
    %v257 = vadd.f32 %v245, %v253
    %v258 = vld [vmem:[%s6] sm:$0xff]
    %v259 = vld [vmem:[%s6 + $0x8] sm:$0xff]
    %v260 = vld [vmem:[%s6 + $0x10] sm:$0xff]
    %v261 = vld [vmem:[%s6 + $0x18] sm:$0xff]
    %v262 = vld [vmem:[%s6 + $0x20] sm:$0xff]
    %v263 = vld [vmem:[%s6 + $0x28] sm:$0xff]
    %v264 = vld [vmem:[%s6 + $0x30] sm:$0xff]
    %v265 = vld [vmem:[%s6 + $0x38] sm:$0xff]
    %v266 = vld [vmem:[%s6 + $0x40] sm:$0xff]
    %v267 = vld [vmem:[%s6 + $0x48] sm:$0xff]
    %v268 = vld [vmem:[%s6 + $0x50] sm:$0xff]
    %v269 = vld [vmem:[%s6 + $0x58] sm:$0xff]
    %v270 = vld [vmem:[%s6 + $0x60] sm:$0xff]
    %v271 = vld [vmem:[%s6 + $0x68] sm:$0xff]
    %v272 = vld [vmem:[%s6 + $0x70] sm:$0xff]
    %v273 = vld [vmem:[%s6 + $0x78] sm:$0xff]
    %v274 = vld [vmem:[%s6 + $0x80] sm:$0xff]
    %v275 = vld [vmem:[%s6 + $0x88] sm:$0xff]
    %v276 = vld [vmem:[%s6 + $0x90] sm:$0xff]
    %v277 = vld [vmem:[%s6 + $0x98] sm:$0xff]
    %v278 = vld [vmem:[%s6 + $0xa0] sm:$0xff]
    %v279 = vld [vmem:[%s6 + $0xa8] sm:$0xff]
    %v280 = vld [vmem:[%s6 + $0xb0] sm:$0xff]
    %v281 = vld [vmem:[%s6 + $0xb8] sm:$0xff]
    %v282 = vld [vmem:[%s6 + $0xc0] sm:$0xff]
    %v283 = vld [vmem:[%s6 + $0xc8] sm:$0xff]
    %v284 = vld [vmem:[%s6 + $0xd0] sm:$0xff]
    %v285 = vld [vmem:[%s6 + $0xd8] sm:$0xff]
    %v286 = vld [vmem:[%s6 + $0xe0] sm:$0xff]
    %v287 = vld [vmem:[%s6 + $0xe8] sm:$0xff]
    %v288 = vld [vmem:[%s6 + $0xf0] sm:$0xff]
    %v289 = vld [vmem:[%s6 + $0xf8] sm:$0xff]
    %v291 = vsel %vm81, %v256, 0
    %v294 = vsel %vm81, %v257, 0
    %296 = vmatprep.subr.mxu0 0.0
    %297 = vmatpush1.msra.mxu0 %v258
    %298 = vmatprep.subr.mxu0 0.0
    %299 = vmatpush1.msra.mxu0 %v259
    %300 = vmatprep.subr.mxu0 0.0
    %301 = vmatpush1.msra.mxu0 %v260
    %302 = vmatprep.subr.mxu0 0.0
    %303 = vmatpush1.msra.mxu0 %v261
    %304 = vmatprep.subr.mxu0 0.0
    %305 = vmatpush1.msra.mxu0 0.0
    %306 = vmatprep.subr.mxu0 0.0
    %307 = vmatpush1.msra.mxu0 0.0
    %308 = vmatprep.subr.mxu0 0.0
    %309 = vmatpush1.msra.mxu0 0.0
    %310 = vmatprep.subr.mxu0 0.0
    %311 = vmatpush1.msra.mxu0 0.0
    %312 = vmatprep.subr.mxu0 0.0
    %313 = vmatpush1.msra.mxu0 0.0
    %314 = vmatprep.subr.mxu0 0.0
    %315 = vmatpush1.msra.mxu0 0.0
    %316 = vmatprep.subr.mxu0 0.0
    %317 = vmatpush1.msra.mxu0 0.0
    %318 = vmatprep.subr.mxu0 0.0
    %319 = vmatpush1.msra.mxu0 0.0
    %320 = vmatprep.subr.mxu0 0.0
    %321 = vmatpush1.msra.mxu0 0.0
    %322 = vmatprep.subr.mxu0 0.0
    %323 = vmatpush1.msra.mxu0 0.0
    %324 = vmatprep.subr.mxu0 0.0
    %325 = vmatpush1.msra.mxu0 0.0
    %326 = vmatprep.subr.mxu0 0.0
    %327 = vmatpush1.msra.mxu0 0.0
    %328 = vmatprep.subr.mxu0 0.0
    %329 = vmatpush1.msra.mxu0 0.0
    %330 = vmatprep.subr.mxu0 0.0
    %331 = vmatpush1.msra.mxu0 0.0
    %332 = vmatprep.subr.mxu0 0.0
    %333 = vmatpush1.msra.mxu0 0.0
    %334 = vmatprep.subr.mxu0 0.0
    %335 = vmatpush1.msra.mxu0 0.0
    %336 = vmatprep.subr.mxu0 0.0
    %337 = vmatpush1.msra.mxu0 0.0
    %338 = vmatprep.subr.mxu0 0.0
    %339 = vmatpush1.msra.mxu0 0.0
    %340 = vmatprep.subr.mxu0 0.0
    %341 = vmatpush1.msra.mxu0 0.0
    %342 = vmatprep.subr.mxu0 0.0
    %343 = vmatpush1.msra.mxu0 0.0
    %344 = vmatprep.subr.mxu0 0.0
    %345 = vmatpush1.msra.mxu0 0.0
    %346 = vmatprep.subr.mxu0 0.0
    %347 = vmatpush1.msra.mxu0 0.0
    %348 = vmatprep.subr.mxu0 0.0
    %349 = vmatpush1.msra.mxu0 0.0
    %350 = vmatprep.subr.mxu0 0.0
    %351 = vmatpush1.msra.mxu0 0.0
    %352 = vmatprep.subr.mxu0 0.0
    %353 = vmatpush1.msra.mxu0 0.0
    %354 = vmatprep.subr.mxu0 0.0
    %355 = vmatpush1.msra.mxu0 0.0
    %356 = vmatprep.subr.mxu0 0.0
    %357 = vmatpush1.msra.mxu0 0.0
    %358 = vmatprep.subr.mxu0 0.0
    %359 = vmatpush1.msra.mxu0 0.0
    %360 = vmatprep.mubr.f32.mxu0 0.0
    %361 = vmatmul.mubr.f32.gmra.mrb[0].mxu0 %v291
    %v362 = vpop.f32.mrb[0].mxu0
    %v363 = vadd.f32 0.0, %v362
    %v364 = vpop.f32.mrb[0].mxu0
    %365 = vmatprep.mubr.f32.mxu0 0.0
    %366 = vmatmul.mubr.f32.gmra.mrb[0].mxu0 %v294
    %v367 = vpop.f32.mrb[0].mxu0
    %v368 = vadd.f32 0.0, %v367
    %v369 = vpop.f32.mrb[0].mxu0
    %370 = vdwg.mxu0
    %371 = vmatprep.subr.mxu0 0.0
    %372 = vmatpush1.msra.mxu0 %v262
    %373 = vmatprep.subr.mxu0 0.0
    %374 = vmatpush1.msra.mxu0 %v263
    %375 = vmatprep.subr.mxu0 0.0
    %376 = vmatpush1.msra.mxu0 %v264
    %377 = vmatprep.subr.mxu0 0.0
    %378 = vmatpush1.msra.mxu0 %v265
    %379 = vmatprep.subr.mxu0 0.0
    %380 = vmatpush1.msra.mxu0 0.0
    %381 = vmatprep.subr.mxu0 0.0
    %382 = vmatpush1.msra.mxu0 0.0
    %383 = vmatprep.subr.mxu0 0.0
    %384 = vmatpush1.msra.mxu0 0.0
    %385 = vmatprep.subr.mxu0 0.0
    %386 = vmatpush1.msra.mxu0 0.0
    %387 = vmatprep.subr.mxu0 0.0
    %388 = vmatpush1.msra.mxu0 0.0
    %389 = vmatprep.subr.mxu0 0.0
    %390 = vmatpush1.msra.mxu0 0.0
    %391 = vmatprep.subr.mxu0 0.0
    %392 = vmatpush1.msra.mxu0 0.0
    %393 = vmatprep.subr.mxu0 0.0
    %394 = vmatpush1.msra.mxu0 0.0
    %395 = vmatprep.subr.mxu0 0.0
    %396 = vmatpush1.msra.mxu0 0.0
    %397 = vmatprep.subr.mxu0 0.0
    %398 = vmatpush1.msra.mxu0 0.0
    %399 = vmatprep.subr.mxu0 0.0
    %400 = vmatpush1.msra.mxu0 0.0
    %401 = vmatprep.subr.mxu0 0.0
    %402 = vmatpush1.msra.mxu0 0.0
    %403 = vmatprep.subr.mxu0 0.0
    %404 = vmatpush1.msra.mxu0 0.0
    %405 = vmatprep.subr.mxu0 0.0
    %406 = vmatpush1.msra.mxu0 0.0
    %407 = vmatprep.subr.mxu0 0.0
    %408 = vmatpush1.msra.mxu0 0.0
    %409 = vmatprep.subr.mxu0 0.0
    %410 = vmatpush1.msra.mxu0 0.0
    %411 = vmatprep.subr.mxu0 0.0
    %412 = vmatpush1.msra.mxu0 0.0
    %413 = vmatprep.subr.mxu0 0.0
    %414 = vmatpush1.msra.mxu0 0.0
    %415 = vmatprep.subr.mxu0 0.0
    %416 = vmatpush1.msra.mxu0 0.0
    %417 = vmatprep.subr.mxu0 0.0
    %418 = vmatpush1.msra.mxu0 0.0
    %419 = vmatprep.subr.mxu0 0.0
    %420 = vmatpush1.msra.mxu0 0.0
    %421 = vmatprep.subr.mxu0 0.0
    %422 = vmatpush1.msra.mxu0 0.0
    %423 = vmatprep.subr.mxu0 0.0
    %424 = vmatpush1.msra.mxu0 0.0
    %425 = vmatprep.subr.mxu0 0.0
    %426 = vmatpush1.msra.mxu0 0.0
    %427 = vmatprep.subr.mxu0 0.0
    %428 = vmatpush1.msra.mxu0 0.0
    %429 = vmatprep.subr.mxu0 0.0
    %430 = vmatpush1.msra.mxu0 0.0
    %431 = vmatprep.subr.mxu0 0.0
    %432 = vmatpush1.msra.mxu0 0.0
    %433 = vmatprep.subr.mxu0 0.0
    %434 = vmatpush1.msra.mxu0 0.0
    %435 = vmatprep.mubr.f32.mxu0 0.0
    %436 = vmatmul.mubr.f32.gmra.mrb[0].mxu0 %v291
    %v437 = vpop.f32.mrb[0].mxu0
    %v438 = vadd.f32 0.0, %v437
    %v439 = vpop.f32.mrb[0].mxu0
    %440 = vmatprep.mubr.f32.mxu0 0.0
    %441 = vmatmul.mubr.f32.gmra.mrb[0].mxu0 %v294
    %v442 = vpop.f32.mrb[0].mxu0
    %v443 = vadd.f32 0.0, %v442
    %v444 = vpop.f32.mrb[0].mxu0
    %445 = vdwg.mxu0
    %446 = vmatprep.subr.mxu0 0.0
    %447 = vmatpush1.msra.mxu0 %v266
    %448 = vmatprep.subr.mxu0 0.0
    %449 = vmatpush1.msra.mxu0 %v267
    %450 = vmatprep.subr.mxu0 0.0
    %451 = vmatpush1.msra.mxu0 %v268
    %452 = vmatprep.subr.mxu0 0.0
    %453 = vmatpush1.msra.mxu0 %v269
    %454 = vmatprep.subr.mxu0 0.0
    %455 = vmatpush1.msra.mxu0 0.0
    %456 = vmatprep.subr.mxu0 0.0
    %457 = vmatpush1.msra.mxu0 0.0
    %458 = vmatprep.subr.mxu0 0.0
    %459 = vmatpush1.msra.mxu0 0.0
    %460 = vmatprep.subr.mxu0 0.0
    %461 = vmatpush1.msra.mxu0 0.0
    %462 = vmatprep.subr.mxu0 0.0
    %463 = vmatpush1.msra.mxu0 0.0
    %464 = vmatprep.subr.mxu0 0.0
    %465 = vmatpush1.msra.mxu0 0.0
    %466 = vmatprep.subr.mxu0 0.0
    %467 = vmatpush1.msra.mxu0 0.0
    %468 = vmatprep.subr.mxu0 0.0
    %469 = vmatpush1.msra.mxu0 0.0
    %470 = vmatprep.subr.mxu0 0.0
    %471 = vmatpush1.msra.mxu0 0.0
    %472 = vmatprep.subr.mxu0 0.0
    %473 = vmatpush1.msra.mxu0 0.0
    %474 = vmatprep.subr.mxu0 0.0
    %475 = vmatpush1.msra.mxu0 0.0
    %476 = vmatprep.subr.mxu0 0.0
    %477 = vmatpush1.msra.mxu0 0.0
    %478 = vmatprep.subr.mxu0 0.0
    %479 = vmatpush1.msra.mxu0 0.0
    %480 = vmatprep.subr.mxu0 0.0
    %481 = vmatpush1.msra.mxu0 0.0
    %482 = vmatprep.subr.mxu0 0.0
    %483 = vmatpush1.msra.mxu0 0.0
    %484 = vmatprep.subr.mxu0 0.0
    %485 = vmatpush1.msra.mxu0 0.0
    %486 = vmatprep.subr.mxu0 0.0
    %487 = vmatpush1.msra.mxu0 0.0
    %488 = vmatprep.subr.mxu0 0.0
    %489 = vmatpush1.msra.mxu0 0.0
    %490 = vmatprep.subr.mxu0 0.0
    %491 = vmatpush1.msra.mxu0 0.0
    %492 = vmatprep.subr.mxu0 0.0
    %493 = vmatpush1.msra.mxu0 0.0
    %494 = vmatprep.subr.mxu0 0.0
    %495 = vmatpush1.msra.mxu0 0.0
    %496 = vmatprep.subr.mxu0 0.0
    %497 = vmatpush1.msra.mxu0 0.0
    %498 = vmatprep.subr.mxu0 0.0
    %499 = vmatpush1.msra.mxu0 0.0
    %500 = vmatprep.subr.mxu0 0.0
    %501 = vmatpush1.msra.mxu0 0.0
    %502 = vmatprep.subr.mxu0 0.0
    %503 = vmatpush1.msra.mxu0 0.0
    %504 = vmatprep.subr.mxu0 0.0
    %505 = vmatpush1.msra.mxu0 0.0
    %506 = vmatprep.subr.mxu0 0.0
    %507 = vmatpush1.msra.mxu0 0.0
    %508 = vmatprep.subr.mxu0 0.0
    %509 = vmatpush1.msra.mxu0 0.0
    %510 = vmatprep.mubr.f32.mxu0 0.0
    %511 = vmatmul.mubr.f32.gmra.mrb[0].mxu0 %v291
    %v512 = vpop.f32.mrb[0].mxu0
    %v513 = vadd.f32 0.0, %v512
    %v514 = vpop.f32.mrb[0].mxu0
    %515 = vmatprep.mubr.f32.mxu0 0.0
    %516 = vmatmul.mubr.f32.gmra.mrb[0].mxu0 %v294
    %v517 = vpop.f32.mrb[0].mxu0
    %v518 = vadd.f32 0.0, %v517
    %v519 = vpop.f32.mrb[0].mxu0
    %520 = vdwg.mxu0
    %521 = vmatprep.subr.mxu0 0.0
    %522 = vmatpush1.msra.mxu0 %v270
    %523 = vmatprep.subr.mxu0 0.0
    %524 = vmatpush1.msra.mxu0 %v271
    %525 = vmatprep.subr.mxu0 0.0
    %526 = vmatpush1.msra.mxu0 %v272
    %527 = vmatprep.subr.mxu0 0.0
    %528 = vmatpush1.msra.mxu0 %v273
    %529 = vmatprep.subr.mxu0 0.0
    %530 = vmatpush1.msra.mxu0 0.0
    %531 = vmatprep.subr.mxu0 0.0
    %532 = vmatpush1.msra.mxu0 0.0
    %533 = vmatprep.subr.mxu0 0.0
    %534 = vmatpush1.msra.mxu0 0.0
    %535 = vmatprep.subr.mxu0 0.0
    %536 = vmatpush1.msra.mxu0 0.0
    %537 = vmatprep.subr.mxu0 0.0
    %538 = vmatpush1.msra.mxu0 0.0
    %539 = vmatprep.subr.mxu0 0.0
    %540 = vmatpush1.msra.mxu0 0.0
    %541 = vmatprep.subr.mxu0 0.0
    %542 = vmatpush1.msra.mxu0 0.0
    %543 = vmatprep.subr.mxu0 0.0
    %544 = vmatpush1.msra.mxu0 0.0
    %545 = vmatprep.subr.mxu0 0.0
    %546 = vmatpush1.msra.mxu0 0.0
    %547 = vmatprep.subr.mxu0 0.0
    %548 = vmatpush1.msra.mxu0 0.0
    %549 = vmatprep.subr.mxu0 0.0
    %550 = vmatpush1.msra.mxu0 0.0
    %551 = vmatprep.subr.mxu0 0.0
    %552 = vmatpush1.msra.mxu0 0.0
    %553 = vmatprep.subr.mxu0 0.0
    %554 = vmatpush1.msra.mxu0 0.0
    %555 = vmatprep.subr.mxu0 0.0
    %556 = vmatpush1.msra.mxu0 0.0
    %557 = vmatprep.subr.mxu0 0.0
    %558 = vmatpush1.msra.mxu0 0.0
    %559 = vmatprep.subr.mxu0 0.0
    %560 = vmatpush1.msra.mxu0 0.0
    %561 = vmatprep.subr.mxu0 0.0
    %562 = vmatpush1.msra.mxu0 0.0
    %563 = vmatprep.subr.mxu0 0.0
    %564 = vmatpush1.msra.mxu0 0.0
    %565 = vmatprep.subr.mxu0 0.0
    %566 = vmatpush1.msra.mxu0 0.0
    %567 = vmatprep.subr.mxu0 0.0
    %568 = vmatpush1.msra.mxu0 0.0
    %569 = vmatprep.subr.mxu0 0.0
    %570 = vmatpush1.msra.mxu0 0.0
    %571 = vmatprep.subr.mxu0 0.0
    %572 = vmatpush1.msra.mxu0 0.0
    %573 = vmatprep.subr.mxu0 0.0
    %574 = vmatpush1.msra.mxu0 0.0
    %575 = vmatprep.subr.mxu0 0.0
    %576 = vmatpush1.msra.mxu0 0.0
    %577 = vmatprep.subr.mxu0 0.0
    %578 = vmatpush1.msra.mxu0 0.0
    %579 = vmatprep.subr.mxu0 0.0
    %580 = vmatpush1.msra.mxu0 0.0
    %581 = vmatprep.subr.mxu0 0.0
    %582 = vmatpush1.msra.mxu0 0.0
    %583 = vmatprep.subr.mxu0 0.0
    %584 = vmatpush1.msra.mxu0 0.0
    %585 = vmatprep.mubr.f32.mxu0 0.0
    %586 = vmatmul.mubr.f32.gmra.mrb[0].mxu0 %v291
    %v587 = vpop.f32.mrb[0].mxu0
    %v588 = vadd.f32 0.0, %v587
    %v589 = vpop.f32.mrb[0].mxu0
    %590 = vmatprep.mubr.f32.mxu0 0.0
    %591 = vmatmul.mubr.f32.gmra.mrb[0].mxu0 %v294
    %v592 = vpop.f32.mrb[0].mxu0
    %v593 = vadd.f32 0.0, %v592
    %v594 = vpop.f32.mrb[0].mxu0
    %595 = vdwg.mxu0
    %596 = vmatprep.subr.mxu0 0.0
    %597 = vmatpush1.msra.mxu0 %v274
    %598 = vmatprep.subr.mxu0 0.0
    %599 = vmatpush1.msra.mxu0 %v275
    %600 = vmatprep.subr.mxu0 0.0
    %601 = vmatpush1.msra.mxu0 %v276
    %602 = vmatprep.subr.mxu0 0.0
    %603 = vmatpush1.msra.mxu0 %v277
    %604 = vmatprep.subr.mxu0 0.0
    %605 = vmatpush1.msra.mxu0 0.0
    %606 = vmatprep.subr.mxu0 0.0
    %607 = vmatpush1.msra.mxu0 0.0
    %608 = vmatprep.subr.mxu0 0.0
    %609 = vmatpush1.msra.mxu0 0.0
    %610 = vmatprep.subr.mxu0 0.0
    %611 = vmatpush1.msra.mxu0 0.0
    %612 = vmatprep.subr.mxu0 0.0
    %613 = vmatpush1.msra.mxu0 0.0
    %614 = vmatprep.subr.mxu0 0.0
    %615 = vmatpush1.msra.mxu0 0.0
    %616 = vmatprep.subr.mxu0 0.0
    %617 = vmatpush1.msra.mxu0 0.0
    %618 = vmatprep.subr.mxu0 0.0
    %619 = vmatpush1.msra.mxu0 0.0
    %620 = vmatprep.subr.mxu0 0.0
    %621 = vmatpush1.msra.mxu0 0.0
    %622 = vmatprep.subr.mxu0 0.0
    %623 = vmatpush1.msra.mxu0 0.0
    %624 = vmatprep.subr.mxu0 0.0
    %625 = vmatpush1.msra.mxu0 0.0
    %626 = vmatprep.subr.mxu0 0.0
    %627 = vmatpush1.msra.mxu0 0.0
    %628 = vmatprep.subr.mxu0 0.0
    %629 = vmatpush1.msra.mxu0 0.0
    %630 = vmatprep.subr.mxu0 0.0
    %631 = vmatpush1.msra.mxu0 0.0
    %632 = vmatprep.subr.mxu0 0.0
    %633 = vmatpush1.msra.mxu0 0.0
    %634 = vmatprep.subr.mxu0 0.0
    %635 = vmatpush1.msra.mxu0 0.0
    %636 = vmatprep.subr.mxu0 0.0
    %637 = vmatpush1.msra.mxu0 0.0
    %638 = vmatprep.subr.mxu0 0.0
    %639 = vmatpush1.msra.mxu0 0.0
    %640 = vmatprep.subr.mxu0 0.0
    %641 = vmatpush1.msra.mxu0 0.0
    %642 = vmatprep.subr.mxu0 0.0
    %643 = vmatpush1.msra.mxu0 0.0
    %644 = vmatprep.subr.mxu0 0.0
    %645 = vmatpush1.msra.mxu0 0.0
    %646 = vmatprep.subr.mxu0 0.0
    %647 = vmatpush1.msra.mxu0 0.0
    %648 = vmatprep.subr.mxu0 0.0
    %649 = vmatpush1.msra.mxu0 0.0
    %650 = vmatprep.subr.mxu0 0.0
    %651 = vmatpush1.msra.mxu0 0.0
    %652 = vmatprep.subr.mxu0 0.0
    %653 = vmatpush1.msra.mxu0 0.0
    %654 = vmatprep.subr.mxu0 0.0
    %655 = vmatpush1.msra.mxu0 0.0
    %656 = vmatprep.subr.mxu0 0.0
    %657 = vmatpush1.msra.mxu0 0.0
    %658 = vmatprep.subr.mxu0 0.0
    %659 = vmatpush1.msra.mxu0 0.0
    %660 = vmatprep.mubr.f32.mxu0 0.0
    %661 = vmatmul.mubr.f32.gmra.mrb[0].mxu0 %v291
    %v662 = vpop.f32.mrb[0].mxu0
    %v663 = vadd.f32 0.0, %v662
    %v664 = vpop.f32.mrb[0].mxu0
    %665 = vmatprep.mubr.f32.mxu0 0.0
    %666 = vmatmul.mubr.f32.gmra.mrb[0].mxu0 %v294
    %v667 = vpop.f32.mrb[0].mxu0
    %v668 = vadd.f32 0.0, %v667
    %v669 = vpop.f32.mrb[0].mxu0
    %670 = vdwg.mxu0
    %671 = vmatprep.subr.mxu0 0.0
    %672 = vmatpush1.msra.mxu0 %v278
    %673 = vmatprep.subr.mxu0 0.0
    %674 = vmatpush1.msra.mxu0 %v279
    %675 = vmatprep.subr.mxu0 0.0
    %676 = vmatpush1.msra.mxu0 %v280
    %677 = vmatprep.subr.mxu0 0.0
    %678 = vmatpush1.msra.mxu0 %v281
    %679 = vmatprep.subr.mxu0 0.0
    %680 = vmatpush1.msra.mxu0 0.0
    %681 = vmatprep.subr.mxu0 0.0
    %682 = vmatpush1.msra.mxu0 0.0
    %683 = vmatprep.subr.mxu0 0.0
    %684 = vmatpush1.msra.mxu0 0.0
    %685 = vmatprep.subr.mxu0 0.0
    %686 = vmatpush1.msra.mxu0 0.0
    %687 = vmatprep.subr.mxu0 0.0
    %688 = vmatpush1.msra.mxu0 0.0
    %689 = vmatprep.subr.mxu0 0.0
    %690 = vmatpush1.msra.mxu0 0.0
    %691 = vmatprep.subr.mxu0 0.0
    %692 = vmatpush1.msra.mxu0 0.0
    %693 = vmatprep.subr.mxu0 0.0
    %694 = vmatpush1.msra.mxu0 0.0
    %695 = vmatprep.subr.mxu0 0.0
    %696 = vmatpush1.msra.mxu0 0.0
    %697 = vmatprep.subr.mxu0 0.0
    %698 = vmatpush1.msra.mxu0 0.0
    %699 = vmatprep.subr.mxu0 0.0
    %700 = vmatpush1.msra.mxu0 0.0
    %701 = vmatprep.subr.mxu0 0.0
    %702 = vmatpush1.msra.mxu0 0.0
    %703 = vmatprep.subr.mxu0 0.0
    %704 = vmatpush1.msra.mxu0 0.0
    %705 = vmatprep.subr.mxu0 0.0
    %706 = vmatpush1.msra.mxu0 0.0
    %707 = vmatprep.subr.mxu0 0.0
    %708 = vmatpush1.msra.mxu0 0.0
    %709 = vmatprep.subr.mxu0 0.0
    %710 = vmatpush1.msra.mxu0 0.0
    %711 = vmatprep.subr.mxu0 0.0
    %712 = vmatpush1.msra.mxu0 0.0
    %713 = vmatprep.subr.mxu0 0.0
    %714 = vmatpush1.msra.mxu0 0.0
    %715 = vmatprep.subr.mxu0 0.0
    %716 = vmatpush1.msra.mxu0 0.0
    %717 = vmatprep.subr.mxu0 0.0
    %718 = vmatpush1.msra.mxu0 0.0
    %719 = vmatprep.subr.mxu0 0.0
    %720 = vmatpush1.msra.mxu0 0.0
    %721 = vmatprep.subr.mxu0 0.0
    %722 = vmatpush1.msra.mxu0 0.0
    %723 = vmatprep.subr.mxu0 0.0
    %724 = vmatpush1.msra.mxu0 0.0
    %725 = vmatprep.subr.mxu0 0.0
    %726 = vmatpush1.msra.mxu0 0.0
    %727 = vmatprep.subr.mxu0 0.0
    %728 = vmatpush1.msra.mxu0 0.0
    %729 = vmatprep.subr.mxu0 0.0
    %730 = vmatpush1.msra.mxu0 0.0
    %731 = vmatprep.subr.mxu0 0.0
    %732 = vmatpush1.msra.mxu0 0.0
    %733 = vmatprep.subr.mxu0 0.0
    %734 = vmatpush1.msra.mxu0 0.0
    %735 = vmatprep.mubr.f32.mxu0 0.0
    %736 = vmatmul.mubr.f32.gmra.mrb[0].mxu0 %v291
    %v737 = vpop.f32.mrb[0].mxu0
    %v738 = vadd.f32 0.0, %v737
    %v739 = vpop.f32.mrb[0].mxu0
    %740 = vmatprep.mubr.f32.mxu0 0.0
    %741 = vmatmul.mubr.f32.gmra.mrb[0].mxu0 %v294
    %v742 = vpop.f32.mrb[0].mxu0
    %v743 = vadd.f32 0.0, %v742
    %v744 = vpop.f32.mrb[0].mxu0
    %745 = vdwg.mxu0
    %746 = vmatprep.subr.mxu0 0.0
    %747 = vmatpush1.msra.mxu0 %v282
    %748 = vmatprep.subr.mxu0 0.0
    %749 = vmatpush1.msra.mxu0 %v283
    %750 = vmatprep.subr.mxu0 0.0
    %751 = vmatpush1.msra.mxu0 %v284
    %752 = vmatprep.subr.mxu0 0.0
    %753 = vmatpush1.msra.mxu0 %v285
    %754 = vmatprep.subr.mxu0 0.0
    %755 = vmatpush1.msra.mxu0 0.0
    %756 = vmatprep.subr.mxu0 0.0
    %757 = vmatpush1.msra.mxu0 0.0
    %758 = vmatprep.subr.mxu0 0.0
    %759 = vmatpush1.msra.mxu0 0.0
    %760 = vmatprep.subr.mxu0 0.0
    %761 = vmatpush1.msra.mxu0 0.0
    %762 = vmatprep.subr.mxu0 0.0
    %763 = vmatpush1.msra.mxu0 0.0
    %764 = vmatprep.subr.mxu0 0.0
    %765 = vmatpush1.msra.mxu0 0.0
    %766 = vmatprep.subr.mxu0 0.0
    %767 = vmatpush1.msra.mxu0 0.0
    %768 = vmatprep.subr.mxu0 0.0
    %769 = vmatpush1.msra.mxu0 0.0
    %770 = vmatprep.subr.mxu0 0.0
    %771 = vmatpush1.msra.mxu0 0.0
    %772 = vmatprep.subr.mxu0 0.0
    %773 = vmatpush1.msra.mxu0 0.0
    %774 = vmatprep.subr.mxu0 0.0
    %775 = vmatpush1.msra.mxu0 0.0
    %776 = vmatprep.subr.mxu0 0.0
    %777 = vmatpush1.msra.mxu0 0.0
    %778 = vmatprep.subr.mxu0 0.0
    %779 = vmatpush1.msra.mxu0 0.0
    %780 = vmatprep.subr.mxu0 0.0
    %781 = vmatpush1.msra.mxu0 0.0
    %782 = vmatprep.subr.mxu0 0.0
    %783 = vmatpush1.msra.mxu0 0.0
    %784 = vmatprep.subr.mxu0 0.0
    %785 = vmatpush1.msra.mxu0 0.0
    %786 = vmatprep.subr.mxu0 0.0
    %787 = vmatpush1.msra.mxu0 0.0
    %788 = vmatprep.subr.mxu0 0.0
    %789 = vmatpush1.msra.mxu0 0.0
    %790 = vmatprep.subr.mxu0 0.0
    %791 = vmatpush1.msra.mxu0 0.0
    %792 = vmatprep.subr.mxu0 0.0
    %793 = vmatpush1.msra.mxu0 0.0
    %794 = vmatprep.subr.mxu0 0.0
    %795 = vmatpush1.msra.mxu0 0.0
    %796 = vmatprep.subr.mxu0 0.0
    %797 = vmatpush1.msra.mxu0 0.0
    %798 = vmatprep.subr.mxu0 0.0
    %799 = vmatpush1.msra.mxu0 0.0
    %800 = vmatprep.subr.mxu0 0.0
    %801 = vmatpush1.msra.mxu0 0.0
    %802 = vmatprep.subr.mxu0 0.0
    %803 = vmatpush1.msra.mxu0 0.0
    %804 = vmatprep.subr.mxu0 0.0
    %805 = vmatpush1.msra.mxu0 0.0
    %806 = vmatprep.subr.mxu0 0.0
    %807 = vmatpush1.msra.mxu0 0.0
    %808 = vmatprep.subr.mxu0 0.0
    %809 = vmatpush1.msra.mxu0 0.0
    %810 = vmatprep.mubr.f32.mxu0 0.0
    %811 = vmatmul.mubr.f32.gmra.mrb[0].mxu0 %v291
    %v812 = vpop.f32.mrb[0].mxu0
    %v813 = vadd.f32 0.0, %v812
    %v814 = vpop.f32.mrb[0].mxu0
    %815 = vmatprep.mubr.f32.mxu0 0.0
    %816 = vmatmul.mubr.f32.gmra.mrb[0].mxu0 %v294
    %v817 = vpop.f32.mrb[0].mxu0
    %v818 = vadd.f32 0.0, %v817
    %v819 = vpop.f32.mrb[0].mxu0
    %820 = vdwg.mxu0
    %821 = vmatprep.subr.mxu0 0.0
    %822 = vmatpush1.msra.mxu0 %v286
    %823 = vmatprep.subr.mxu0 0.0
    %824 = vmatpush1.msra.mxu0 %v287
    %825 = vmatprep.subr.mxu0 0.0
    %826 = vmatpush1.msra.mxu0 %v288
    %827 = vmatprep.subr.mxu0 0.0
    %828 = vmatpush1.msra.mxu0 %v289
    %829 = vmatprep.subr.mxu0 0.0
    %830 = vmatpush1.msra.mxu0 0.0
    %831 = vmatprep.subr.mxu0 0.0
    %832 = vmatpush1.msra.mxu0 0.0
    %833 = vmatprep.subr.mxu0 0.0
    %834 = vmatpush1.msra.mxu0 0.0
    %835 = vmatprep.subr.mxu0 0.0
    %836 = vmatpush1.msra.mxu0 0.0
    %837 = vmatprep.subr.mxu0 0.0
    %838 = vmatpush1.msra.mxu0 0.0
    %839 = vmatprep.subr.mxu0 0.0
    %840 = vmatpush1.msra.mxu0 0.0
    %841 = vmatprep.subr.mxu0 0.0
    %842 = vmatpush1.msra.mxu0 0.0
    %843 = vmatprep.subr.mxu0 0.0
    %844 = vmatpush1.msra.mxu0 0.0
    %845 = vmatprep.subr.mxu0 0.0
    %846 = vmatpush1.msra.mxu0 0.0
    %847 = vmatprep.subr.mxu0 0.0
    %848 = vmatpush1.msra.mxu0 0.0
    %849 = vmatprep.subr.mxu0 0.0
    %850 = vmatpush1.msra.mxu0 0.0
    %851 = vmatprep.subr.mxu0 0.0
    %852 = vmatpush1.msra.mxu0 0.0
    %853 = vmatprep.subr.mxu0 0.0
    %854 = vmatpush1.msra.mxu0 0.0
    %855 = vmatprep.subr.mxu0 0.0
    %856 = vmatpush1.msra.mxu0 0.0
    %857 = vmatprep.subr.mxu0 0.0
    %858 = vmatpush1.msra.mxu0 0.0
    %859 = vmatprep.subr.mxu0 0.0
    %860 = vmatpush1.msra.mxu0 0.0
    %861 = vmatprep.subr.mxu0 0.0
    %862 = vmatpush1.msra.mxu0 0.0
    %863 = vmatprep.subr.mxu0 0.0
    %864 = vmatpush1.msra.mxu0 0.0
    %865 = vmatprep.subr.mxu0 0.0
    %866 = vmatpush1.msra.mxu0 0.0
    %867 = vmatprep.subr.mxu0 0.0
    %868 = vmatpush1.msra.mxu0 0.0
    %869 = vmatprep.subr.mxu0 0.0
    %870 = vmatpush1.msra.mxu0 0.0
    %871 = vmatprep.subr.mxu0 0.0
    %872 = vmatpush1.msra.mxu0 0.0
    %873 = vmatprep.subr.mxu0 0.0
    %874 = vmatpush1.msra.mxu0 0.0
    %875 = vmatprep.subr.mxu0 0.0
    %876 = vmatpush1.msra.mxu0 0.0
    %877 = vmatprep.subr.mxu0 0.0
    %878 = vmatpush1.msra.mxu0 0.0
    %879 = vmatprep.subr.mxu0 0.0
    %880 = vmatpush1.msra.mxu0 0.0
    %881 = vmatprep.subr.mxu0 0.0
    %882 = vmatpush1.msra.mxu0 0.0
    %883 = vmatprep.subr.mxu0 0.0
    %884 = vmatpush1.msra.mxu0 0.0
    %885 = vmatprep.mubr.f32.mxu0 0.0
    %886 = vmatmul.mubr.f32.gmra.mrb[0].mxu0 %v291
    %v887 = vpop.f32.mrb[0].mxu0
    %v888 = vadd.f32 0.0, %v887
    %v889 = vpop.f32.mrb[0].mxu0
    %890 = vmatprep.mubr.f32.mxu0 0.0
    %891 = vmatmul.mubr.f32.gmra.mrb[0].mxu0 %v294
    %v892 = vpop.f32.mrb[0].mxu0
    %v893 = vadd.f32 0.0, %v892
    %v894 = vpop.f32.mrb[0].mxu0
    %895 = vdwg.mxu0
    %v896 = vld [vmem:[%s7] sm:$0xff]
    %v897 = vld [vmem:[%s7 + $0x8] sm:$0xff]
    %v898 = vld [vmem:[%s7 + $0x10] sm:$0xff]
    %v899 = vld [vmem:[%s7 + $0x18] sm:$0xff]
    %v900 = vld [vmem:[%s7 + $0x20] sm:$0xff]
    %v901 = vld [vmem:[%s7 + $0x28] sm:$0xff]
    %v902 = vld [vmem:[%s7 + $0x30] sm:$0xff]
    %v903 = vld [vmem:[%s7 + $0x38] sm:$0xff]
    %v904 = vld [vmem:[%s7 + $0x40] sm:$0xff]
    %v905 = vld [vmem:[%s7 + $0x48] sm:$0xff]
    %v906 = vld [vmem:[%s7 + $0x50] sm:$0xff]
    %v907 = vld [vmem:[%s7 + $0x58] sm:$0xff]
    %v908 = vld [vmem:[%s7 + $0x60] sm:$0xff]
    %v909 = vld [vmem:[%s7 + $0x68] sm:$0xff]
    %v910 = vld [vmem:[%s7 + $0x70] sm:$0xff]
    %v911 = vld [vmem:[%s7 + $0x78] sm:$0xff]
    %912 = vmatprep.subr.mxu0 0.0
    %913 = vmatpush1.msra.mxu0 %v896
    %914 = vmatprep.subr.mxu0 0.0
    %915 = vmatpush1.msra.mxu0 %v897
    %916 = vmatprep.subr.mxu0 0.0
    %917 = vmatpush1.msra.mxu0 %v898
    %918 = vmatprep.subr.mxu0 0.0
    %919 = vmatpush1.msra.mxu0 %v899
    %920 = vmatprep.subr.mxu0 0.0
    %921 = vmatpush1.msra.mxu0 0.0
    %922 = vmatprep.subr.mxu0 0.0
    %923 = vmatpush1.msra.mxu0 0.0
    %924 = vmatprep.subr.mxu0 0.0
    %925 = vmatpush1.msra.mxu0 0.0
    %926 = vmatprep.subr.mxu0 0.0
    %927 = vmatpush1.msra.mxu0 0.0
    %928 = vmatprep.subr.mxu0 0.0
    %929 = vmatpush1.msra.mxu0 0.0
    %930 = vmatprep.subr.mxu0 0.0
    %931 = vmatpush1.msra.mxu0 0.0
    %932 = vmatprep.subr.mxu0 0.0
    %933 = vmatpush1.msra.mxu0 0.0
    %934 = vmatprep.subr.mxu0 0.0
    %935 = vmatpush1.msra.mxu0 0.0
    %936 = vmatprep.subr.mxu0 0.0
    %937 = vmatpush1.msra.mxu0 0.0
    %938 = vmatprep.subr.mxu0 0.0
    %939 = vmatpush1.msra.mxu0 0.0
    %940 = vmatprep.subr.mxu0 0.0
    %941 = vmatpush1.msra.mxu0 0.0
    %942 = vmatprep.subr.mxu0 0.0
    %943 = vmatpush1.msra.mxu0 0.0
    %944 = vmatprep.subr.mxu0 0.0
    %945 = vmatpush1.msra.mxu0 0.0
    %946 = vmatprep.subr.mxu0 0.0
    %947 = vmatpush1.msra.mxu0 0.0
    %948 = vmatprep.subr.mxu0 0.0
    %949 = vmatpush1.msra.mxu0 0.0
    %950 = vmatprep.subr.mxu0 0.0
    %951 = vmatpush1.msra.mxu0 0.0
    %952 = vmatprep.subr.mxu0 0.0
    %953 = vmatpush1.msra.mxu0 0.0
    %954 = vmatprep.subr.mxu0 0.0
    %955 = vmatpush1.msra.mxu0 0.0
    %956 = vmatprep.subr.mxu0 0.0
    %957 = vmatpush1.msra.mxu0 0.0
    %958 = vmatprep.subr.mxu0 0.0
    %959 = vmatpush1.msra.mxu0 0.0
    %960 = vmatprep.subr.mxu0 0.0
    %961 = vmatpush1.msra.mxu0 0.0
    %962 = vmatprep.subr.mxu0 0.0
    %963 = vmatpush1.msra.mxu0 0.0
    %964 = vmatprep.subr.mxu0 0.0
    %965 = vmatpush1.msra.mxu0 0.0
    %966 = vmatprep.subr.mxu0 0.0
    %967 = vmatpush1.msra.mxu0 0.0
    %968 = vmatprep.subr.mxu0 0.0
    %969 = vmatpush1.msra.mxu0 0.0
    %970 = vmatprep.subr.mxu0 0.0
    %971 = vmatpush1.msra.mxu0 0.0
    %972 = vmatprep.subr.mxu0 0.0
    %973 = vmatpush1.msra.mxu0 0.0
    %974 = vmatprep.subr.mxu0 0.0
    %975 = vmatpush1.msra.mxu0 0.0
    %976 = vmatprep.mubr.f32.mxu0 0.0
    %977 = vmatmul.mubr.f32.gmra.mrb[0].mxu0 %v291
    %v978 = vpop.f32.mrb[0].mxu0
    %v979 = vadd.f32 0.0, %v978
    %v980 = vpop.f32.mrb[0].mxu0
    %981 = vmatprep.mubr.f32.mxu0 0.0
    %982 = vmatmul.mubr.f32.gmra.mrb[0].mxu0 %v294
    %v983 = vpop.f32.mrb[0].mxu0
    %v984 = vadd.f32 0.0, %v983
    %v985 = vpop.f32.mrb[0].mxu0
    %986 = vdwg.mxu0
    %987 = vmatprep.subr.mxu0 0.0
    %988 = vmatpush1.msra.mxu0 %v900
    %989 = vmatprep.subr.mxu0 0.0
    %990 = vmatpush1.msra.mxu0 %v901
    %991 = vmatprep.subr.mxu0 0.0
    %992 = vmatpush1.msra.mxu0 %v902
    %993 = vmatprep.subr.mxu0 0.0
    %994 = vmatpush1.msra.mxu0 %v903
    %995 = vmatprep.subr.mxu0 0.0
    %996 = vmatpush1.msra.mxu0 0.0
    %997 = vmatprep.subr.mxu0 0.0
    %998 = vmatpush1.msra.mxu0 0.0
    %999 = vmatprep.subr.mxu0 0.0
    %1000 = vmatpush1.msra.mxu0 0.0
    %1001 = vmatprep.subr.mxu0 0.0
    %1002 = vmatpush1.msra.mxu0 0.0
    %1003 = vmatprep.subr.mxu0 0.0
    %1004 = vmatpush1.msra.mxu0 0.0
    %1005 = vmatprep.subr.mxu0 0.0
    %1006 = vmatpush1.msra.mxu0 0.0
    %1007 = vmatprep.subr.mxu0 0.0
    %1008 = vmatpush1.msra.mxu0 0.0
    %1009 = vmatprep.subr.mxu0 0.0
    %1010 = vmatpush1.msra.mxu0 0.0
    %1011 = vmatprep.subr.mxu0 0.0
    %1012 = vmatpush1.msra.mxu0 0.0
    %1013 = vmatprep.subr.mxu0 0.0
    %1014 = vmatpush1.msra.mxu0 0.0
    %1015 = vmatprep.subr.mxu0 0.0
    %1016 = vmatpush1.msra.mxu0 0.0
    %1017 = vmatprep.subr.mxu0 0.0
    %1018 = vmatpush1.msra.mxu0 0.0
    %1019 = vmatprep.subr.mxu0 0.0
    %1020 = vmatpush1.msra.mxu0 0.0
    %1021 = vmatprep.subr.mxu0 0.0
    %1022 = vmatpush1.msra.mxu0 0.0
    %1023 = vmatprep.subr.mxu0 0.0
    %1024 = vmatpush1.msra.mxu0 0.0
    %1025 = vmatprep.subr.mxu0 0.0
    %1026 = vmatpush1.msra.mxu0 0.0
    %1027 = vmatprep.subr.mxu0 0.0
    %1028 = vmatpush1.msra.mxu0 0.0
    %1029 = vmatprep.subr.mxu0 0.0
    %1030 = vmatpush1.msra.mxu0 0.0
    %1031 = vmatprep.subr.mxu0 0.0
    %1032 = vmatpush1.msra.mxu0 0.0
    %1033 = vmatprep.subr.mxu0 0.0
    %1034 = vmatpush1.msra.mxu0 0.0
    %1035 = vmatprep.subr.mxu0 0.0
    %1036 = vmatpush1.msra.mxu0 0.0
    %1037 = vmatprep.subr.mxu0 0.0
    %1038 = vmatpush1.msra.mxu0 0.0
    %1039 = vmatprep.subr.mxu0 0.0
    %1040 = vmatpush1.msra.mxu0 0.0
    %1041 = vmatprep.subr.mxu0 0.0
    %1042 = vmatpush1.msra.mxu0 0.0
    %1043 = vmatprep.subr.mxu0 0.0
    %1044 = vmatpush1.msra.mxu0 0.0
    %1045 = vmatprep.subr.mxu0 0.0
    %1046 = vmatpush1.msra.mxu0 0.0
    %1047 = vmatprep.subr.mxu0 0.0
    %1048 = vmatpush1.msra.mxu0 0.0
    %1049 = vmatprep.subr.mxu0 0.0
    %1050 = vmatpush1.msra.mxu0 0.0
    %1051 = vmatprep.mubr.f32.mxu0 0.0
    %1052 = vmatmul.mubr.f32.gmra.mrb[0].mxu0 %v291
    %v1053 = vpop.f32.mrb[0].mxu0
    %v1054 = vadd.f32 0.0, %v1053
    %v1055 = vpop.f32.mrb[0].mxu0
    %1056 = vmatprep.mubr.f32.mxu0 0.0
    %1057 = vmatmul.mubr.f32.gmra.mrb[0].mxu0 %v294
    %v1058 = vpop.f32.mrb[0].mxu0
    %v1059 = vadd.f32 0.0, %v1058
    %v1060 = vpop.f32.mrb[0].mxu0
    %1061 = vdwg.mxu0
    %1062 = vmatprep.subr.mxu0 0.0
    %1063 = vmatpush1.msra.mxu0 %v904
    %1064 = vmatprep.subr.mxu0 0.0
    %1065 = vmatpush1.msra.mxu0 %v905
    %1066 = vmatprep.subr.mxu0 0.0
    %1067 = vmatpush1.msra.mxu0 %v906
    %1068 = vmatprep.subr.mxu0 0.0
    %1069 = vmatpush1.msra.mxu0 %v907
    %1070 = vmatprep.subr.mxu0 0.0
    %1071 = vmatpush1.msra.mxu0 0.0
    %1072 = vmatprep.subr.mxu0 0.0
    %1073 = vmatpush1.msra.mxu0 0.0
    %1074 = vmatprep.subr.mxu0 0.0
    %1075 = vmatpush1.msra.mxu0 0.0
    %1076 = vmatprep.subr.mxu0 0.0
    %1077 = vmatpush1.msra.mxu0 0.0
    %1078 = vmatprep.subr.mxu0 0.0
    %1079 = vmatpush1.msra.mxu0 0.0
    %1080 = vmatprep.subr.mxu0 0.0
    %1081 = vmatpush1.msra.mxu0 0.0
    %1082 = vmatprep.subr.mxu0 0.0
    %1083 = vmatpush1.msra.mxu0 0.0
    %1084 = vmatprep.subr.mxu0 0.0
    %1085 = vmatpush1.msra.mxu0 0.0
    %1086 = vmatprep.subr.mxu0 0.0
    %1087 = vmatpush1.msra.mxu0 0.0
    %1088 = vmatprep.subr.mxu0 0.0
    %1089 = vmatpush1.msra.mxu0 0.0
    %1090 = vmatprep.subr.mxu0 0.0
    %1091 = vmatpush1.msra.mxu0 0.0
    %1092 = vmatprep.subr.mxu0 0.0
    %1093 = vmatpush1.msra.mxu0 0.0
    %1094 = vmatprep.subr.mxu0 0.0
    %1095 = vmatpush1.msra.mxu0 0.0
    %1096 = vmatprep.subr.mxu0 0.0
    %1097 = vmatpush1.msra.mxu0 0.0
    %1098 = vmatprep.subr.mxu0 0.0
    %1099 = vmatpush1.msra.mxu0 0.0
    %1100 = vmatprep.subr.mxu0 0.0
    %1101 = vmatpush1.msra.mxu0 0.0
    %1102 = vmatprep.subr.mxu0 0.0
    %1103 = vmatpush1.msra.mxu0 0.0
    %1104 = vmatprep.subr.mxu0 0.0
    %1105 = vmatpush1.msra.mxu0 0.0
    %1106 = vmatprep.subr.mxu0 0.0
    %1107 = vmatpush1.msra.mxu0 0.0
    %1108 = vmatprep.subr.mxu0 0.0
    %1109 = vmatpush1.msra.mxu0 0.0
    %1110 = vmatprep.subr.mxu0 0.0
    %1111 = vmatpush1.msra.mxu0 0.0
    %1112 = vmatprep.subr.mxu0 0.0
    %1113 = vmatpush1.msra.mxu0 0.0
    %1114 = vmatprep.subr.mxu0 0.0
    %1115 = vmatpush1.msra.mxu0 0.0
    %1116 = vmatprep.subr.mxu0 0.0
    %1117 = vmatpush1.msra.mxu0 0.0
    %1118 = vmatprep.subr.mxu0 0.0
    %1119 = vmatpush1.msra.mxu0 0.0
    %1120 = vmatprep.subr.mxu0 0.0
    %1121 = vmatpush1.msra.mxu0 0.0
    %1122 = vmatprep.subr.mxu0 0.0
    %1123 = vmatpush1.msra.mxu0 0.0
    %1124 = vmatprep.subr.mxu0 0.0
    %1125 = vmatpush1.msra.mxu0 0.0
    %1126 = vmatprep.mubr.f32.mxu0 0.0
    %1127 = vmatmul.mubr.f32.gmra.mrb[0].mxu0 %v291
    %v1128 = vpop.f32.mrb[0].mxu0
    %v1129 = vadd.f32 0.0, %v1128
    %v1130 = vpop.f32.mrb[0].mxu0
    %1131 = vmatprep.mubr.f32.mxu0 0.0
    %1132 = vmatmul.mubr.f32.gmra.mrb[0].mxu0 %v294
    %v1133 = vpop.f32.mrb[0].mxu0
    %v1134 = vadd.f32 0.0, %v1133
    %v1135 = vpop.f32.mrb[0].mxu0
    %1136 = vdwg.mxu0
    %1137 = vmatprep.subr.mxu0 0.0
    %1138 = vmatpush1.msra.mxu0 %v908
    %1139 = vmatprep.subr.mxu0 0.0
    %1140 = vmatpush1.msra.mxu0 %v909
    %1141 = vmatprep.subr.mxu0 0.0
    %1142 = vmatpush1.msra.mxu0 %v910
    %1143 = vmatprep.subr.mxu0 0.0
    %1144 = vmatpush1.msra.mxu0 %v911
    %1145 = vmatprep.subr.mxu0 0.0
    %1146 = vmatpush1.msra.mxu0 0.0
    %1147 = vmatprep.subr.mxu0 0.0
    %1148 = vmatpush1.msra.mxu0 0.0
    %1149 = vmatprep.subr.mxu0 0.0
    %1150 = vmatpush1.msra.mxu0 0.0
    %1151 = vmatprep.subr.mxu0 0.0
    %1152 = vmatpush1.msra.mxu0 0.0
    %1153 = vmatprep.subr.mxu0 0.0
    %1154 = vmatpush1.msra.mxu0 0.0
    %1155 = vmatprep.subr.mxu0 0.0
    %1156 = vmatpush1.msra.mxu0 0.0
    %1157 = vmatprep.subr.mxu0 0.0
    %1158 = vmatpush1.msra.mxu0 0.0
    %1159 = vmatprep.subr.mxu0 0.0
    %1160 = vmatpush1.msra.mxu0 0.0
    %1161 = vmatprep.subr.mxu0 0.0
    %1162 = vmatpush1.msra.mxu0 0.0
    %1163 = vmatprep.subr.mxu0 0.0
    %1164 = vmatpush1.msra.mxu0 0.0
    %1165 = vmatprep.subr.mxu0 0.0
    %1166 = vmatpush1.msra.mxu0 0.0
    %1167 = vmatprep.subr.mxu0 0.0
    %1168 = vmatpush1.msra.mxu0 0.0
    %1169 = vmatprep.subr.mxu0 0.0
    %1170 = vmatpush1.msra.mxu0 0.0
    %1171 = vmatprep.subr.mxu0 0.0
    %1172 = vmatpush1.msra.mxu0 0.0
    %1173 = vmatprep.subr.mxu0 0.0
    %1174 = vmatpush1.msra.mxu0 0.0
    %1175 = vmatprep.subr.mxu0 0.0
    %1176 = vmatpush1.msra.mxu0 0.0
    %1177 = vmatprep.subr.mxu0 0.0
    %1178 = vmatpush1.msra.mxu0 0.0
    %1179 = vmatprep.subr.mxu0 0.0
    %1180 = vmatpush1.msra.mxu0 0.0
    %1181 = vmatprep.subr.mxu0 0.0
    %1182 = vmatpush1.msra.mxu0 0.0
    %1183 = vmatprep.subr.mxu0 0.0
    %1184 = vmatpush1.msra.mxu0 0.0
    %1185 = vmatprep.subr.mxu0 0.0
    %1186 = vmatpush1.msra.mxu0 0.0
    %1187 = vmatprep.subr.mxu0 0.0
    %1188 = vmatpush1.msra.mxu0 0.0
    %1189 = vmatprep.subr.mxu0 0.0
    %1190 = vmatpush1.msra.mxu0 0.0
    %1191 = vmatprep.subr.mxu0 0.0
    %1192 = vmatpush1.msra.mxu0 0.0
    %1193 = vmatprep.subr.mxu0 0.0
    %1194 = vmatpush1.msra.mxu0 0.0
    %1195 = vmatprep.subr.mxu0 0.0
    %1196 = vmatpush1.msra.mxu0 0.0
    %1197 = vmatprep.subr.mxu0 0.0
    %1198 = vmatpush1.msra.mxu0 0.0
    %1199 = vmatprep.subr.mxu0 0.0
    %1200 = vmatpush1.msra.mxu0 0.0
    %1201 = vmatprep.mubr.f32.mxu0 0.0
    %1202 = vmatmul.mubr.f32.gmra.mrb[0].mxu0 %v291
    %v1203 = vpop.f32.mrb[0].mxu0
    %v1204 = vadd.f32 0.0, %v1203
    %v1205 = vpop.f32.mrb[0].mxu0
    %1206 = vmatprep.mubr.f32.mxu0 0.0
    %1207 = vmatmul.mubr.f32.gmra.mrb[0].mxu0 %v294
    %v1208 = vpop.f32.mrb[0].mxu0
    %v1209 = vadd.f32 0.0, %v1208
    %v1210 = vpop.f32.mrb[0].mxu0
    %1211 = vdwg.mxu0
    %vm1212 = vcmask 64512
    %v1214 = vsel %vm1212, %v363, 0
    %v1217 = vsel %vm1212, %v663, 0
    %1219 = vmatprep.subr.mxu0 0.0
    %1220 = vmatpush1.xpose.msra.mxu0 %v1217
    %1221 = vmatprep.subr.mxu0 0.0
    %1222 = vmatpush1.xpose.msra.mxu0 0.0
    %1223 = vmatprep.subr.mxu0 0.0
    %1224 = vmatpush1.xpose.msra.mxu0 0.0
    %1225 = vmatprep.subr.mxu0 0.0
    %1226 = vmatpush1.xpose.msra.mxu0 0.0
    %1227 = vmatprep.subr.mxu0 0.0
    %1228 = vmatpush1.xpose.msra.mxu0 0.0
    %1229 = vmatprep.subr.mxu0 0.0
    %1230 = vmatpush1.xpose.msra.mxu0 0.0
    %1231 = vmatprep.subr.mxu0 0.0
    %1232 = vmatpush1.xpose.msra.mxu0 0.0
    %1233 = vmatprep.subr.mxu0 0.0
    %1234 = vmatpush1.xpose.msra.mxu0 0.0
    %1235 = vmatprep.subr.mxu0 0.0
    %1236 = vmatpush1.xpose.msra.mxu0 0.0
    %1237 = vmatprep.subr.mxu0 0.0
    %1238 = vmatpush1.xpose.msra.mxu0 0.0
    %1239 = vmatprep.subr.mxu0 0.0
    %1240 = vmatpush1.xpose.msra.mxu0 0.0
    %1241 = vmatprep.subr.mxu0 0.0
    %1242 = vmatpush1.xpose.msra.mxu0 0.0
    %1243 = vmatprep.subr.mxu0 0.0
    %1244 = vmatpush1.xpose.msra.mxu0 0.0
    %1245 = vmatprep.subr.mxu0 0.0
    %1246 = vmatpush1.xpose.msra.mxu0 0.0
    %1247 = vmatprep.subr.mxu0 0.0
    %1248 = vmatpush1.xpose.msra.mxu0 0.0
    %1249 = vmatprep.subr.mxu0 0.0
    %1250 = vmatpush1.xpose.msra.mxu0 0.0
    %1251 = vmatprep.subr.mxu0 0.0
    %1252 = vmatpush1.xpose.msra.mxu0 0.0
    %1253 = vmatprep.subr.mxu0 0.0
    %1254 = vmatpush1.xpose.msra.mxu0 0.0
    %1255 = vmatprep.subr.mxu0 0.0
    %1256 = vmatpush1.xpose.msra.mxu0 0.0
    %1257 = vmatprep.subr.mxu0 0.0
    %1258 = vmatpush1.xpose.msra.mxu0 0.0
    %1259 = vmatprep.subr.mxu0 0.0
    %1260 = vmatpush1.xpose.msra.mxu0 0.0
    %1261 = vmatprep.subr.mxu0 0.0
    %1262 = vmatpush1.xpose.msra.mxu0 0.0
    %1263 = vmatprep.subr.mxu0 0.0
    %1264 = vmatpush1.xpose.msra.mxu0 0.0
    %1265 = vmatprep.subr.mxu0 0.0
    %1266 = vmatpush1.xpose.msra.mxu0 0.0
    %1267 = vmatprep.subr.mxu0 0.0
    %1268 = vmatpush1.xpose.msra.mxu0 0.0
    %1269 = vmatprep.subr.mxu0 0.0
    %1270 = vmatpush1.xpose.msra.mxu0 0.0
    %1271 = vmatprep.subr.mxu0 0.0
    %1272 = vmatpush1.xpose.msra.mxu0 0.0
    %1273 = vmatprep.subr.mxu0 0.0
    %1274 = vmatpush1.xpose.msra.mxu0 0.0
    %1275 = vmatprep.subr.mxu0 0.0
    %1276 = vmatpush1.xpose.msra.mxu0 0.0
    %1277 = vmatprep.subr.mxu0 0.0
    %1278 = vmatpush1.xpose.msra.mxu0 0.0
    %1279 = vmatprep.subr.mxu0 0.0
    %1280 = vmatpush1.xpose.msra.mxu0 0.0
    %1281 = vmatprep.subr.mxu0 0.0
    %1282 = vmatpush1.xpose.msra.mxu0 0.0
    %1283 = vmatprep.mubr.f32.mxu0 0.0
    %1284 = vmatmul.mubr.f32.gmra.mrb[0].mxu0 %v1214
    %v1285 = vpop.f32.mrb[0].mxu0
    %v1286 = vadd.f32 0.0, %v1285
    %v1287 = vpop.f32.mrb[0].mxu0
    %1288 = vdwg.mxu0
    %v1290 = vsel %vm1212, %v368, 0
    %v1293 = vsel %vm1212, %v668, 0
    %1295 = vmatprep.subr.mxu0 0.0
    %1296 = vmatpush1.xpose.msra.mxu0 %v1293
    %1297 = vmatprep.subr.mxu0 0.0
    %1298 = vmatpush1.xpose.msra.mxu0 0.0
    %1299 = vmatprep.subr.mxu0 0.0
    %1300 = vmatpush1.xpose.msra.mxu0 0.0
    %1301 = vmatprep.subr.mxu0 0.0
    %1302 = vmatpush1.xpose.msra.mxu0 0.0
    %1303 = vmatprep.subr.mxu0 0.0
    %1304 = vmatpush1.xpose.msra.mxu0 0.0
    %1305 = vmatprep.subr.mxu0 0.0
    %1306 = vmatpush1.xpose.msra.mxu0 0.0
    %1307 = vmatprep.subr.mxu0 0.0
    %1308 = vmatpush1.xpose.msra.mxu0 0.0
    %1309 = vmatprep.subr.mxu0 0.0
    %1310 = vmatpush1.xpose.msra.mxu0 0.0
    %1311 = vmatprep.subr.mxu0 0.0
    %1312 = vmatpush1.xpose.msra.mxu0 0.0
    %1313 = vmatprep.subr.mxu0 0.0
    %1314 = vmatpush1.xpose.msra.mxu0 0.0
    %1315 = vmatprep.subr.mxu0 0.0
    %1316 = vmatpush1.xpose.msra.mxu0 0.0
    %1317 = vmatprep.subr.mxu0 0.0
    %1318 = vmatpush1.xpose.msra.mxu0 0.0
    %1319 = vmatprep.subr.mxu0 0.0
    %1320 = vmatpush1.xpose.msra.mxu0 0.0
    %1321 = vmatprep.subr.mxu0 0.0
    %1322 = vmatpush1.xpose.msra.mxu0 0.0
    %1323 = vmatprep.subr.mxu0 0.0
    %1324 = vmatpush1.xpose.msra.mxu0 0.0
    %1325 = vmatprep.subr.mxu0 0.0
    %1326 = vmatpush1.xpose.msra.mxu0 0.0
    %1327 = vmatprep.subr.mxu0 0.0
    %1328 = vmatpush1.xpose.msra.mxu0 0.0
    %1329 = vmatprep.subr.mxu0 0.0
    %1330 = vmatpush1.xpose.msra.mxu0 0.0
    %1331 = vmatprep.subr.mxu0 0.0
    %1332 = vmatpush1.xpose.msra.mxu0 0.0
    %1333 = vmatprep.subr.mxu0 0.0
    %1334 = vmatpush1.xpose.msra.mxu0 0.0
    %1335 = vmatprep.subr.mxu0 0.0
    %1336 = vmatpush1.xpose.msra.mxu0 0.0
    %1337 = vmatprep.subr.mxu0 0.0
    %1338 = vmatpush1.xpose.msra.mxu0 0.0
    %1339 = vmatprep.subr.mxu0 0.0
    %1340 = vmatpush1.xpose.msra.mxu0 0.0
    %1341 = vmatprep.subr.mxu0 0.0
    %1342 = vmatpush1.xpose.msra.mxu0 0.0
    %1343 = vmatprep.subr.mxu0 0.0
    %1344 = vmatpush1.xpose.msra.mxu0 0.0
    %1345 = vmatprep.subr.mxu0 0.0
    %1346 = vmatpush1.xpose.msra.mxu0 0.0
    %1347 = vmatprep.subr.mxu0 0.0
    %1348 = vmatpush1.xpose.msra.mxu0 0.0
    %1349 = vmatprep.subr.mxu0 0.0
    %1350 = vmatpush1.xpose.msra.mxu0 0.0
    %1351 = vmatprep.subr.mxu0 0.0
    %1352 = vmatpush1.xpose.msra.mxu0 0.0
    %1353 = vmatprep.subr.mxu0 0.0
    %1354 = vmatpush1.xpose.msra.mxu0 0.0
    %1355 = vmatprep.subr.mxu0 0.0
    %1356 = vmatpush1.xpose.msra.mxu0 0.0
    %1357 = vmatprep.subr.mxu0 0.0
    %1358 = vmatpush1.xpose.msra.mxu0 0.0
    %1359 = vmatprep.mubr.f32.mxu0 0.0
    %1360 = vmatmul.mubr.f32.gmra.mrb[0].mxu0 %v1290
    %v1361 = vpop.f32.mrb[0].mxu0
    %v1362 = vadd.f32 0.0, %v1361
    %v1363 = vpop.f32.mrb[0].mxu0
    %1364 = vdwg.mxu0
    %v1366 = vsel %vm1212, %v438, 0
    %v1369 = vsel %vm1212, %v738, 0
    %1371 = vmatprep.subr.mxu0 0.0
    %1372 = vmatpush1.xpose.msra.mxu0 %v1369
    %1373 = vmatprep.subr.mxu0 0.0
    %1374 = vmatpush1.xpose.msra.mxu0 0.0
    %1375 = vmatprep.subr.mxu0 0.0
    %1376 = vmatpush1.xpose.msra.mxu0 0.0
    %1377 = vmatprep.subr.mxu0 0.0
    %1378 = vmatpush1.xpose.msra.mxu0 0.0
    %1379 = vmatprep.subr.mxu0 0.0
    %1380 = vmatpush1.xpose.msra.mxu0 0.0
    %1381 = vmatprep.subr.mxu0 0.0
    %1382 = vmatpush1.xpose.msra.mxu0 0.0
    %1383 = vmatprep.subr.mxu0 0.0
    %1384 = vmatpush1.xpose.msra.mxu0 0.0
    %1385 = vmatprep.subr.mxu0 0.0
    %1386 = vmatpush1.xpose.msra.mxu0 0.0
    %1387 = vmatprep.subr.mxu0 0.0
    %1388 = vmatpush1.xpose.msra.mxu0 0.0
    %1389 = vmatprep.subr.mxu0 0.0
    %1390 = vmatpush1.xpose.msra.mxu0 0.0
    %1391 = vmatprep.subr.mxu0 0.0
    %1392 = vmatpush1.xpose.msra.mxu0 0.0
    %1393 = vmatprep.subr.mxu0 0.0
    %1394 = vmatpush1.xpose.msra.mxu0 0.0
    %1395 = vmatprep.subr.mxu0 0.0
    %1396 = vmatpush1.xpose.msra.mxu0 0.0
    %1397 = vmatprep.subr.mxu0 0.0
    %1398 = vmatpush1.xpose.msra.mxu0 0.0
    %1399 = vmatprep.subr.mxu0 0.0
    %1400 = vmatpush1.xpose.msra.mxu0 0.0
    %1401 = vmatprep.subr.mxu0 0.0
    %1402 = vmatpush1.xpose.msra.mxu0 0.0
    %1403 = vmatprep.subr.mxu0 0.0
    %1404 = vmatpush1.xpose.msra.mxu0 0.0
    %1405 = vmatprep.subr.mxu0 0.0
    %1406 = vmatpush1.xpose.msra.mxu0 0.0
    %1407 = vmatprep.subr.mxu0 0.0
    %1408 = vmatpush1.xpose.msra.mxu0 0.0
    %1409 = vmatprep.subr.mxu0 0.0
    %1410 = vmatpush1.xpose.msra.mxu0 0.0
    %1411 = vmatprep.subr.mxu0 0.0
    %1412 = vmatpush1.xpose.msra.mxu0 0.0
    %1413 = vmatprep.subr.mxu0 0.0
    %1414 = vmatpush1.xpose.msra.mxu0 0.0
    %1415 = vmatprep.subr.mxu0 0.0
    %1416 = vmatpush1.xpose.msra.mxu0 0.0
    %1417 = vmatprep.subr.mxu0 0.0
    %1418 = vmatpush1.xpose.msra.mxu0 0.0
    %1419 = vmatprep.subr.mxu0 0.0
    %1420 = vmatpush1.xpose.msra.mxu0 0.0
    %1421 = vmatprep.subr.mxu0 0.0
    %1422 = vmatpush1.xpose.msra.mxu0 0.0
    %1423 = vmatprep.subr.mxu0 0.0
    %1424 = vmatpush1.xpose.msra.mxu0 0.0
    %1425 = vmatprep.subr.mxu0 0.0
    %1426 = vmatpush1.xpose.msra.mxu0 0.0
    %1427 = vmatprep.subr.mxu0 0.0
    %1428 = vmatpush1.xpose.msra.mxu0 0.0
    %1429 = vmatprep.subr.mxu0 0.0
    %1430 = vmatpush1.xpose.msra.mxu0 0.0
    %1431 = vmatprep.subr.mxu0 0.0
    %1432 = vmatpush1.xpose.msra.mxu0 0.0
    %1433 = vmatprep.subr.mxu0 0.0
    %1434 = vmatpush1.xpose.msra.mxu0 0.0
    %1435 = vmatprep.mubr.f32.mxu0 0.0
    %1436 = vmatmul.mubr.f32.gmra.mrb[0].mxu0 %v1366
    %v1437 = vpop.f32.mrb[0].mxu0
    %v1438 = vadd.f32 0.0, %v1437
    %v1439 = vpop.f32.mrb[0].mxu0
    %1440 = vdwg.mxu0
    %v1442 = vsel %vm1212, %v443, 0
    %v1445 = vsel %vm1212, %v743, 0
    %1447 = vmatprep.subr.mxu0 0.0
    %1448 = vmatpush1.xpose.msra.mxu0 %v1445
    %1449 = vmatprep.subr.mxu0 0.0
    %1450 = vmatpush1.xpose.msra.mxu0 0.0
    %1451 = vmatprep.subr.mxu0 0.0
    %1452 = vmatpush1.xpose.msra.mxu0 0.0
    %1453 = vmatprep.subr.mxu0 0.0
    %1454 = vmatpush1.xpose.msra.mxu0 0.0
    %1455 = vmatprep.subr.mxu0 0.0
    %1456 = vmatpush1.xpose.msra.mxu0 0.0
    %1457 = vmatprep.subr.mxu0 0.0
    %1458 = vmatpush1.xpose.msra.mxu0 0.0
    %1459 = vmatprep.subr.mxu0 0.0
    %1460 = vmatpush1.xpose.msra.mxu0 0.0
    %1461 = vmatprep.subr.mxu0 0.0
    %1462 = vmatpush1.xpose.msra.mxu0 0.0
    %1463 = vmatprep.subr.mxu0 0.0
    %1464 = vmatpush1.xpose.msra.mxu0 0.0
    %1465 = vmatprep.subr.mxu0 0.0
    %1466 = vmatpush1.xpose.msra.mxu0 0.0
    %1467 = vmatprep.subr.mxu0 0.0
    %1468 = vmatpush1.xpose.msra.mxu0 0.0
    %1469 = vmatprep.subr.mxu0 0.0
    %1470 = vmatpush1.xpose.msra.mxu0 0.0
    %1471 = vmatprep.subr.mxu0 0.0
    %1472 = vmatpush1.xpose.msra.mxu0 0.0
    %1473 = vmatprep.subr.mxu0 0.0
    %1474 = vmatpush1.xpose.msra.mxu0 0.0
    %1475 = vmatprep.subr.mxu0 0.0
    %1476 = vmatpush1.xpose.msra.mxu0 0.0
    %1477 = vmatprep.subr.mxu0 0.0
    %1478 = vmatpush1.xpose.msra.mxu0 0.0
    %1479 = vmatprep.subr.mxu0 0.0
    %1480 = vmatpush1.xpose.msra.mxu0 0.0
    %1481 = vmatprep.subr.mxu0 0.0
    %1482 = vmatpush1.xpose.msra.mxu0 0.0
    %1483 = vmatprep.subr.mxu0 0.0
    %1484 = vmatpush1.xpose.msra.mxu0 0.0
    %1485 = vmatprep.subr.mxu0 0.0
    %1486 = vmatpush1.xpose.msra.mxu0 0.0
    %1487 = vmatprep.subr.mxu0 0.0
    %1488 = vmatpush1.xpose.msra.mxu0 0.0
    %1489 = vmatprep.subr.mxu0 0.0
    %1490 = vmatpush1.xpose.msra.mxu0 0.0
    %1491 = vmatprep.subr.mxu0 0.0
    %1492 = vmatpush1.xpose.msra.mxu0 0.0
    %1493 = vmatprep.subr.mxu0 0.0
    %1494 = vmatpush1.xpose.msra.mxu0 0.0
    %1495 = vmatprep.subr.mxu0 0.0
    %1496 = vmatpush1.xpose.msra.mxu0 0.0
    %1497 = vmatprep.subr.mxu0 0.0
    %1498 = vmatpush1.xpose.msra.mxu0 0.0
    %1499 = vmatprep.subr.mxu0 0.0
    %1500 = vmatpush1.xpose.msra.mxu0 0.0
    %1501 = vmatprep.subr.mxu0 0.0
    %1502 = vmatpush1.xpose.msra.mxu0 0.0
    %1503 = vmatprep.subr.mxu0 0.0
    %1504 = vmatpush1.xpose.msra.mxu0 0.0
    %1505 = vmatprep.subr.mxu0 0.0
    %1506 = vmatpush1.xpose.msra.mxu0 0.0
    %1507 = vmatprep.subr.mxu0 0.0
    %1508 = vmatpush1.xpose.msra.mxu0 0.0
    %1509 = vmatprep.subr.mxu0 0.0
    %1510 = vmatpush1.xpose.msra.mxu0 0.0
    %1511 = vmatprep.mubr.f32.mxu0 0.0
    %1512 = vmatmul.mubr.f32.gmra.mrb[0].mxu0 %v1442
    %v1513 = vpop.f32.mrb[0].mxu0
    %v1514 = vadd.f32 0.0, %v1513
    %v1515 = vpop.f32.mrb[0].mxu0
    %1516 = vdwg.mxu0
    %v1518 = vsel %vm1212, %v513, 0
    %v1521 = vsel %vm1212, %v813, 0
    %1523 = vmatprep.subr.mxu0 0.0
    %1524 = vmatpush1.xpose.msra.mxu0 %v1521
    %1525 = vmatprep.subr.mxu0 0.0
    %1526 = vmatpush1.xpose.msra.mxu0 0.0
    %1527 = vmatprep.subr.mxu0 0.0
    %1528 = vmatpush1.xpose.msra.mxu0 0.0
    %1529 = vmatprep.subr.mxu0 0.0
    %1530 = vmatpush1.xpose.msra.mxu0 0.0
    %1531 = vmatprep.subr.mxu0 0.0
    %1532 = vmatpush1.xpose.msra.mxu0 0.0
    %1533 = vmatprep.subr.mxu0 0.0
    %1534 = vmatpush1.xpose.msra.mxu0 0.0
    %1535 = vmatprep.subr.mxu0 0.0
    %1536 = vmatpush1.xpose.msra.mxu0 0.0
    %1537 = vmatprep.subr.mxu0 0.0
    %1538 = vmatpush1.xpose.msra.mxu0 0.0
    %1539 = vmatprep.subr.mxu0 0.0
    %1540 = vmatpush1.xpose.msra.mxu0 0.0
    %1541 = vmatprep.subr.mxu0 0.0
    %1542 = vmatpush1.xpose.msra.mxu0 0.0
    %1543 = vmatprep.subr.mxu0 0.0
    %1544 = vmatpush1.xpose.msra.mxu0 0.0
    %1545 = vmatprep.subr.mxu0 0.0
    %1546 = vmatpush1.xpose.msra.mxu0 0.0
    %1547 = vmatprep.subr.mxu0 0.0
    %1548 = vmatpush1.xpose.msra.mxu0 0.0
    %1549 = vmatprep.subr.mxu0 0.0
    %1550 = vmatpush1.xpose.msra.mxu0 0.0
    %1551 = vmatprep.subr.mxu0 0.0
    %1552 = vmatpush1.xpose.msra.mxu0 0.0
    %1553 = vmatprep.subr.mxu0 0.0
    %1554 = vmatpush1.xpose.msra.mxu0 0.0
    %1555 = vmatprep.subr.mxu0 0.0
    %1556 = vmatpush1.xpose.msra.mxu0 0.0
    %1557 = vmatprep.subr.mxu0 0.0
    %1558 = vmatpush1.xpose.msra.mxu0 0.0
    %1559 = vmatprep.subr.mxu0 0.0
    %1560 = vmatpush1.xpose.msra.mxu0 0.0
    %1561 = vmatprep.subr.mxu0 0.0
    %1562 = vmatpush1.xpose.msra.mxu0 0.0
    %1563 = vmatprep.subr.mxu0 0.0
    %1564 = vmatpush1.xpose.msra.mxu0 0.0
    %1565 = vmatprep.subr.mxu0 0.0
    %1566 = vmatpush1.xpose.msra.mxu0 0.0
    %1567 = vmatprep.subr.mxu0 0.0
    %1568 = vmatpush1.xpose.msra.mxu0 0.0
    %1569 = vmatprep.subr.mxu0 0.0
    %1570 = vmatpush1.xpose.msra.mxu0 0.0
    %1571 = vmatprep.subr.mxu0 0.0
    %1572 = vmatpush1.xpose.msra.mxu0 0.0
    %1573 = vmatprep.subr.mxu0 0.0
    %1574 = vmatpush1.xpose.msra.mxu0 0.0
    %1575 = vmatprep.subr.mxu0 0.0
    %1576 = vmatpush1.xpose.msra.mxu0 0.0
    %1577 = vmatprep.subr.mxu0 0.0
    %1578 = vmatpush1.xpose.msra.mxu0 0.0
    %1579 = vmatprep.subr.mxu0 0.0
    %1580 = vmatpush1.xpose.msra.mxu0 0.0
    %1581 = vmatprep.subr.mxu0 0.0
    %1582 = vmatpush1.xpose.msra.mxu0 0.0
    %1583 = vmatprep.subr.mxu0 0.0
    %1584 = vmatpush1.xpose.msra.mxu0 0.0
    %1585 = vmatprep.subr.mxu0 0.0
    %1586 = vmatpush1.xpose.msra.mxu0 0.0
    %1587 = vmatprep.mubr.f32.mxu0 0.0
    %1588 = vmatmul.mubr.f32.gmra.mrb[0].mxu0 %v1518
    %v1589 = vpop.f32.mrb[0].mxu0
    %v1590 = vadd.f32 0.0, %v1589
    %v1591 = vpop.f32.mrb[0].mxu0
    %1592 = vdwg.mxu0
    %v1594 = vsel %vm1212, %v518, 0
    %v1597 = vsel %vm1212, %v818, 0
    %1599 = vmatprep.subr.mxu0 0.0
    %1600 = vmatpush1.xpose.msra.mxu0 %v1597
    %1601 = vmatprep.subr.mxu0 0.0
    %1602 = vmatpush1.xpose.msra.mxu0 0.0
    %1603 = vmatprep.subr.mxu0 0.0
    %1604 = vmatpush1.xpose.msra.mxu0 0.0
    %1605 = vmatprep.subr.mxu0 0.0
    %1606 = vmatpush1.xpose.msra.mxu0 0.0
    %1607 = vmatprep.subr.mxu0 0.0
    %1608 = vmatpush1.xpose.msra.mxu0 0.0
    %1609 = vmatprep.subr.mxu0 0.0
    %1610 = vmatpush1.xpose.msra.mxu0 0.0
    %1611 = vmatprep.subr.mxu0 0.0
    %1612 = vmatpush1.xpose.msra.mxu0 0.0
    %1613 = vmatprep.subr.mxu0 0.0
    %1614 = vmatpush1.xpose.msra.mxu0 0.0
    %1615 = vmatprep.subr.mxu0 0.0
    %1616 = vmatpush1.xpose.msra.mxu0 0.0
    %1617 = vmatprep.subr.mxu0 0.0
    %1618 = vmatpush1.xpose.msra.mxu0 0.0
    %1619 = vmatprep.subr.mxu0 0.0
    %1620 = vmatpush1.xpose.msra.mxu0 0.0
    %1621 = vmatprep.subr.mxu0 0.0
    %1622 = vmatpush1.xpose.msra.mxu0 0.0
    %1623 = vmatprep.subr.mxu0 0.0
    %1624 = vmatpush1.xpose.msra.mxu0 0.0
    %1625 = vmatprep.subr.mxu0 0.0
    %1626 = vmatpush1.xpose.msra.mxu0 0.0
    %1627 = vmatprep.subr.mxu0 0.0
    %1628 = vmatpush1.xpose.msra.mxu0 0.0
    %1629 = vmatprep.subr.mxu0 0.0
    %1630 = vmatpush1.xpose.msra.mxu0 0.0
    %1631 = vmatprep.subr.mxu0 0.0
    %1632 = vmatpush1.xpose.msra.mxu0 0.0
    %1633 = vmatprep.subr.mxu0 0.0
    %1634 = vmatpush1.xpose.msra.mxu0 0.0
    %1635 = vmatprep.subr.mxu0 0.0
    %1636 = vmatpush1.xpose.msra.mxu0 0.0
    %1637 = vmatprep.subr.mxu0 0.0
    %1638 = vmatpush1.xpose.msra.mxu0 0.0
    %1639 = vmatprep.subr.mxu0 0.0
    %1640 = vmatpush1.xpose.msra.mxu0 0.0
    %1641 = vmatprep.subr.mxu0 0.0
    %1642 = vmatpush1.xpose.msra.mxu0 0.0
    %1643 = vmatprep.subr.mxu0 0.0
    %1644 = vmatpush1.xpose.msra.mxu0 0.0
    %1645 = vmatprep.subr.mxu0 0.0
    %1646 = vmatpush1.xpose.msra.mxu0 0.0
    %1647 = vmatprep.subr.mxu0 0.0
    %1648 = vmatpush1.xpose.msra.mxu0 0.0
    %1649 = vmatprep.subr.mxu0 0.0
    %1650 = vmatpush1.xpose.msra.mxu0 0.0
    %1651 = vmatprep.subr.mxu0 0.0
    %1652 = vmatpush1.xpose.msra.mxu0 0.0
    %1653 = vmatprep.subr.mxu0 0.0
    %1654 = vmatpush1.xpose.msra.mxu0 0.0
    %1655 = vmatprep.subr.mxu0 0.0
    %1656 = vmatpush1.xpose.msra.mxu0 0.0
    %1657 = vmatprep.subr.mxu0 0.0
    %1658 = vmatpush1.xpose.msra.mxu0 0.0
    %1659 = vmatprep.subr.mxu0 0.0
    %1660 = vmatpush1.xpose.msra.mxu0 0.0
    %1661 = vmatprep.subr.mxu0 0.0
    %1662 = vmatpush1.xpose.msra.mxu0 0.0
    %1663 = vmatprep.mubr.f32.mxu0 0.0
    %1664 = vmatmul.mubr.f32.gmra.mrb[0].mxu0 %v1594
    %v1665 = vpop.f32.mrb[0].mxu0
    %v1666 = vadd.f32 0.0, %v1665
    %v1667 = vpop.f32.mrb[0].mxu0
    %1668 = vdwg.mxu0
    %v1670 = vsel %vm1212, %v588, 0
    %v1673 = vsel %vm1212, %v888, 0
    %1675 = vmatprep.subr.mxu0 0.0
    %1676 = vmatpush1.xpose.msra.mxu0 %v1673
    %1677 = vmatprep.subr.mxu0 0.0
    %1678 = vmatpush1.xpose.msra.mxu0 0.0
    %1679 = vmatprep.subr.mxu0 0.0
    %1680 = vmatpush1.xpose.msra.mxu0 0.0
    %1681 = vmatprep.subr.mxu0 0.0
    %1682 = vmatpush1.xpose.msra.mxu0 0.0
    %1683 = vmatprep.subr.mxu0 0.0
    %1684 = vmatpush1.xpose.msra.mxu0 0.0
    %1685 = vmatprep.subr.mxu0 0.0
    %1686 = vmatpush1.xpose.msra.mxu0 0.0
    %1687 = vmatprep.subr.mxu0 0.0
    %1688 = vmatpush1.xpose.msra.mxu0 0.0
    %1689 = vmatprep.subr.mxu0 0.0
    %1690 = vmatpush1.xpose.msra.mxu0 0.0
    %1691 = vmatprep.subr.mxu0 0.0
    %1692 = vmatpush1.xpose.msra.mxu0 0.0
    %1693 = vmatprep.subr.mxu0 0.0
    %1694 = vmatpush1.xpose.msra.mxu0 0.0
    %1695 = vmatprep.subr.mxu0 0.0
    %1696 = vmatpush1.xpose.msra.mxu0 0.0
    %1697 = vmatprep.subr.mxu0 0.0
    %1698 = vmatpush1.xpose.msra.mxu0 0.0
    %1699 = vmatprep.subr.mxu0 0.0
    %1700 = vmatpush1.xpose.msra.mxu0 0.0
    %1701 = vmatprep.subr.mxu0 0.0
    %1702 = vmatpush1.xpose.msra.mxu0 0.0
    %1703 = vmatprep.subr.mxu0 0.0
    %1704 = vmatpush1.xpose.msra.mxu0 0.0
    %1705 = vmatprep.subr.mxu0 0.0
    %1706 = vmatpush1.xpose.msra.mxu0 0.0
    %1707 = vmatprep.subr.mxu0 0.0
    %1708 = vmatpush1.xpose.msra.mxu0 0.0
    %1709 = vmatprep.subr.mxu0 0.0
    %1710 = vmatpush1.xpose.msra.mxu0 0.0
    %1711 = vmatprep.subr.mxu0 0.0
    %1712 = vmatpush1.xpose.msra.mxu0 0.0
    %1713 = vmatprep.subr.mxu0 0.0
    %1714 = vmatpush1.xpose.msra.mxu0 0.0
    %1715 = vmatprep.subr.mxu0 0.0
    %1716 = vmatpush1.xpose.msra.mxu0 0.0
    %1717 = vmatprep.subr.mxu0 0.0
    %1718 = vmatpush1.xpose.msra.mxu0 0.0
    %1719 = vmatprep.subr.mxu0 0.0
    %1720 = vmatpush1.xpose.msra.mxu0 0.0
    %1721 = vmatprep.subr.mxu0 0.0
    %1722 = vmatpush1.xpose.msra.mxu0 0.0
    %1723 = vmatprep.subr.mxu0 0.0
    %1724 = vmatpush1.xpose.msra.mxu0 0.0
    %1725 = vmatprep.subr.mxu0 0.0
    %1726 = vmatpush1.xpose.msra.mxu0 0.0
    %1727 = vmatprep.subr.mxu0 0.0
    %1728 = vmatpush1.xpose.msra.mxu0 0.0
    %1729 = vmatprep.subr.mxu0 0.0
    %1730 = vmatpush1.xpose.msra.mxu0 0.0
    %1731 = vmatprep.subr.mxu0 0.0
    %1732 = vmatpush1.xpose.msra.mxu0 0.0
    %1733 = vmatprep.subr.mxu0 0.0
    %1734 = vmatpush1.xpose.msra.mxu0 0.0
    %1735 = vmatprep.subr.mxu0 0.0
    %1736 = vmatpush1.xpose.msra.mxu0 0.0
    %1737 = vmatprep.subr.mxu0 0.0
    %1738 = vmatpush1.xpose.msra.mxu0 0.0
    %1739 = vmatprep.mubr.f32.mxu0 0.0
    %1740 = vmatmul.mubr.f32.gmra.mrb[0].mxu0 %v1670
    %v1741 = vpop.f32.mrb[0].mxu0
    %v1742 = vadd.f32 0.0, %v1741
    %v1743 = vpop.f32.mrb[0].mxu0
    %1744 = vdwg.mxu0
    %v1746 = vsel %vm1212, %v593, 0
    %v1749 = vsel %vm1212, %v893, 0
    %1751 = vmatprep.subr.mxu0 0.0
    %1752 = vmatpush1.xpose.msra.mxu0 %v1749
    %1753 = vmatprep.subr.mxu0 0.0
    %1754 = vmatpush1.xpose.msra.mxu0 0.0
    %1755 = vmatprep.subr.mxu0 0.0
    %1756 = vmatpush1.xpose.msra.mxu0 0.0
    %1757 = vmatprep.subr.mxu0 0.0
    %1758 = vmatpush1.xpose.msra.mxu0 0.0
    %1759 = vmatprep.subr.mxu0 0.0
    %1760 = vmatpush1.xpose.msra.mxu0 0.0
    %1761 = vmatprep.subr.mxu0 0.0
    %1762 = vmatpush1.xpose.msra.mxu0 0.0
    %1763 = vmatprep.subr.mxu0 0.0
    %1764 = vmatpush1.xpose.msra.mxu0 0.0
    %1765 = vmatprep.subr.mxu0 0.0
    %1766 = vmatpush1.xpose.msra.mxu0 0.0
    %1767 = vmatprep.subr.mxu0 0.0
    %1768 = vmatpush1.xpose.msra.mxu0 0.0
    %1769 = vmatprep.subr.mxu0 0.0
    %1770 = vmatpush1.xpose.msra.mxu0 0.0
    %1771 = vmatprep.subr.mxu0 0.0
    %1772 = vmatpush1.xpose.msra.mxu0 0.0
    %1773 = vmatprep.subr.mxu0 0.0
    %1774 = vmatpush1.xpose.msra.mxu0 0.0
    %1775 = vmatprep.subr.mxu0 0.0
    %1776 = vmatpush1.xpose.msra.mxu0 0.0
    %1777 = vmatprep.subr.mxu0 0.0
    %1778 = vmatpush1.xpose.msra.mxu0 0.0
    %1779 = vmatprep.subr.mxu0 0.0
    %1780 = vmatpush1.xpose.msra.mxu0 0.0
    %1781 = vmatprep.subr.mxu0 0.0
    %1782 = vmatpush1.xpose.msra.mxu0 0.0
    %1783 = vmatprep.subr.mxu0 0.0
    %1784 = vmatpush1.xpose.msra.mxu0 0.0
    %1785 = vmatprep.subr.mxu0 0.0
    %1786 = vmatpush1.xpose.msra.mxu0 0.0
    %1787 = vmatprep.subr.mxu0 0.0
    %1788 = vmatpush1.xpose.msra.mxu0 0.0
    %1789 = vmatprep.subr.mxu0 0.0
    %1790 = vmatpush1.xpose.msra.mxu0 0.0
    %1791 = vmatprep.subr.mxu0 0.0
    %1792 = vmatpush1.xpose.msra.mxu0 0.0
    %1793 = vmatprep.subr.mxu0 0.0
    %1794 = vmatpush1.xpose.msra.mxu0 0.0
    %1795 = vmatprep.subr.mxu0 0.0
    %1796 = vmatpush1.xpose.msra.mxu0 0.0
    %1797 = vmatprep.subr.mxu0 0.0
    %1798 = vmatpush1.xpose.msra.mxu0 0.0
    %1799 = vmatprep.subr.mxu0 0.0
    %1800 = vmatpush1.xpose.msra.mxu0 0.0
    %1801 = vmatprep.subr.mxu0 0.0
    %1802 = vmatpush1.xpose.msra.mxu0 0.0
    %1803 = vmatprep.subr.mxu0 0.0
    %1804 = vmatpush1.xpose.msra.mxu0 0.0
    %1805 = vmatprep.subr.mxu0 0.0
    %1806 = vmatpush1.xpose.msra.mxu0 0.0
    %1807 = vmatprep.subr.mxu0 0.0
    %1808 = vmatpush1.xpose.msra.mxu0 0.0
    %1809 = vmatprep.subr.mxu0 0.0
    %1810 = vmatpush1.xpose.msra.mxu0 0.0
    %1811 = vmatprep.subr.mxu0 0.0
    %1812 = vmatpush1.xpose.msra.mxu0 0.0
    %1813 = vmatprep.subr.mxu0 0.0
    %1814 = vmatpush1.xpose.msra.mxu0 0.0
    %1815 = vmatprep.mubr.f32.mxu0 0.0
    %1816 = vmatmul.mubr.f32.gmra.mrb[0].mxu0 %v1746
    %v1817 = vpop.f32.mrb[0].mxu0
    %v1818 = vadd.f32 0.0, %v1817
    %v1819 = vpop.f32.mrb[0].mxu0
    %1820 = vdwg.mxu0
    %v1821 = vsel %vm1212, %v1286, -inf
    %1822 = vmax.xlane.f32.xlu0 %v1821
    %v1823 = vpop.xlane.xlu0 %1822
    %v1824 = vsel %vm1212, %v1362, -inf
    %1825 = vmax.xlane.f32.xlu0 %v1824
    %v1826 = vpop.xlane.xlu0 %1825
    %v1827 = vsel %vm1212, %v1438, -inf
    %1828 = vmax.xlane.f32.xlu0 %v1827
    %v1829 = vpop.xlane.xlu0 %1828
    %v1830 = vsel %vm1212, %v1514, -inf
    %1831 = vmax.xlane.f32.xlu0 %v1830
    %v1832 = vpop.xlane.xlu0 %1831
    %v1833 = vsel %vm1212, %v1590, -inf
    %1834 = vmax.xlane.f32.xlu0 %v1833
    %v1835 = vpop.xlane.xlu0 %1834
    %v1836 = vsel %vm1212, %v1666, -inf
    %1837 = vmax.xlane.f32.xlu0 %v1836
    %v1838 = vpop.xlane.xlu0 %1837
    %v1839 = vsel %vm1212, %v1742, -inf
    %1840 = vmax.xlane.f32.xlu0 %v1839
    %v1841 = vpop.xlane.xlu0 %1840
    %v1842 = vsel %vm1212, %v1818, -inf
    %1843 = vmax.xlane.f32.xlu0 %v1842
    %v1844 = vpop.xlane.xlu0 %1843
    %v1845 = vsub.f32 %v1286, %v1823
    %v1846 = vsub.f32 %v1362, %v1826
    %v1847 = vsub.f32 %v1438, %v1829
    %v1848 = vsub.f32 %v1514, %v1832
    %v1849 = vsub.f32 %v1590, %v1835
    %v1850 = vsub.f32 %v1666, %v1838
    %v1851 = vsub.f32 %v1742, %v1841
    %v1852 = vsub.f32 %v1818, %v1844
    %v1853 = vmul.f32 %v1845, 1.442695
    %v1854 = vpow.pop %v1853
    %v1855 = vmul.f32 %v1846, 1.442695
    %v1856 = vpow.pop %v1855
    %v1857 = vmul.f32 %v1847, 1.442695
    %v1858 = vpow.pop %v1857
    %v1859 = vmul.f32 %v1848, 1.442695
    %v1860 = vpow.pop %v1859
    %v1861 = vmul.f32 %v1849, 1.442695
    %v1862 = vpow.pop %v1861
    %v1863 = vmul.f32 %v1850, 1.442695
    %v1864 = vpow.pop %v1863
    %v1865 = vmul.f32 %v1851, 1.442695
    %v1866 = vpow.pop %v1865
    %v1867 = vmul.f32 %v1852, 1.442695
    %v1868 = vpow.pop %v1867
    %v1869 = vsel %vm1212, %v1854, 0.0
    %1870 = vadd.xlane.f32.xlu0 %v1869
    %v1871 = vpop.xlane.xlu0 %1870
    %v1872 = vsel %vm1212, %v1856, 0.0
    %1873 = vadd.xlane.f32.xlu0 %v1872
    %v1874 = vpop.xlane.xlu0 %1873
    %v1875 = vsel %vm1212, %v1858, 0.0
    %1876 = vadd.xlane.f32.xlu0 %v1875
    %v1877 = vpop.xlane.xlu0 %1876
    %v1878 = vsel %vm1212, %v1860, 0.0
    %1879 = vadd.xlane.f32.xlu0 %v1878
    %v1880 = vpop.xlane.xlu0 %1879
    %v1881 = vsel %vm1212, %v1862, 0.0
    %1882 = vadd.xlane.f32.xlu0 %v1881
    %v1883 = vpop.xlane.xlu0 %1882
    %v1884 = vsel %vm1212, %v1864, 0.0
    %1885 = vadd.xlane.f32.xlu0 %v1884
    %v1886 = vpop.xlane.xlu0 %1885
    %v1887 = vsel %vm1212, %v1866, 0.0
    %1888 = vadd.xlane.f32.xlu0 %v1887
    %v1889 = vpop.xlane.xlu0 %1888
    %v1890 = vsel %vm1212, %v1868, 0.0
    %1891 = vadd.xlane.f32.xlu0 %v1890
    %v1892 = vpop.xlane.xlu0 %1891
    %v1893 = vrcp.pop %v1871
    %v1894 = vrcp.pop %v1874
    %v1895 = vrcp.pop %v1877
    %v1896 = vrcp.pop %v1880
    %v1897 = vrcp.pop %v1883
    %v1898 = vrcp.pop %v1886
    %v1899 = vrcp.pop %v1889
    %v1900 = vrcp.pop %v1892
    %v1901 = vmul.f32 %v1854, %v1893
    %v1902 = vmul.f32 %v1856, %v1894
    %v1903 = vmul.f32 %v1858, %v1895
    %v1904 = vmul.f32 %v1860, %v1896
    %v1905 = vmul.f32 %v1862, %v1897
    %v1906 = vmul.f32 %v1864, %v1898
    %v1907 = vmul.f32 %v1866, %v1899
    %v1908 = vmul.f32 %v1868, %v1900
    %v1910 = vsel %vm1212, %v1901, 0
    %1912 = vmatprep.subr.mxu0 0.0
    %1913 = vmatpush1.msra.mxu0 %v979
    %1914 = vmatprep.subr.mxu0 0.0
    %1915 = vmatpush1.msra.mxu0 0.0
    %1916 = vmatprep.subr.mxu0 0.0
    %1917 = vmatpush1.msra.mxu0 0.0
    %1918 = vmatprep.subr.mxu0 0.0
    %1919 = vmatpush1.msra.mxu0 0.0
    %1920 = vmatprep.subr.mxu0 0.0
    %1921 = vmatpush1.msra.mxu0 0.0
    %1922 = vmatprep.subr.mxu0 0.0
    %1923 = vmatpush1.msra.mxu0 0.0
    %1924 = vmatprep.subr.mxu0 0.0
    %1925 = vmatpush1.msra.mxu0 0.0
    %1926 = vmatprep.subr.mxu0 0.0
    %1927 = vmatpush1.msra.mxu0 0.0
    %1928 = vmatprep.subr.mxu0 0.0
    %1929 = vmatpush1.msra.mxu0 0.0
    %1930 = vmatprep.subr.mxu0 0.0
    %1931 = vmatpush1.msra.mxu0 0.0
    %1932 = vmatprep.subr.mxu0 0.0
    %1933 = vmatpush1.msra.mxu0 0.0
    %1934 = vmatprep.subr.mxu0 0.0
    %1935 = vmatpush1.msra.mxu0 0.0
    %1936 = vmatprep.subr.mxu0 0.0
    %1937 = vmatpush1.msra.mxu0 0.0
    %1938 = vmatprep.subr.mxu0 0.0
    %1939 = vmatpush1.msra.mxu0 0.0
    %1940 = vmatprep.subr.mxu0 0.0
    %1941 = vmatpush1.msra.mxu0 0.0
    %1942 = vmatprep.subr.mxu0 0.0
    %1943 = vmatpush1.msra.mxu0 0.0
    %1944 = vmatprep.subr.mxu0 0.0
    %1945 = vmatpush1.msra.mxu0 0.0
    %1946 = vmatprep.subr.mxu0 0.0
    %1947 = vmatpush1.msra.mxu0 0.0
    %1948 = vmatprep.subr.mxu0 0.0
    %1949 = vmatpush1.msra.mxu0 0.0
    %1950 = vmatprep.subr.mxu0 0.0
    %1951 = vmatpush1.msra.mxu0 0.0
    %1952 = vmatprep.subr.mxu0 0.0
    %1953 = vmatpush1.msra.mxu0 0.0
    %1954 = vmatprep.subr.mxu0 0.0
    %1955 = vmatpush1.msra.mxu0 0.0
    %1956 = vmatprep.subr.mxu0 0.0
    %1957 = vmatpush1.msra.mxu0 0.0
    %1958 = vmatprep.subr.mxu0 0.0
    %1959 = vmatpush1.msra.mxu0 0.0
    %1960 = vmatprep.subr.mxu0 0.0
    %1961 = vmatpush1.msra.mxu0 0.0
    %1962 = vmatprep.subr.mxu0 0.0
    %1963 = vmatpush1.msra.mxu0 0.0
    %1964 = vmatprep.subr.mxu0 0.0
    %1965 = vmatpush1.msra.mxu0 0.0
    %1966 = vmatprep.subr.mxu0 0.0
    %1967 = vmatpush1.msra.mxu0 0.0
    %1968 = vmatprep.subr.mxu0 0.0
    %1969 = vmatpush1.msra.mxu0 0.0
    %1970 = vmatprep.subr.mxu0 0.0
    %1971 = vmatpush1.msra.mxu0 0.0
    %1972 = vmatprep.subr.mxu0 0.0
    %1973 = vmatpush1.msra.mxu0 0.0
    %1974 = vmatprep.subr.mxu0 0.0
    %1975 = vmatpush1.msra.mxu0 0.0
    %1976 = vmatprep.mubr.f32.mxu0 0.0
    %1977 = vmatmul.mubr.f32.gmra.mrb[0].mxu0 %v1910
    %v1978 = vpop.f32.mrb[0].mxu0
    %v1979 = vadd.f32 0.0, %v1978
    %v1980 = vpop.f32.mrb[0].mxu0
    %1981 = vdwg.mxu0
    %v1983 = vsel %vm1212, %v1902, 0
    %1985 = vmatprep.subr.mxu0 0.0
    %1986 = vmatpush1.msra.mxu0 %v984
    %1987 = vmatprep.subr.mxu0 0.0
    %1988 = vmatpush1.msra.mxu0 0.0
    %1989 = vmatprep.subr.mxu0 0.0
    %1990 = vmatpush1.msra.mxu0 0.0
    %1991 = vmatprep.subr.mxu0 0.0
    %1992 = vmatpush1.msra.mxu0 0.0
    %1993 = vmatprep.subr.mxu0 0.0
    %1994 = vmatpush1.msra.mxu0 0.0
    %1995 = vmatprep.subr.mxu0 0.0
    %1996 = vmatpush1.msra.mxu0 0.0
    %1997 = vmatprep.subr.mxu0 0.0
    %1998 = vmatpush1.msra.mxu0 0.0
    %1999 = vmatprep.subr.mxu0 0.0
    %2000 = vmatpush1.msra.mxu0 0.0
    %2001 = vmatprep.subr.mxu0 0.0
    %2002 = vmatpush1.msra.mxu0 0.0
    %2003 = vmatprep.subr.mxu0 0.0
    %2004 = vmatpush1.msra.mxu0 0.0
    %2005 = vmatprep.subr.mxu0 0.0
    %2006 = vmatpush1.msra.mxu0 0.0
    %2007 = vmatprep.subr.mxu0 0.0
    %2008 = vmatpush1.msra.mxu0 0.0
    %2009 = vmatprep.subr.mxu0 0.0
    %2010 = vmatpush1.msra.mxu0 0.0
    %2011 = vmatprep.subr.mxu0 0.0
    %2012 = vmatpush1.msra.mxu0 0.0
    %2013 = vmatprep.subr.mxu0 0.0
    %2014 = vmatpush1.msra.mxu0 0.0
    %2015 = vmatprep.subr.mxu0 0.0
    %2016 = vmatpush1.msra.mxu0 0.0
    %2017 = vmatprep.subr.mxu0 0.0
    %2018 = vmatpush1.msra.mxu0 0.0
    %2019 = vmatprep.subr.mxu0 0.0
    %2020 = vmatpush1.msra.mxu0 0.0
    %2021 = vmatprep.subr.mxu0 0.0
    %2022 = vmatpush1.msra.mxu0 0.0
    %2023 = vmatprep.subr.mxu0 0.0
    %2024 = vmatpush1.msra.mxu0 0.0
    %2025 = vmatprep.subr.mxu0 0.0
    %2026 = vmatpush1.msra.mxu0 0.0
    %2027 = vmatprep.subr.mxu0 0.0
    %2028 = vmatpush1.msra.mxu0 0.0
    %2029 = vmatprep.subr.mxu0 0.0
    %2030 = vmatpush1.msra.mxu0 0.0
    %2031 = vmatprep.subr.mxu0 0.0
    %2032 = vmatpush1.msra.mxu0 0.0
    %2033 = vmatprep.subr.mxu0 0.0
    %2034 = vmatpush1.msra.mxu0 0.0
    %2035 = vmatprep.subr.mxu0 0.0
    %2036 = vmatpush1.msra.mxu0 0.0
    %2037 = vmatprep.subr.mxu0 0.0
    %2038 = vmatpush1.msra.mxu0 0.0
    %2039 = vmatprep.subr.mxu0 0.0
    %2040 = vmatpush1.msra.mxu0 0.0
    %2041 = vmatprep.subr.mxu0 0.0
    %2042 = vmatpush1.msra.mxu0 0.0
    %2043 = vmatprep.subr.mxu0 0.0
    %2044 = vmatpush1.msra.mxu0 0.0
    %2045 = vmatprep.subr.mxu0 0.0
    %2046 = vmatpush1.msra.mxu0 0.0
    %2047 = vmatprep.subr.mxu0 0.0
    %2048 = vmatpush1.msra.mxu0 0.0
    %2049 = vmatprep.mubr.f32.mxu0 0.0
    %2050 = vmatmul.mubr.f32.gmra.mrb[0].mxu0 %v1983
    %v2051 = vpop.f32.mrb[0].mxu0
    %v2052 = vadd.f32 0.0, %v2051
    %v2053 = vpop.f32.mrb[0].mxu0
    %2054 = vdwg.mxu0
    %v2056 = vsel %vm1212, %v1903, 0
    %2058 = vmatprep.subr.mxu0 0.0
    %2059 = vmatpush1.msra.mxu0 %v1054
    %2060 = vmatprep.subr.mxu0 0.0
    %2061 = vmatpush1.msra.mxu0 0.0
    %2062 = vmatprep.subr.mxu0 0.0
    %2063 = vmatpush1.msra.mxu0 0.0
    %2064 = vmatprep.subr.mxu0 0.0
    %2065 = vmatpush1.msra.mxu0 0.0
    %2066 = vmatprep.subr.mxu0 0.0
    %2067 = vmatpush1.msra.mxu0 0.0
    %2068 = vmatprep.subr.mxu0 0.0
    %2069 = vmatpush1.msra.mxu0 0.0
    %2070 = vmatprep.subr.mxu0 0.0
    %2071 = vmatpush1.msra.mxu0 0.0
    %2072 = vmatprep.subr.mxu0 0.0
    %2073 = vmatpush1.msra.mxu0 0.0
    %2074 = vmatprep.subr.mxu0 0.0
    %2075 = vmatpush1.msra.mxu0 0.0
    %2076 = vmatprep.subr.mxu0 0.0
    %2077 = vmatpush1.msra.mxu0 0.0
    %2078 = vmatprep.subr.mxu0 0.0
    %2079 = vmatpush1.msra.mxu0 0.0
    %2080 = vmatprep.subr.mxu0 0.0
    %2081 = vmatpush1.msra.mxu0 0.0
    %2082 = vmatprep.subr.mxu0 0.0
    %2083 = vmatpush1.msra.mxu0 0.0
    %2084 = vmatprep.subr.mxu0 0.0
    %2085 = vmatpush1.msra.mxu0 0.0
    %2086 = vmatprep.subr.mxu0 0.0
    %2087 = vmatpush1.msra.mxu0 0.0
    %2088 = vmatprep.subr.mxu0 0.0
    %2089 = vmatpush1.msra.mxu0 0.0
    %2090 = vmatprep.subr.mxu0 0.0
    %2091 = vmatpush1.msra.mxu0 0.0
    %2092 = vmatprep.subr.mxu0 0.0
    %2093 = vmatpush1.msra.mxu0 0.0
    %2094 = vmatprep.subr.mxu0 0.0
    %2095 = vmatpush1.msra.mxu0 0.0
    %2096 = vmatprep.subr.mxu0 0.0
    %2097 = vmatpush1.msra.mxu0 0.0
    %2098 = vmatprep.subr.mxu0 0.0
    %2099 = vmatpush1.msra.mxu0 0.0
    %2100 = vmatprep.subr.mxu0 0.0
    %2101 = vmatpush1.msra.mxu0 0.0
    %2102 = vmatprep.subr.mxu0 0.0
    %2103 = vmatpush1.msra.mxu0 0.0
    %2104 = vmatprep.subr.mxu0 0.0
    %2105 = vmatpush1.msra.mxu0 0.0
    %2106 = vmatprep.subr.mxu0 0.0
    %2107 = vmatpush1.msra.mxu0 0.0
    %2108 = vmatprep.subr.mxu0 0.0
    %2109 = vmatpush1.msra.mxu0 0.0
    %2110 = vmatprep.subr.mxu0 0.0
    %2111 = vmatpush1.msra.mxu0 0.0
    %2112 = vmatprep.subr.mxu0 0.0
    %2113 = vmatpush1.msra.mxu0 0.0
    %2114 = vmatprep.subr.mxu0 0.0
    %2115 = vmatpush1.msra.mxu0 0.0
    %2116 = vmatprep.subr.mxu0 0.0
    %2117 = vmatpush1.msra.mxu0 0.0
    %2118 = vmatprep.subr.mxu0 0.0
    %2119 = vmatpush1.msra.mxu0 0.0
    %2120 = vmatprep.subr.mxu0 0.0
    %2121 = vmatpush1.msra.mxu0 0.0
    %2122 = vmatprep.mubr.f32.mxu0 0.0
    %2123 = vmatmul.mubr.f32.gmra.mrb[0].mxu0 %v2056
    %v2124 = vpop.f32.mrb[0].mxu0
    %v2125 = vadd.f32 0.0, %v2124
    %v2126 = vpop.f32.mrb[0].mxu0
    %2127 = vdwg.mxu0
    %v2129 = vsel %vm1212, %v1904, 0
    %2131 = vmatprep.subr.mxu0 0.0
    %2132 = vmatpush1.msra.mxu0 %v1059
    %2133 = vmatprep.subr.mxu0 0.0
    %2134 = vmatpush1.msra.mxu0 0.0
    %2135 = vmatprep.subr.mxu0 0.0
    %2136 = vmatpush1.msra.mxu0 0.0
    %2137 = vmatprep.subr.mxu0 0.0
    %2138 = vmatpush1.msra.mxu0 0.0
    %2139 = vmatprep.subr.mxu0 0.0
    %2140 = vmatpush1.msra.mxu0 0.0
    %2141 = vmatprep.subr.mxu0 0.0
    %2142 = vmatpush1.msra.mxu0 0.0
    %2143 = vmatprep.subr.mxu0 0.0
    %2144 = vmatpush1.msra.mxu0 0.0
    %2145 = vmatprep.subr.mxu0 0.0
    %2146 = vmatpush1.msra.mxu0 0.0
    %2147 = vmatprep.subr.mxu0 0.0
    %2148 = vmatpush1.msra.mxu0 0.0
    %2149 = vmatprep.subr.mxu0 0.0
    %2150 = vmatpush1.msra.mxu0 0.0
    %2151 = vmatprep.subr.mxu0 0.0
    %2152 = vmatpush1.msra.mxu0 0.0
    %2153 = vmatprep.subr.mxu0 0.0
    %2154 = vmatpush1.msra.mxu0 0.0
    %2155 = vmatprep.subr.mxu0 0.0
    %2156 = vmatpush1.msra.mxu0 0.0
    %2157 = vmatprep.subr.mxu0 0.0
    %2158 = vmatpush1.msra.mxu0 0.0
    %2159 = vmatprep.subr.mxu0 0.0
    %2160 = vmatpush1.msra.mxu0 0.0
    %2161 = vmatprep.subr.mxu0 0.0
    %2162 = vmatpush1.msra.mxu0 0.0
    %2163 = vmatprep.subr.mxu0 0.0
    %2164 = vmatpush1.msra.mxu0 0.0
    %2165 = vmatprep.subr.mxu0 0.0
    %2166 = vmatpush1.msra.mxu0 0.0
    %2167 = vmatprep.subr.mxu0 0.0
    %2168 = vmatpush1.msra.mxu0 0.0
    %2169 = vmatprep.subr.mxu0 0.0
    %2170 = vmatpush1.msra.mxu0 0.0
    %2171 = vmatprep.subr.mxu0 0.0
    %2172 = vmatpush1.msra.mxu0 0.0
    %2173 = vmatprep.subr.mxu0 0.0
    %2174 = vmatpush1.msra.mxu0 0.0
    %2175 = vmatprep.subr.mxu0 0.0
    %2176 = vmatpush1.msra.mxu0 0.0
    %2177 = vmatprep.subr.mxu0 0.0
    %2178 = vmatpush1.msra.mxu0 0.0
    %2179 = vmatprep.subr.mxu0 0.0
    %2180 = vmatpush1.msra.mxu0 0.0
    %2181 = vmatprep.subr.mxu0 0.0
    %2182 = vmatpush1.msra.mxu0 0.0
    %2183 = vmatprep.subr.mxu0 0.0
    %2184 = vmatpush1.msra.mxu0 0.0
    %2185 = vmatprep.subr.mxu0 0.0
    %2186 = vmatpush1.msra.mxu0 0.0
    %2187 = vmatprep.subr.mxu0 0.0
    %2188 = vmatpush1.msra.mxu0 0.0
    %2189 = vmatprep.subr.mxu0 0.0
    %2190 = vmatpush1.msra.mxu0 0.0
    %2191 = vmatprep.subr.mxu0 0.0
    %2192 = vmatpush1.msra.mxu0 0.0
    %2193 = vmatprep.subr.mxu0 0.0
    %2194 = vmatpush1.msra.mxu0 0.0
    %2195 = vmatprep.mubr.f32.mxu0 0.0
    %2196 = vmatmul.mubr.f32.gmra.mrb[0].mxu0 %v2129
    %v2197 = vpop.f32.mrb[0].mxu0
    %v2198 = vadd.f32 0.0, %v2197
    %v2199 = vpop.f32.mrb[0].mxu0
    %2200 = vdwg.mxu0
    %v2202 = vsel %vm1212, %v1905, 0
    %2204 = vmatprep.subr.mxu0 0.0
    %2205 = vmatpush1.msra.mxu0 %v1129
    %2206 = vmatprep.subr.mxu0 0.0
    %2207 = vmatpush1.msra.mxu0 0.0
    %2208 = vmatprep.subr.mxu0 0.0
    %2209 = vmatpush1.msra.mxu0 0.0
    %2210 = vmatprep.subr.mxu0 0.0
    %2211 = vmatpush1.msra.mxu0 0.0
    %2212 = vmatprep.subr.mxu0 0.0
    %2213 = vmatpush1.msra.mxu0 0.0
    %2214 = vmatprep.subr.mxu0 0.0
    %2215 = vmatpush1.msra.mxu0 0.0
    %2216 = vmatprep.subr.mxu0 0.0
    %2217 = vmatpush1.msra.mxu0 0.0
    %2218 = vmatprep.subr.mxu0 0.0
    %2219 = vmatpush1.msra.mxu0 0.0
    %2220 = vmatprep.subr.mxu0 0.0
    %2221 = vmatpush1.msra.mxu0 0.0
    %2222 = vmatprep.subr.mxu0 0.0
    %2223 = vmatpush1.msra.mxu0 0.0
    %2224 = vmatprep.subr.mxu0 0.0
    %2225 = vmatpush1.msra.mxu0 0.0
    %2226 = vmatprep.subr.mxu0 0.0
    %2227 = vmatpush1.msra.mxu0 0.0
    %2228 = vmatprep.subr.mxu0 0.0
    %2229 = vmatpush1.msra.mxu0 0.0
    %2230 = vmatprep.subr.mxu0 0.0
    %2231 = vmatpush1.msra.mxu0 0.0
    %2232 = vmatprep.subr.mxu0 0.0
    %2233 = vmatpush1.msra.mxu0 0.0
    %2234 = vmatprep.subr.mxu0 0.0
    %2235 = vmatpush1.msra.mxu0 0.0
    %2236 = vmatprep.subr.mxu0 0.0
    %2237 = vmatpush1.msra.mxu0 0.0
    %2238 = vmatprep.subr.mxu0 0.0
    %2239 = vmatpush1.msra.mxu0 0.0
    %2240 = vmatprep.subr.mxu0 0.0
    %2241 = vmatpush1.msra.mxu0 0.0
    %2242 = vmatprep.subr.mxu0 0.0
    %2243 = vmatpush1.msra.mxu0 0.0
    %2244 = vmatprep.subr.mxu0 0.0
    %2245 = vmatpush1.msra.mxu0 0.0
    %2246 = vmatprep.subr.mxu0 0.0
    %2247 = vmatpush1.msra.mxu0 0.0
    %2248 = vmatprep.subr.mxu0 0.0
    %2249 = vmatpush1.msra.mxu0 0.0
    %2250 = vmatprep.subr.mxu0 0.0
    %2251 = vmatpush1.msra.mxu0 0.0
    %2252 = vmatprep.subr.mxu0 0.0
    %2253 = vmatpush1.msra.mxu0 0.0
    %2254 = vmatprep.subr.mxu0 0.0
    %2255 = vmatpush1.msra.mxu0 0.0
    %2256 = vmatprep.subr.mxu0 0.0
    %2257 = vmatpush1.msra.mxu0 0.0
    %2258 = vmatprep.subr.mxu0 0.0
    %2259 = vmatpush1.msra.mxu0 0.0
    %2260 = vmatprep.subr.mxu0 0.0
    %2261 = vmatpush1.msra.mxu0 0.0
    %2262 = vmatprep.subr.mxu0 0.0
    %2263 = vmatpush1.msra.mxu0 0.0
    %2264 = vmatprep.subr.mxu0 0.0
    %2265 = vmatpush1.msra.mxu0 0.0
    %2266 = vmatprep.subr.mxu0 0.0
    %2267 = vmatpush1.msra.mxu0 0.0
    %2268 = vmatprep.mubr.f32.mxu0 0.0
    %2269 = vmatmul.mubr.f32.gmra.mrb[0].mxu0 %v2202
    %v2270 = vpop.f32.mrb[0].mxu0
    %v2271 = vadd.f32 0.0, %v2270
    %v2272 = vpop.f32.mrb[0].mxu0
    %2273 = vdwg.mxu0
    %v2275 = vsel %vm1212, %v1906, 0
    %2277 = vmatprep.subr.mxu0 0.0
    %2278 = vmatpush1.msra.mxu0 %v1134
    %2279 = vmatprep.subr.mxu0 0.0
    %2280 = vmatpush1.msra.mxu0 0.0
    %2281 = vmatprep.subr.mxu0 0.0
    %2282 = vmatpush1.msra.mxu0 0.0
    %2283 = vmatprep.subr.mxu0 0.0
    %2284 = vmatpush1.msra.mxu0 0.0
    %2285 = vmatprep.subr.mxu0 0.0
    %2286 = vmatpush1.msra.mxu0 0.0
    %2287 = vmatprep.subr.mxu0 0.0
    %2288 = vmatpush1.msra.mxu0 0.0
    %2289 = vmatprep.subr.mxu0 0.0
    %2290 = vmatpush1.msra.mxu0 0.0
    %2291 = vmatprep.subr.mxu0 0.0
    %2292 = vmatpush1.msra.mxu0 0.0
    %2293 = vmatprep.subr.mxu0 0.0
    %2294 = vmatpush1.msra.mxu0 0.0
    %2295 = vmatprep.subr.mxu0 0.0
    %2296 = vmatpush1.msra.mxu0 0.0
    %2297 = vmatprep.subr.mxu0 0.0
    %2298 = vmatpush1.msra.mxu0 0.0
    %2299 = vmatprep.subr.mxu0 0.0
    %2300 = vmatpush1.msra.mxu0 0.0
    %2301 = vmatprep.subr.mxu0 0.0
    %2302 = vmatpush1.msra.mxu0 0.0
    %2303 = vmatprep.subr.mxu0 0.0
    %2304 = vmatpush1.msra.mxu0 0.0
    %2305 = vmatprep.subr.mxu0 0.0
    %2306 = vmatpush1.msra.mxu0 0.0
    %2307 = vmatprep.subr.mxu0 0.0
    %2308 = vmatpush1.msra.mxu0 0.0
    %2309 = vmatprep.subr.mxu0 0.0
    %2310 = vmatpush1.msra.mxu0 0.0
    %2311 = vmatprep.subr.mxu0 0.0
    %2312 = vmatpush1.msra.mxu0 0.0
    %2313 = vmatprep.subr.mxu0 0.0
    %2314 = vmatpush1.msra.mxu0 0.0
    %2315 = vmatprep.subr.mxu0 0.0
    %2316 = vmatpush1.msra.mxu0 0.0
    %2317 = vmatprep.subr.mxu0 0.0
    %2318 = vmatpush1.msra.mxu0 0.0
    %2319 = vmatprep.subr.mxu0 0.0
    %2320 = vmatpush1.msra.mxu0 0.0
    %2321 = vmatprep.subr.mxu0 0.0
    %2322 = vmatpush1.msra.mxu0 0.0
    %2323 = vmatprep.subr.mxu0 0.0
    %2324 = vmatpush1.msra.mxu0 0.0
    %2325 = vmatprep.subr.mxu0 0.0
    %2326 = vmatpush1.msra.mxu0 0.0
    %2327 = vmatprep.subr.mxu0 0.0
    %2328 = vmatpush1.msra.mxu0 0.0
    %2329 = vmatprep.subr.mxu0 0.0
    %2330 = vmatpush1.msra.mxu0 0.0
    %2331 = vmatprep.subr.mxu0 0.0
    %2332 = vmatpush1.msra.mxu0 0.0
    %2333 = vmatprep.subr.mxu0 0.0
    %2334 = vmatpush1.msra.mxu0 0.0
    %2335 = vmatprep.subr.mxu0 0.0
    %2336 = vmatpush1.msra.mxu0 0.0
    %2337 = vmatprep.subr.mxu0 0.0
    %2338 = vmatpush1.msra.mxu0 0.0
    %2339 = vmatprep.subr.mxu0 0.0
    %2340 = vmatpush1.msra.mxu0 0.0
    %2341 = vmatprep.mubr.f32.mxu0 0.0
    %2342 = vmatmul.mubr.f32.gmra.mrb[0].mxu0 %v2275
    %v2343 = vpop.f32.mrb[0].mxu0
    %v2344 = vadd.f32 0.0, %v2343
    %v2345 = vpop.f32.mrb[0].mxu0
    %2346 = vdwg.mxu0
    %v2348 = vsel %vm1212, %v1907, 0
    %2350 = vmatprep.subr.mxu0 0.0
    %2351 = vmatpush1.msra.mxu0 %v1204
    %2352 = vmatprep.subr.mxu0 0.0
    %2353 = vmatpush1.msra.mxu0 0.0
    %2354 = vmatprep.subr.mxu0 0.0
    %2355 = vmatpush1.msra.mxu0 0.0
    %2356 = vmatprep.subr.mxu0 0.0
    %2357 = vmatpush1.msra.mxu0 0.0
    %2358 = vmatprep.subr.mxu0 0.0
    %2359 = vmatpush1.msra.mxu0 0.0
    %2360 = vmatprep.subr.mxu0 0.0
    %2361 = vmatpush1.msra.mxu0 0.0
    %2362 = vmatprep.subr.mxu0 0.0
    %2363 = vmatpush1.msra.mxu0 0.0
    %2364 = vmatprep.subr.mxu0 0.0
    %2365 = vmatpush1.msra.mxu0 0.0
    %2366 = vmatprep.subr.mxu0 0.0
    %2367 = vmatpush1.msra.mxu0 0.0
    %2368 = vmatprep.subr.mxu0 0.0
    %2369 = vmatpush1.msra.mxu0 0.0
    %2370 = vmatprep.subr.mxu0 0.0
    %2371 = vmatpush1.msra.mxu0 0.0
    %2372 = vmatprep.subr.mxu0 0.0
    %2373 = vmatpush1.msra.mxu0 0.0
    %2374 = vmatprep.subr.mxu0 0.0
    %2375 = vmatpush1.msra.mxu0 0.0
    %2376 = vmatprep.subr.mxu0 0.0
    %2377 = vmatpush1.msra.mxu0 0.0
    %2378 = vmatprep.subr.mxu0 0.0
    %2379 = vmatpush1.msra.mxu0 0.0
    %2380 = vmatprep.subr.mxu0 0.0
    %2381 = vmatpush1.msra.mxu0 0.0
    %2382 = vmatprep.subr.mxu0 0.0
    %2383 = vmatpush1.msra.mxu0 0.0
    %2384 = vmatprep.subr.mxu0 0.0
    %2385 = vmatpush1.msra.mxu0 0.0
    %2386 = vmatprep.subr.mxu0 0.0
    %2387 = vmatpush1.msra.mxu0 0.0
    %2388 = vmatprep.subr.mxu0 0.0
    %2389 = vmatpush1.msra.mxu0 0.0
    %2390 = vmatprep.subr.mxu0 0.0
    %2391 = vmatpush1.msra.mxu0 0.0
    %2392 = vmatprep.subr.mxu0 0.0
    %2393 = vmatpush1.msra.mxu0 0.0
    %2394 = vmatprep.subr.mxu0 0.0
    %2395 = vmatpush1.msra.mxu0 0.0
    %2396 = vmatprep.subr.mxu0 0.0
    %2397 = vmatpush1.msra.mxu0 0.0
    %2398 = vmatprep.subr.mxu0 0.0
    %2399 = vmatpush1.msra.mxu0 0.0
    %2400 = vmatprep.subr.mxu0 0.0
    %2401 = vmatpush1.msra.mxu0 0.0
    %2402 = vmatprep.subr.mxu0 0.0
    %2403 = vmatpush1.msra.mxu0 0.0
    %2404 = vmatprep.subr.mxu0 0.0
    %2405 = vmatpush1.msra.mxu0 0.0
    %2406 = vmatprep.subr.mxu0 0.0
    %2407 = vmatpush1.msra.mxu0 0.0
    %2408 = vmatprep.subr.mxu0 0.0
    %2409 = vmatpush1.msra.mxu0 0.0
    %2410 = vmatprep.subr.mxu0 0.0
    %2411 = vmatpush1.msra.mxu0 0.0
    %2412 = vmatprep.subr.mxu0 0.0
    %2413 = vmatpush1.msra.mxu0 0.0
    %2414 = vmatprep.mubr.f32.mxu0 0.0
    %2415 = vmatmul.mubr.f32.gmra.mrb[0].mxu0 %v2348
    %v2416 = vpop.f32.mrb[0].mxu0
    %v2417 = vadd.f32 0.0, %v2416
    %v2418 = vpop.f32.mrb[0].mxu0
    %2419 = vdwg.mxu0
    %v2421 = vsel %vm1212, %v1908, 0
    %2423 = vmatprep.subr.mxu0 0.0
    %2424 = vmatpush1.msra.mxu0 %v1209
    %2425 = vmatprep.subr.mxu0 0.0
    %2426 = vmatpush1.msra.mxu0 0.0
    %2427 = vmatprep.subr.mxu0 0.0
    %2428 = vmatpush1.msra.mxu0 0.0
    %2429 = vmatprep.subr.mxu0 0.0
    %2430 = vmatpush1.msra.mxu0 0.0
    %2431 = vmatprep.subr.mxu0 0.0
    %2432 = vmatpush1.msra.mxu0 0.0
    %2433 = vmatprep.subr.mxu0 0.0
    %2434 = vmatpush1.msra.mxu0 0.0
    %2435 = vmatprep.subr.mxu0 0.0
    %2436 = vmatpush1.msra.mxu0 0.0
    %2437 = vmatprep.subr.mxu0 0.0
    %2438 = vmatpush1.msra.mxu0 0.0
    %2439 = vmatprep.subr.mxu0 0.0
    %2440 = vmatpush1.msra.mxu0 0.0
    %2441 = vmatprep.subr.mxu0 0.0
    %2442 = vmatpush1.msra.mxu0 0.0
    %2443 = vmatprep.subr.mxu0 0.0
    %2444 = vmatpush1.msra.mxu0 0.0
    %2445 = vmatprep.subr.mxu0 0.0
    %2446 = vmatpush1.msra.mxu0 0.0
    %2447 = vmatprep.subr.mxu0 0.0
    %2448 = vmatpush1.msra.mxu0 0.0
    %2449 = vmatprep.subr.mxu0 0.0
    %2450 = vmatpush1.msra.mxu0 0.0
    %2451 = vmatprep.subr.mxu0 0.0
    %2452 = vmatpush1.msra.mxu0 0.0
    %2453 = vmatprep.subr.mxu0 0.0
    %2454 = vmatpush1.msra.mxu0 0.0
    %2455 = vmatprep.subr.mxu0 0.0
    %2456 = vmatpush1.msra.mxu0 0.0
    %2457 = vmatprep.subr.mxu0 0.0
    %2458 = vmatpush1.msra.mxu0 0.0
    %2459 = vmatprep.subr.mxu0 0.0
    %2460 = vmatpush1.msra.mxu0 0.0
    %2461 = vmatprep.subr.mxu0 0.0
    %2462 = vmatpush1.msra.mxu0 0.0
    %2463 = vmatprep.subr.mxu0 0.0
    %2464 = vmatpush1.msra.mxu0 0.0
    %2465 = vmatprep.subr.mxu0 0.0
    %2466 = vmatpush1.msra.mxu0 0.0
    %2467 = vmatprep.subr.mxu0 0.0
    %2468 = vmatpush1.msra.mxu0 0.0
    %2469 = vmatprep.subr.mxu0 0.0
    %2470 = vmatpush1.msra.mxu0 0.0
    %2471 = vmatprep.subr.mxu0 0.0
    %2472 = vmatpush1.msra.mxu0 0.0
    %2473 = vmatprep.subr.mxu0 0.0
    %2474 = vmatpush1.msra.mxu0 0.0
    %2475 = vmatprep.subr.mxu0 0.0
    %2476 = vmatpush1.msra.mxu0 0.0
    %2477 = vmatprep.subr.mxu0 0.0
    %2478 = vmatpush1.msra.mxu0 0.0
    %2479 = vmatprep.subr.mxu0 0.0
    %2480 = vmatpush1.msra.mxu0 0.0
    %2481 = vmatprep.subr.mxu0 0.0
    %2482 = vmatpush1.msra.mxu0 0.0
    %2483 = vmatprep.subr.mxu0 0.0
    %2484 = vmatpush1.msra.mxu0 0.0
    %2485 = vmatprep.subr.mxu0 0.0
    %2486 = vmatpush1.msra.mxu0 0.0
    %2487 = vmatprep.mubr.f32.mxu0 0.0
    %2488 = vmatmul.mubr.f32.gmra.mrb[0].mxu0 %v2421
    %v2489 = vpop.f32.mrb[0].mxu0
    %v2490 = vadd.f32 0.0, %v2489
    %v2491 = vpop.f32.mrb[0].mxu0
    %2492 = vdwg.mxu0
    %v2493 = vsel %vm81, %v1979, 0.0
    %v2494 = vsel %vm81, %v2125, 0.0
    %v2495 = vadd.f32 %v2493, %v2494
    %v2496 = vsel %vm81, %v2271, 0.0
    %v2497 = vadd.f32 %v2495, %v2496
    %v2498 = vsel %vm81, %v2417, 0.0
    %v2499 = vadd.f32 %v2497, %v2498
    %v2500 = vsel %vm81, %v2052, 0.0
    %v2501 = vsel %vm81, %v2198, 0.0
    %v2502 = vadd.f32 %v2500, %v2501
    %v2503 = vsel %vm81, %v2344, 0.0
    %v2504 = vadd.f32 %v2502, %v2503
    %v2505 = vsel %vm81, %v2490, 0.0
    %v2506 = vadd.f32 %v2504, %v2505
    %v2507 = vld [vmem:[%s8] sm:$0x1]
    %v2509 = vlaneseq
    %v2510 = vshrl.u32 %v2509, 7
    %v2511 = vsub.s32 0, %v2510
    %v2512 = vrot.slane %v2507, %v2511
    %v2514 = vadd.f32 %v2499, %v2512
    %v2515 = vadd.f32 %v2506, %v2512
    %2518 = vrot.lane.b32.xlu0 %v2514, 64
    %v2519 = vpop.permute.xlu0 %2518
    %2520 = vrot.lane.b32.xlu0 %v2515, 64
    %v2521 = vpop.permute.xlu0 %2520
    %v2524 = vmul.f32 %v249, %v2519
    %v2525 = vmul.f32 %v253, %v2521
    %2528 = vrot.lane.b32.xlu0 %v2524, 64
    %v2529 = vpop.permute.xlu0 %2528
    %2530 = vrot.lane.b32.xlu0 %v2525, 64
    %v2531 = vpop.permute.xlu0 %2530
    %v2534 = vadd.f32 %v51, %v2529
    %v2535 = vadd.f32 %v52, %v2531
    %v2536 = vld [vmem:[%s9] sm:$0x1]
    %v2537 = vld [vmem:[%s10] sm:$0x1]
    %v2538 = vsel %vm81, %v2534, 0.0
    %2539 = vadd.xlane.f32.xlu0 %v2538
    %v2540 = vpop.xlane.xlu0 %2539
    %v2541 = vsel %vm81, %v2535, 0.0
    %2542 = vadd.xlane.f32.xlu0 %v2541
    %v2543 = vpop.xlane.xlu0 %2542
    %v2544 = vmul.f32 %v2540, %v164
    %v2545 = vmul.f32 %v2543, %v164
    %v2546 = vsub.f32 %v2534, %v2544
    %v2547 = vsub.f32 %v2535, %v2545
    %v2548 = vmul.f32 %v2546, %v2546
    %v2549 = vmul.f32 %v2547, %v2547
    %v2550 = vsel %vm81, %v2548, 0.0
    %2551 = vadd.xlane.f32.xlu0 %v2550
    %v2552 = vpop.xlane.xlu0 %2551
    %v2553 = vsel %vm81, %v2549, 0.0
    %2554 = vadd.xlane.f32.xlu0 %v2553
    %v2555 = vpop.xlane.xlu0 %2554
    %v2556 = vmul.f32 %v2552, %v164
    %v2557 = vmul.f32 %v2555, %v164
    %v2558 = vadd.f32 %v2556, 1e-05
    %v2559 = vadd.f32 %v2557, 1e-05
    %v2560 = vrsqrt.pop %v2558
    %v2561 = vrsqrt.pop %v2559
    %v2562 = vmul.f32 %v2546, %v2560
    %v2563 = vmul.f32 %v2547, %v2561
    %v2565 = vlaneseq
    %v2566 = vshrl.u32 %v2565, 7
    %v2567 = vsub.s32 0, %v2566
    %v2568 = vrot.slane %v2536, %v2567
    %v2570 = vmul.f32 %v2562, %v2568
    %v2571 = vmul.f32 %v2563, %v2568
    %v2573 = vlaneseq
    %v2574 = vshrl.u32 %v2573, 7
    %v2575 = vsub.s32 0, %v2574
    %v2576 = vrot.slane %v2537, %v2575
    %v2578 = vadd.f32 %v2570, %v2576
    %v2579 = vadd.f32 %v2571, %v2576
    %v2582 = vunpack.c.l.s4 1966171168
    %v2583 = vunpack.c.0.s8 %v2582
    %v2584 = vlaneseq
    %v2585 = vshrl.u32 %v2584, 7
    %v2586 = vsub.s32 %v2583, %v2585
    %v2587 = vrot.slane %v154, %v2586
    %v2588 = vcombine.high %v2587, %v2587
    %v2590 = vunpack.c.l.s4 1966171168
    %v2591 = vunpack.c.0.s8 %v2590
    %v2592 = vlaneseq
    %v2593 = vshrl.u32 %v2592, 7
    %v2594 = vsub.s32 %v2591, %v2593
    %v2595 = vrot.slane %v2587, %v2594
    %v2597 = vunpack.c.l.s4 1966171168
    %v2598 = vunpack.c.0.s8 %v2597
    %v2599 = vlaneseq
    %v2600 = vshrl.u32 %v2599, 7
    %v2601 = vsub.s32 %v2598, %v2600
    %v2602 = vrot.slane %v2588, %v2601
    %v2605 = vadd.f32 %v2595, 1.0
    %v2606 = vadd.f32 %v2602, 1.0
    %v2609 = vlaneseq
    %v2610 = vshrl.u32 %v2609, 7
    %v2611 = vsub.s32 0, %v2610
    %v2612 = vrot.slane %v2605, %v2611
    %v2613 = vlaneseq
    %v2614 = vshrl.u32 %v2613, 7
    %v2615 = vsub.s32 0, %v2614
    %v2616 = vrot.slane %v2606, %v2615
    %v2619 = vmul.f32 %v2578, %v2612
    %v2620 = vmul.f32 %v2579, %v2616
    %2621 = vrot.lane.b32.xlu0 %v249, 32
    %v2622 = vpop.permute.xlu0 %2621
    %2623 = vrot.lane.b32.xlu0 %v253, 32
    %v2624 = vpop.permute.xlu0 %2623
    %v2627 = vadd.f32 %v2619, %v2622
    %v2628 = vadd.f32 %v2620, %v2624
    %v2629 = vld [vmem:[%s11] sm:$0xff]
    %v2630 = vld [vmem:[%s11 + $0x8] sm:$0xff]
    %v2631 = vld [vmem:[%s11 + $0x10] sm:$0xff]
    %v2632 = vld [vmem:[%s11 + $0x18] sm:$0xff]
    %v2633 = vld [vmem:[%s12] sm:$0x1]
    %v2635 = vlaneseq
    %v2636 = vshrl.u32 %v2635, 7
    %v2637 = vsub.s32 0, %v2636
    %v2638 = vrot.slane %v2633, %v2637
    %v2641 = vsel %vm81, %v2627, 0
    %v2644 = vsel %vm81, %v2628, 0
    %2646 = vmatprep.subr.mxu0 0.0
    %2647 = vmatpush1.msra.mxu0 %v2629
    %2648 = vmatprep.subr.mxu0 0.0
    %2649 = vmatpush1.msra.mxu0 %v2630
    %2650 = vmatprep.subr.mxu0 0.0
    %2651 = vmatpush1.msra.mxu0 %v2631
    %2652 = vmatprep.subr.mxu0 0.0
    %2653 = vmatpush1.msra.mxu0 %v2632
    %2654 = vmatprep.subr.mxu0 0.0
    %2655 = vmatpush1.msra.mxu0 0.0
    %2656 = vmatprep.subr.mxu0 0.0
    %2657 = vmatpush1.msra.mxu0 0.0
    %2658 = vmatprep.subr.mxu0 0.0
    %2659 = vmatpush1.msra.mxu0 0.0
    %2660 = vmatprep.subr.mxu0 0.0
    %2661 = vmatpush1.msra.mxu0 0.0
    %2662 = vmatprep.subr.mxu0 0.0
    %2663 = vmatpush1.msra.mxu0 0.0
    %2664 = vmatprep.subr.mxu0 0.0
    %2665 = vmatpush1.msra.mxu0 0.0
    %2666 = vmatprep.subr.mxu0 0.0
    %2667 = vmatpush1.msra.mxu0 0.0
    %2668 = vmatprep.subr.mxu0 0.0
    %2669 = vmatpush1.msra.mxu0 0.0
    %2670 = vmatprep.subr.mxu0 0.0
    %2671 = vmatpush1.msra.mxu0 0.0
    %2672 = vmatprep.subr.mxu0 0.0
    %2673 = vmatpush1.msra.mxu0 0.0
    %2674 = vmatprep.subr.mxu0 0.0
    %2675 = vmatpush1.msra.mxu0 0.0
    %2676 = vmatprep.subr.mxu0 0.0
    %2677 = vmatpush1.msra.mxu0 0.0
    %2678 = vmatprep.subr.mxu0 0.0
    %2679 = vmatpush1.msra.mxu0 0.0
    %2680 = vmatprep.subr.mxu0 0.0
    %2681 = vmatpush1.msra.mxu0 0.0
    %2682 = vmatprep.subr.mxu0 0.0
    %2683 = vmatpush1.msra.mxu0 0.0
    %2684 = vmatprep.subr.mxu0 0.0
    %2685 = vmatpush1.msra.mxu0 0.0
    %2686 = vmatprep.subr.mxu0 0.0
    %2687 = vmatpush1.msra.mxu0 0.0
    %2688 = vmatprep.subr.mxu0 0.0
    %2689 = vmatpush1.msra.mxu0 0.0
    %2690 = vmatprep.subr.mxu0 0.0
    %2691 = vmatpush1.msra.mxu0 0.0
    %2692 = vmatprep.subr.mxu0 0.0
    %2693 = vmatpush1.msra.mxu0 0.0
    %2694 = vmatprep.subr.mxu0 0.0
    %2695 = vmatpush1.msra.mxu0 0.0
    %2696 = vmatprep.subr.mxu0 0.0
    %2697 = vmatpush1.msra.mxu0 0.0
    %2698 = vmatprep.subr.mxu0 0.0
    %2699 = vmatpush1.msra.mxu0 0.0
    %2700 = vmatprep.subr.mxu0 0.0
    %2701 = vmatpush1.msra.mxu0 0.0
    %2702 = vmatprep.subr.mxu0 0.0
    %2703 = vmatpush1.msra.mxu0 0.0
    %2704 = vmatprep.subr.mxu0 0.0
    %2705 = vmatpush1.msra.mxu0 0.0
    %2706 = vmatprep.subr.mxu0 0.0
    %2707 = vmatpush1.msra.mxu0 0.0
    %2708 = vmatprep.subr.mxu0 0.0
    %2709 = vmatpush1.msra.mxu0 0.0
    %2710 = vmatprep.mubr.f32.mxu0 0.0
    %2711 = vmatmul.mubr.f32.gmra.mrb[0].mxu0 %v2641
    %v2712 = vpop.f32.mrb[0].mxu0
    %v2713 = vadd.f32 %v2638, %v2712
    %v2714 = vpop.f32.mrb[0].mxu0
    %2715 = vmatprep.mubr.f32.mxu0 0.0
    %2716 = vmatmul.mubr.f32.gmra.mrb[0].mxu0 %v2644
    %v2717 = vpop.f32.mrb[0].mxu0
    %v2718 = vadd.f32 %v2638, %v2717
    %v2719 = vpop.f32.mrb[0].mxu0
    %2720 = vdwg.mxu0
    %v2721 = vmul.f32 %v2713, %v2713
    %v2722 = vmul.f32 %v2718, %v2718
    %v2723 = vmul.f32 %v2713, %v2721
    %v2724 = vmul.f32 %v2718, %v2722
    %v2725 = vmul.f32 %v2723, 0.044715
    %v2726 = vmul.f32 %v2724, 0.044715
    %v2727 = vadd.f32 %v2713, %v2725
    %v2728 = vadd.f32 %v2718, %v2726
    %v2729 = vmul.f32 %v2727, 0.7978846
    %v2730 = vmul.f32 %v2728, 0.7978846
    %v2731 = vtanh.pop %v2729
    %v2732 = vtanh.pop %v2730
    %v2733 = vadd.f32 %v2731, 1.0
    %v2734 = vadd.f32 %v2732, 1.0
    %v2735 = vmul.f32 %v2733, 0.5
    %v2736 = vmul.f32 %v2734, 0.5
    %v2737 = vmul.f32 %v2713, %v2735
    %v2738 = vmul.f32 %v2718, %v2736
    %v2739 = vld [vmem:[%s13] sm:$0xff]
    %v2740 = vld [vmem:[%s13 + $0x8] sm:$0xff]
    %v2741 = vld [vmem:[%s13 + $0x10] sm:$0xff]
    %v2742 = vld [vmem:[%s13 + $0x18] sm:$0xff]
    %v2743 = vld [vmem:[%s13 + $0x20] sm:$0xff]
    %v2744 = vld [vmem:[%s13 + $0x28] sm:$0xff]
    %v2745 = vld [vmem:[%s13 + $0x30] sm:$0xff]
    %v2746 = vld [vmem:[%s13 + $0x38] sm:$0xff]
    %v2747 = vld [vmem:[%s13 + $0x40] sm:$0xff]
    %v2748 = vld [vmem:[%s13 + $0x48] sm:$0xff]
    %v2749 = vld [vmem:[%s13 + $0x50] sm:$0xff]
    %v2750 = vld [vmem:[%s13 + $0x58] sm:$0xff]
    %v2751 = vld [vmem:[%s13 + $0x60] sm:$0xff]
    %v2752 = vld [vmem:[%s13 + $0x68] sm:$0xff]
    %v2753 = vld [vmem:[%s13 + $0x70] sm:$0xff]
    %v2754 = vld [vmem:[%s13 + $0x78] sm:$0xff]
    %v2755 = vld [vmem:[%s14] sm:$0x1]
    %v2757 = vlaneseq
    %v2758 = vshrl.u32 %v2757, 7
    %v2759 = vsub.s32 0, %v2758
    %v2760 = vrot.slane %v2755, %v2759
    %2762 = vmatprep.subr.mxu0 0.0
    %2763 = vmatpush1.msra.mxu0 %v2739
    %2764 = vmatprep.subr.mxu0 0.0
    %2765 = vmatpush1.msra.mxu0 %v2740
    %2766 = vmatprep.subr.mxu0 0.0
    %2767 = vmatpush1.msra.mxu0 %v2741
    %2768 = vmatprep.subr.mxu0 0.0
    %2769 = vmatpush1.msra.mxu0 %v2742
    %2770 = vmatprep.subr.mxu0 0.0
    %2771 = vmatpush1.msra.mxu0 %v2743
    %2772 = vmatprep.subr.mxu0 0.0
    %2773 = vmatpush1.msra.mxu0 %v2744
    %2774 = vmatprep.subr.mxu0 0.0
    %2775 = vmatpush1.msra.mxu0 %v2745
    %2776 = vmatprep.subr.mxu0 0.0
    %2777 = vmatpush1.msra.mxu0 %v2746
    %2778 = vmatprep.subr.mxu0 0.0
    %2779 = vmatpush1.msra.mxu0 %v2747
    %2780 = vmatprep.subr.mxu0 0.0
    %2781 = vmatpush1.msra.mxu0 %v2748
    %2782 = vmatprep.subr.mxu0 0.0
    %2783 = vmatpush1.msra.mxu0 %v2749
    %2784 = vmatprep.subr.mxu0 0.0
    %2785 = vmatpush1.msra.mxu0 %v2750
    %2786 = vmatprep.subr.mxu0 0.0
    %2787 = vmatpush1.msra.mxu0 %v2751
    %2788 = vmatprep.subr.mxu0 0.0
    %2789 = vmatpush1.msra.mxu0 %v2752
    %2790 = vmatprep.subr.mxu0 0.0
    %2791 = vmatpush1.msra.mxu0 %v2753
    %2792 = vmatprep.subr.mxu0 0.0
    %2793 = vmatpush1.msra.mxu0 %v2754
    %2794 = vmatprep.subr.mxu0 0.0
    %2795 = vmatpush1.msra.mxu0 0.0
    %2796 = vmatprep.subr.mxu0 0.0
    %2797 = vmatpush1.msra.mxu0 0.0
    %2798 = vmatprep.subr.mxu0 0.0
    %2799 = vmatpush1.msra.mxu0 0.0
    %2800 = vmatprep.subr.mxu0 0.0
    %2801 = vmatpush1.msra.mxu0 0.0
    %2802 = vmatprep.subr.mxu0 0.0
    %2803 = vmatpush1.msra.mxu0 0.0
    %2804 = vmatprep.subr.mxu0 0.0
    %2805 = vmatpush1.msra.mxu0 0.0
    %2806 = vmatprep.subr.mxu0 0.0
    %2807 = vmatpush1.msra.mxu0 0.0
    %2808 = vmatprep.subr.mxu0 0.0
    %2809 = vmatpush1.msra.mxu0 0.0
    %2810 = vmatprep.subr.mxu0 0.0
    %2811 = vmatpush1.msra.mxu0 0.0
    %2812 = vmatprep.subr.mxu0 0.0
    %2813 = vmatpush1.msra.mxu0 0.0
    %2814 = vmatprep.subr.mxu0 0.0
    %2815 = vmatpush1.msra.mxu0 0.0
    %2816 = vmatprep.subr.mxu0 0.0
    %2817 = vmatpush1.msra.mxu0 0.0
    %2818 = vmatprep.subr.mxu0 0.0
    %2819 = vmatpush1.msra.mxu0 0.0
    %2820 = vmatprep.subr.mxu0 0.0
    %2821 = vmatpush1.msra.mxu0 0.0
    %2822 = vmatprep.subr.mxu0 0.0
    %2823 = vmatpush1.msra.mxu0 0.0
    %2824 = vmatprep.subr.mxu0 0.0
    %2825 = vmatpush1.msra.mxu0 0.0
    %2826 = vmatprep.mubr.f32.mxu0 0.0
    %2827 = vmatmul.mubr.f32.gmra.mrb[0].mxu0 %v2737
    %v2828 = vpop.f32.mrb[0].mxu0
    %v2829 = vadd.f32 %v2760, %v2828
    %v2830 = vpop.f32.mrb[0].mxu0
    %2831 = vmatprep.mubr.f32.mxu0 0.0
    %2832 = vmatmul.mubr.f32.gmra.mrb[0].mxu0 %v2738
    %v2833 = vpop.f32.mrb[0].mxu0
    %v2834 = vadd.f32 %v2760, %v2833
    %v2835 = vpop.f32.mrb[0].mxu0
    %2836 = vdwg.mxu0
    %v2837 = vlaneseq
    %v2838 = vshrl.u32 %v2837, 7
    %v2839 = vsub.s32 0, %v2838
    %v2840 = vrot.slane %v2595, %v2839
    %v2841 = vlaneseq
    %v2842 = vshrl.u32 %v2841, 7
    %v2843 = vsub.s32 0, %v2842
    %v2844 = vrot.slane %v2602, %v2843
    %2849 = vrot.lane.b32.xlu0 %v2829, 32
    %v2850 = vpop.permute.xlu0 %2849
    %2851 = vrot.lane.b32.xlu0 %v2834, 32
    %v2852 = vpop.permute.xlu0 %2851
    %v2855 = vmul.f32 %v2840, %v2850
    %v2856 = vmul.f32 %v2844, %v2852
    %2859 = vrot.lane.b32.xlu0 %v2855, 96
    %v2860 = vpop.permute.xlu0 %2859
    %2861 = vrot.lane.b32.xlu0 %v2856, 96
    %v2862 = vpop.permute.xlu0 %2861
    %v2865 = vadd.f32 %v2534, %v2860
    %v2866 = vadd.f32 %v2535, %v2862
    %2867 = vst.msk [vmem:[#allocation2] sm:$0xff] %vm81, %v2865
    %2868 = vst.msk [vmem:[#allocation2 + $0x8] sm:$0xff] %vm81, %v2866
    // Predicated region
    $region62: #{tpu_custom_call.1} parent=1 // pred_check
      _
    $region63: #{tpu_custom_call.1} parent=1 // pred_check_branch
      %2870 = sbr.rel (0) target = $region65
    $region64: #{tpu_custom_call.1} parent=1 // pred_region
      %s2872 = ssub.s32 256, 256
      %2873 = vsyncadd [#allocation3], %s2872
      %s2874 = sshll.u32 [#allocation2], 4
      %s2875 = int_to_ptr.vmem [resolvable:$true] %s2874
      %2880 = dma.vmem_to_hbm [thread:$0]  %s2875, 256, %s15, [#allocation3], 128, 128, 8
    $region65: #{tpu_custom_call.1} parent=1 // pred_fallthru
      _
    // Predicated region
    $region66: #{tpu_custom_call.1} parent=1 // pred_check
      _
    $region67: #{tpu_custom_call.1} parent=1 // pred_check_branch
      %2882 = sbr.rel (0) target = $region69
    $region68: #{tpu_custom_call.1} parent=1 // pred_region
      %2883 = dma.done [#allocation3], 256
    $region69: #{tpu_custom_call.1} parent=1 // pred_fallthru
      _
    %2884 = vsyncpa [#allocation3], 1

</llo_original>
